<compile_context>
chip_gen: v6e
topology: v6e:2x2x1
jax: 0.10.0
libtpu: 0.0.40
codegen_flags: <defaults>
</compile_context>

<pallas_src>
import functools
import math

import jax
import jax.numpy as jnp
from jax.experimental import pallas as pl
from jax.experimental.pallas import tpu as pltpu


# ----------------------------------------------------------------------------
# Tiling helpers
# ----------------------------------------------------------------------------
_TM = 256        # rows per tile (sublane axis)
_TN = 512        # output cols per tile (lane axis)
_TK = 512        # contraction tile
_TQ = 256        # query tile (attention)
_TKV = 512       # key/value tile (attention)
_VMEM_LIMIT = 48 * 1024 * 1024   # explicit scoped-VMEM budget (headroom on v7x's 64 MiB)


def _pick_tile(dim, target, align):
    """Largest divisor of `dim` <= target that is a multiple of `align`; falls back to
    the full dimension (block == array dim is always legal).  Used only for dims that
    must not be zero-padded (attention seq, conv channels)."""
    if dim <= target:
        return dim
    t = (target // align) * align
    while t >= align:
        if dim % t == 0:
            return t
        t -= align
    return dim


def _tile_dim(dim, target, align):
    """(padded_dim, tile) for matmul dims.  If the dim fits in one tile: no padding and
    the block spans the full dim.  Otherwise pad to a multiple of `align` and pick the
    largest aligned divisor of the padded dim <= target (never a giant single block)."""
    if dim <= target:
        return dim, dim
    padded = ((dim + align - 1) // align) * align
    t = max(align, (target // align) * align)
    while padded % t:
        t -= align
    return padded, t


def _pad_axis(x, axis, new_size):
    pad = new_size - x.shape[axis]
    if pad <= 0:
        return x
    widths = [(0, 0)] * x.ndim
    widths[axis] = (0, pad)
    return jnp.pad(x, widths)


def _bf16(a):
    return a.astype(jnp.bfloat16)


# ----------------------------------------------------------------------------
# Pallas kernels
# ----------------------------------------------------------------------------
def _linear_kernel(x_ref, w_ref, b_ref, o_ref, *, activation):
    # Accumulate directly into the (resident) f32 output block; bf16 MXU operands.
    @pl.when(pl.program_id(2) == 0)
    def _():
        o_ref[...] = jnp.zeros_like(o_ref)

    o_ref[...] += jnp.dot(_bf16(x_ref[...]), _bf16(w_ref[...]),
                          preferred_element_type=jnp.float32)

    @pl.when(pl.program_id(2) == pl.num_programs(2) - 1)
    def _():
        y = o_ref[...] + b_ref[...].astype(jnp.float32)
        if activation == "relu":
            y = jnp.maximum(y, 0.0)
        o_ref[...] = y


def linear(x, w, b, activation=None):
    """y = act(x @ w + b).  x: (M, K) f32, w: (K, N) bf16, b: (1, N) f32 -> (M, N) f32."""
    M, K = x.shape
    N = w.shape[1]
    Mp, tm = _tile_dim(M, _TM, 16)
    Kp, tk = _tile_dim(K, _TK, 128)
    Np, tn = _tile_dim(N, _TN, 128)
    xp = _pad_axis(_pad_axis(x, 0, Mp), 1, Kp)
    wp = _pad_axis(_pad_axis(w, 0, Kp), 1, Np)
    bp = _pad_axis(b, 1, Np)
    out = pl.pallas_call(
        functools.partial(_linear_kernel, activation=activation),
        out_shape=jax.ShapeDtypeStruct((Mp, Np), jnp.float32),
        grid=(Mp // tm, Np // tn, Kp // tk),
        in_specs=[
            pl.BlockSpec((tm, tk), lambda i, j, k: (i, k)),
            pl.BlockSpec((tk, tn), lambda i, j, k: (k, j)),
            pl.BlockSpec((1, tn), lambda i, j, k: (0, j)),
        ],
        out_specs=pl.BlockSpec((tm, tn), lambda i, j, k: (i, j)),
        compiler_params=pltpu.CompilerParams(
            dimension_semantics=("parallel", "parallel", "arbitrary"),
            vmem_limit_bytes=_VMEM_LIMIT),
    )(xp, wp, bp)
    if (Mp, Np) != (M, N):
        out = out[:M, :N]
    return out


def _glu_kernel(x_ref, wa_ref, wg_ref, ba_ref, bg_ref, o_ref, accg_ref):
    # Value half accumulates into o_ref (f32), gate half into a VMEM scratch.
    @pl.when(pl.program_id(2) == 0)
    def _():
        o_ref[...] = jnp.zeros_like(o_ref)
        accg_ref[...] = jnp.zeros_like(accg_ref)

    xb = _bf16(x_ref[...])
    o_ref[...] += jnp.dot(xb, _bf16(wa_ref[...]), preferred_element_type=jnp.float32)
    accg_ref[...] += jnp.dot(xb, _bf16(wg_ref[...]), preferred_element_type=jnp.float32)

    @pl.when(pl.program_id(2) == pl.num_programs(2) - 1)
    def _():
        a = o_ref[...] + ba_ref[...].astype(jnp.float32)
        g = accg_ref[...] + bg_ref[...].astype(jnp.float32)
        o_ref[...] = a * jax.nn.sigmoid(g)      # F.glu: value * sigmoid(gate)


def glu_linear(x, w_a, w_g, b_a, b_g):
    """Fused Linear(d -> 2d) + F.glu with the weight stored pre-split into the value
    half (w_a) and gate half (w_g) so the output is N-tiled and lane-clean."""
    M, K = x.shape
    N = w_a.shape[1]
    Mp, tm = _tile_dim(M, _TM, 16)
    Kp, tk = _tile_dim(K, _TK, 128)
    Np, tn = _tile_dim(N, _TN, 128)
    xp = _pad_axis(_pad_axis(x, 0, Mp), 1, Kp)
    wap = _pad_axis(_pad_axis(w_a, 0, Kp), 1, Np)
    wgp = _pad_axis(_pad_axis(w_g, 0, Kp), 1, Np)
    bap = _pad_axis(b_a, 1, Np)
    bgp = _pad_axis(b_g, 1, Np)
    out = pl.pallas_call(
        _glu_kernel,
        out_shape=jax.ShapeDtypeStruct((Mp, Np), jnp.float32),
        grid=(Mp // tm, Np // tn, Kp // tk),
        in_specs=[
            pl.BlockSpec((tm, tk), lambda i, j, k: (i, k)),
            pl.BlockSpec((tk, tn), lambda i, j, k: (k, j)),
            pl.BlockSpec((tk, tn), lambda i, j, k: (k, j)),
            pl.BlockSpec((1, tn), lambda i, j, k: (0, j)),
            pl.BlockSpec((1, tn), lambda i, j, k: (0, j)),
        ],
        out_specs=pl.BlockSpec((tm, tn), lambda i, j, k: (i, j)),
        scratch_shapes=[pltpu.VMEM((tm, tn), jnp.float32)],
        compiler_params=pltpu.CompilerParams(
            dimension_semantics=("parallel", "parallel", "arbitrary"),
            vmem_limit_bytes=_VMEM_LIMIT),
    )(xp, wap, wgp, bap, bgp)
    if (Mp, Np) != (M, N):
        out = out[:M, :N]
    return out


def _linear_add_ln_kernel(x_ref, w_ref, b_ref, r_ref, g_ref, bl_ref, o_ref, *, eps):
    @pl.when(pl.program_id(1) == 0)
    def _():
        o_ref[...] = jnp.zeros_like(o_ref)

    o_ref[...] += jnp.dot(_bf16(x_ref[...]), _bf16(w_ref[...]),
                          preferred_element_type=jnp.float32)

    @pl.when(pl.program_id(1) == pl.num_programs(1) - 1)
    def _():
        h = (o_ref[...] + b_ref[...].astype(jnp.float32)
             + r_ref[...].astype(jnp.float32))
        mu = jnp.mean(h, axis=-1, keepdims=True)
        var = jnp.mean(jnp.square(h - mu), axis=-1, keepdims=True)
        y = (h - mu) * jax.lax.rsqrt(var + eps)
        o_ref[...] = (y * g_ref[...].astype(jnp.float32)
                      + bl_ref[...].astype(jnp.float32))


def linear_add_ln(x, w, b, residual, gamma, beta, eps=1e-5):
    """LayerNorm((x @ w + b) + residual) — fused projection + residual + LN.
    N (= d_model) is kept full-width inside the block because LN reduces over it;
    the per-block footprint stays small (a few MiB) even at d_model ~ 2048."""
    M, K = x.shape
    N = w.shape[1]
    Mp, tm = _tile_dim(M, _TM, 16)
    Kp, tk = _tile_dim(K, _TK, 128)
    xp = _pad_axis(_pad_axis(x, 0, Mp), 1, Kp)
    wp = _pad_axis(w, 0, Kp)
    rp = _pad_axis(residual, 0, Mp)
    out = pl.pallas_call(
        functools.partial(_linear_add_ln_kernel, eps=eps),
        out_shape=jax.ShapeDtypeStruct((Mp, N), jnp.float32),
        grid=(Mp // tm, Kp // tk),
        in_specs=[
            pl.BlockSpec((tm, tk), lambda i, k: (i, k)),
            pl.BlockSpec((tk, N), lambda i, k: (k, 0)),
            pl.BlockSpec((1, N), lambda i, k: (0, 0)),
            pl.BlockSpec((tm, N), lambda i, k: (i, 0)),
            pl.BlockSpec((1, N), lambda i, k: (0, 0)),
            pl.BlockSpec((1, N), lambda i, k: (0, 0)),
        ],
        out_specs=pl.BlockSpec((tm, N), lambda i, k: (i, 0)),
        compiler_params=pltpu.CompilerParams(
            dimension_semantics=("parallel", "arbitrary"),
            vmem_limit_bytes=_VMEM_LIMIT),
    )(xp, wp, b, rp, gamma, beta)
    if Mp != M:
        out = out[:M]
    return out


def _lightconv_kernel(x_ref, w_ref, o_ref, *, seq_len, ksize, pad_l):
    # x: (1, S, tD) activation block, w: (K, tD) softmax-normalized per-channel taps.
    x = x_ref[0].astype(jnp.float32)                          # (S, tD)
    w = w_ref[...].astype(jnp.float32)                        # (K, tD)
    pos = jax.lax.broadcasted_iota(jnp.int32, x.shape, dimension=0)
    acc = x * w[pad_l][None, :]                               # delta == 0 tap
    for k in range(ksize):                                    # static unroll over taps
        delta = k - pad_l                                     # out[s] += w[k] * x[s + delta]
        if delta == 0:
            continue
        # Sequence shift on the XLU (sublane rotate) + single-compare boundary mask
        # (implicit zero padding — no jnp.pad / unaligned sublane slices).
        shifted = pltpu.roll(x, shift=(-delta) % seq_len, axis=0)
        if delta > 0:
            valid = pos < (seq_len - delta)
        else:
            valid = pos >= (-delta)
        acc = acc + jnp.where(valid, shifted, 0.0) * w[k][None, :]
    o_ref[0] = acc.astype(o_ref.dtype)


def lightconv(x, weight_hk, n_heads, causal):
    """Lightweight depthwise conv (fairseq LightConv): per-head softmax-normalized
    kernel shared over D // n_heads consecutive channels.  x: (B, S, D)."""
    B, S, D = x.shape
    H, K = weight_hk.shape
    assert H == n_heads and D % H == 0
    # Softmax over taps + per-channel expansion (tiny parameter-side glue).
    w = jax.nn.softmax(weight_hk.astype(jnp.float32), axis=-1)
    w_kd = jnp.repeat(w, D // H, axis=0).T                    # (K, D)
    pad_l = K - 1 if causal else K // 2
    tD = _pick_tile(D, 512, 128)
    kern = functools.partial(_lightconv_kernel, seq_len=S, ksize=K, pad_l=pad_l)
    return pl.pallas_call(
        kern,
        out_shape=jax.ShapeDtypeStruct((B, S, D), x.dtype),
        grid=(B, D // tD),
        in_specs=[
            pl.BlockSpec((1, S, tD), lambda b, j: (b, 0, j)),
            pl.BlockSpec((K, tD), lambda b, j: (0, j)),
        ],
        out_specs=pl.BlockSpec((1, S, tD), lambda b, j: (b, 0, j)),
        compiler_params=pltpu.CompilerParams(
            dimension_semantics=("parallel", "parallel"),
            vmem_limit_bytes=_VMEM_LIMIT),
    )(x, w_kd)


def _flash_attn_kernel(q_ref, k_ref, v_ref, o_ref, m_sc, l_sc, acc_sc,
                       *, n_heads, scale):
    kv = pl.program_id(2)

    @pl.when(kv == 0)
    def _():
        m_sc[...] = jnp.full(m_sc.shape, -jnp.inf, dtype=m_sc.dtype)
        l_sc[...] = jnp.zeros_like(l_sc)
        acc_sc[...] = jnp.zeros_like(acc_sc)

    q = q_ref[0].astype(jnp.float32) * scale                  # scale folded into q
    k = k_ref[0]
    v = v_ref[0]
    D = q.shape[-1]
    dh = D // n_heads
    for h in range(n_heads):                                  # static head loop
        sl = slice(h * dh, (h + 1) * dh)
        s = jax.lax.dot_general(_bf16(q[:, sl]), _bf16(k[:, sl]),
                                (((1,), (1,)), ((), ())),
                                preferred_element_type=jnp.float32)   # (tq, tk)
        m_prev = m_sc[h]
        m_new = jnp.maximum(m_prev, jnp.max(s, axis=-1, keepdims=True))
        alpha = jnp.exp(m_prev - m_new)
        p = jnp.exp(s - m_new)
        l_sc[h] = alpha * l_sc[h] + jnp.sum(p, axis=-1, keepdims=True)
        pv = jnp.dot(_bf16(p), _bf16(v[:, sl]), preferred_element_type=jnp.float32)
        acc_sc[h] = alpha * acc_sc[h] + pv
        m_sc[h] = m_new

    @pl.when(kv == pl.num_programs(2) - 1)
    def _():
        outs = [acc_sc[h] * pl.reciprocal(l_sc[h], approx=True)
                for h in range(n_heads)]
        o_ref[0] = jnp.concatenate(outs, axis=-1).astype(o_ref.dtype)


def attention(q, k, v, n_heads):
    """Encoder-decoder multi-head attention, flash-style (online softmax).
    q: (B, Sq, D), k/v: (B, Sk, D) -> (B, Sq, D)."""
    B, Sq, D = q.shape
    Sk = k.shape[1]
    dh = D // n_heads
    tq = _pick_tile(Sq, _TQ, 8)
    tkv = _pick_tile(Sk, _TKV, 8)
    kern = functools.partial(_flash_attn_kernel, n_heads=n_heads,
                             scale=1.0 / math.sqrt(dh))
    return pl.pallas_call(
        kern,
        out_shape=jax.ShapeDtypeStruct((B, Sq, D), q.dtype),
        grid=(B, Sq // tq, Sk // tkv),
        in_specs=[
            pl.BlockSpec((1, tq, D), lambda b, qi, ki: (b, qi, 0)),
            pl.BlockSpec((1, tkv, D), lambda b, qi, ki: (b, ki, 0)),
            pl.BlockSpec((1, tkv, D), lambda b, qi, ki: (b, ki, 0)),
        ],
        out_specs=pl.BlockSpec((1, tq, D), lambda b, qi, ki: (b, qi, 0)),
        scratch_shapes=[
            pltpu.VMEM((n_heads, tq, 1), jnp.float32),    # running max m
            pltpu.VMEM((n_heads, tq, 1), jnp.float32),    # running denom l
            pltpu.VMEM((n_heads, tq, dh), jnp.float32),   # running output acc
        ],
        compiler_params=pltpu.CompilerParams(
            dimension_semantics=("parallel", "parallel", "arbitrary"),
            vmem_limit_bytes=_VMEM_LIMIT),
    )(q, k, v)


# ----------------------------------------------------------------------------
# Model (glue + layer wiring)
# ----------------------------------------------------------------------------
def sinusoidal_pos(seq_len, d_model):
    pos = jnp.arange(seq_len, dtype=jnp.float32)[:, None]
    i = jnp.arange(d_model // 2, dtype=jnp.float32)[None, :]
    angle = pos / jnp.power(10000.0, 2.0 * i / d_model)
    pe = jnp.zeros((seq_len, d_model), jnp.float32)
    pe = pe.at[:, 0::2].set(jnp.sin(angle))
    pe = pe.at[:, 1::2].set(jnp.cos(angle))
    return pe


def triple_embedding(tokens, token_types, emb_params, d_model):
    # TripleEmbeddingBlock: word embedding + sentence-type embedding + positional.
    B, S = tokens.shape
    we = jnp.take(emb_params["word"], tokens, axis=0)
    te = jnp.take(emb_params["type"], token_types, axis=0)
    pe = sinusoidal_pos(S, d_model)[None, :, :]
    return (we + te + pe).astype(jnp.float32)


def encoder_layer_fwd(x, p, n_heads):
    B, S, D = x.shape
    x2 = x.reshape(B * S, D)
    # LightConv block: Linear(d->2d)+GLU -> lightweight conv -> out proj (+res+LN fused)
    y = glu_linear(x2, p["in_a"]["w"], p["in_g"]["w"], p["in_a"]["b"], p["in_g"]["b"])
    y = lightconv(y.reshape(B, S, D), p["conv_w"], n_heads, causal=False)
    x2 = linear_add_ln(y.reshape(B * S, D), p["out"]["w"], p["out"]["b"],
                       x2, p["ln0"]["g"], p["ln0"]["b"])
    # FFN block (second linear fused with residual + LN)
    h = linear(x2, p["ff1"]["w"], p["ff1"]["b"], activation="relu")
    x2 = linear_add_ln(h, p["ff2"]["w"], p["ff2"]["b"],
                       x2, p["ln1"]["g"], p["ln1"]["b"])
    return x2.reshape(B, S, D)


def decoder_layer_fwd(x, enc, p, n_heads):
    B, S, D = x.shape
    Sk = enc.shape[1]
    x2 = x.reshape(B * S, D)
    # Causal LightConv block
    y = glu_linear(x2, p["in_a"]["w"], p["in_g"]["w"], p["in_a"]["b"], p["in_g"]["b"])
    y = lightconv(y.reshape(B, S, D), p["conv_w"], n_heads, causal=True)
    x2 = linear_add_ln(y.reshape(B * S, D), p["out"]["w"], p["out"]["b"],
                       x2, p["ln0"]["g"], p["ln0"]["b"])
    # Encoder-decoder attention: fused K/V projection of enc, flash attention,
    # output projection fused with residual + LN.
    q = linear(x2, p["q"]["w"], p["q"]["b"]).reshape(B, S, D)
    kv = linear(enc.reshape(B * Sk, D), p["kv"]["w"], p["kv"]["b"])
    k = kv[:, :D].reshape(B, Sk, D)
    v = kv[:, D:].reshape(B, Sk, D)
    o = attention(q, k, v, n_heads).reshape(B * S, D)
    x2 = linear_add_ln(o, p["o"]["w"], p["o"]["b"],
                       x2, p["ln1"]["g"], p["ln1"]["b"])
    # FFN
    h = linear(x2, p["ff1"]["w"], p["ff1"]["b"], activation="relu")
    x2 = linear_add_ln(h, p["ff2"]["w"], p["ff2"]["b"],
                       x2, p["ln2"]["g"], p["ln2"]["b"])
    return x2.reshape(B, S, D)


def lightconv_model_fwd(params, src_tokens, tgt_tokens, src_types, tgt_types, cfg):
    d, H = cfg["d_model"], cfg["n_heads"]
    enc = triple_embedding(src_tokens, src_types, params["enc_emb"], d)
    for lp in params["encoder"]:
        enc = encoder_layer_fwd(enc, lp, H)
    out = triple_embedding(tgt_tokens, tgt_types, params["dec_emb"], d)
    for lp in params["decoder"]:
        out = decoder_layer_fwd(out, enc, lp, H)
    B, S, D = out.shape
    logits = linear(out.reshape(B * S, D), params["clf"]["w"], params["clf"]["b"])
    return logits.reshape(B, S, -1)


# ----------------------------------------------------------------------------
# Deterministic parameter init.
# Matmul weights are stored (in, out) and in bf16 (MXU operands); biases / LN / conv
# taps / embeddings stay f32.  The GLU Linear(d->2d) is stored pre-split into value &
# gate halves; the decoder K/V projections are stored concatenated as one (d, 2d) weight.
# ----------------------------------------------------------------------------
def _dense(key, fan_in, fan_out):
    w = (jax.random.normal(key, (fan_in, fan_out), jnp.float32) * 0.02).astype(jnp.bfloat16)
    b = jnp.zeros((1, fan_out), jnp.float32)
    return {"w": w, "b": b}


def _ln(d):
    return {"g": jnp.ones((1, d), jnp.float32), "b": jnp.zeros((1, d), jnp.float32)}


def _init_enc_layer(key, d, ff, H, K):
    ks = jax.random.split(key, 6)
    return {
        "in_a": _dense(ks[0], d, d),      # value half of Linear(d -> 2d) feeding F.glu
        "in_g": _dense(ks[1], d, d),      # gate half
        "conv_w": jax.random.normal(ks[2], (H, K), jnp.float32) * 0.1,
        "out": _dense(ks[3], d, d),
        "ln0": _ln(d),
        "ff1": _dense(ks[4], d, ff),
        "ff2": _dense(ks[5], ff, d),
        "ln1": _ln(d),
    }


def _init_dec_layer(key, d, ff, H, K):
    ks = jax.random.split(key, 9)
    return {
        "in_a": _dense(ks[0], d, d),
        "in_g": _dense(ks[1], d, d),
        "conv_w": jax.random.normal(ks[2], (H, K), jnp.float32) * 0.1,
        "out": _dense(ks[3], d, d),
        "ln0": _ln(d),
        "q": _dense(ks[4], d, d),
        "kv": _dense(ks[5], d, 2 * d),    # fused K/V projection of the encoder output
        "o": _dense(ks[6], d, d),
        "ln1": _ln(d),
        "ff1": _dense(ks[7], d, ff),
        "ff2": _dense(ks[8], ff, d),
        "ln2": _ln(d),
    }


def init_params(key, cfg):
    d, ff, H = cfg["d_model"], cfg["dim_feedforward"], cfg["n_heads"]
    keys = jax.random.split(key, 7)
    pad = cfg["padding_index"]

    def emb(k, n_word, n_type):
        kw, kt = jax.random.split(k)
        word = jax.random.normal(kw, (n_word, d), jnp.float32) * 0.02
        word = word.at[pad].set(0.0)      # padding_index -> zero vector
        typ = jax.random.normal(kt, (n_type, d), jnp.float32) * 0.02
        return {"word": word, "type": typ}

    enc_layers = [
        _init_enc_layer(k, d, ff, H, ks)
        for k, ks in zip(jax.random.split(keys[2], len(cfg["encoder_kernels"])),
                         cfg["encoder_kernels"])
    ]
    dec_layers = [
        _init_dec_layer(k, d, ff, H, ks)
        for k, ks in zip(jax.random.split(keys[3], len(cfg["decoder_kernels"])),
                         cfg["decoder_kernels"])
    ]
    return {
        "enc_emb": emb(keys[0], cfg["vocab_size"], cfg["max_sentences"]),
        "dec_emb": emb(keys[1], cfg["target_vocab_size"], cfg["target_max_sentences"]),
        "encoder": enc_layers,
        "decoder": dec_layers,
        "clf": _dense(keys[4], d, cfg["vocab_size"]),   # module: out_features=vocab_size
    }


# ----------------------------------------------------------------------------
if __name__ == "__main__":
    cfg = dict(
        vocab_size=32,
        target_vocab_size=32,
        max_sentences=4,
        target_max_sentences=4,
        d_model=32,
        n_heads=4,
        dim_feedforward=64,
        padding_index=0,
        encoder_kernels=[3, 7],   # small subset of the default kernel list
        decoder_kernels=[3, 7],
    )
    B, S_src, S_tgt = 2, 8, 8

    root = jax.random.PRNGKey(0)
    k_params, k_src, k_tgt, k_st, k_tt = jax.random.split(root, 5)
    params = init_params(k_params, cfg)

    src_tokens = jax.random.randint(k_src, (B, S_src), 1, cfg["vocab_size"], dtype=jnp.int32)
    tgt_tokens = jax.random.randint(k_tgt, (B, S_tgt), 1, cfg["target_vocab_size"], dtype=jnp.int32)
    src_types = jax.random.randint(k_st, (B, S_src), 0, cfg["max_sentences"], dtype=jnp.int32)
    tgt_types = jax.random.randint(k_tt, (B, S_tgt), 0, cfg["target_max_sentences"], dtype=jnp.int32)

    fwd = jax.jit(functools.partial(lightconv_model_fwd, cfg=cfg))
    logits = fwd(params, src_tokens, tgt_tokens, src_types, tgt_types)
    jax.block_until_ready(logits)
    assert logits.shape == (B, S_tgt, cfg["vocab_size"]), logits.shape
    assert bool(jnp.all(jnp.isfinite(logits)))
    print("KERNEL_OK")
</pallas_src>

<mosaic_0001>
module attributes {stable_mosaic.version = 11 : i64} {
  func.func @_lightconv_kernel(%arg0: i32, %arg1: i32, %arg2: memref<1x8x32xf32, #tpu.memory_space<vmem>>, %arg3: memref<3x32xf32, #tpu.memory_space<vmem>>, %arg4: memref<1x8x32xf32, #tpu.memory_space<vmem>>) attributes {dimension_semantics = [#tpu.dimension_semantics<parallel>, #tpu.dimension_semantics<parallel>], iteration_bounds = array<i64: 2, 1>, scalar_prefetch = 0 : i64, scratch_operands = 0 : i64, tpu.core_type = #tpu.core_type<tc>, window_params = [{transform_indices = @transform_0, window_bounds = array<i64: 1, 8, 32>}, {transform_indices = @transform_1, window_bounds = array<i64: 3, 32>}, {transform_indices = @transform_2, window_bounds = array<i64: 1, 8, 32>}]} {
    %c0 = arith.constant 0 : index
    %c0_0 = arith.constant 0 : index
    %c0_1 = arith.constant 0 : index
    %0 = vector.load %arg2[%c0, %c0_0, %c0_1] : memref<1x8x32xf32, #tpu.memory_space<vmem>>, vector<1x8x32xf32>
    %1 = vector.shape_cast %0 : vector<1x8x32xf32> to vector<8x32xf32>
    %c0_2 = arith.constant 0 : index
    %c0_3 = arith.constant 0 : index
    %2 = vector.load %arg3[%c0_2, %c0_3] : memref<3x32xf32, #tpu.memory_space<vmem>>, vector<3x32xf32>
    %3 = tpu.iota {dimensions = array<i32: 0>} : vector<8x32xi32>
    %4 = vector.extract_strided_slice %2 {offsets = [1, 0], sizes = [1, 32], strides = [1, 1]} : vector<3x32xf32> to vector<1x32xf32>
    %5 = vector.shape_cast %4 : vector<1x32xf32> to vector<32xf32>
    %6 = vector.shape_cast %5 : vector<32xf32> to vector<1x32xf32>
    %7 = vector.broadcast %6 : vector<1x32xf32> to vector<8x32xf32>
    %8 = arith.mulf %1, %7 : vector<8x32xf32>
    %c1_i32 = arith.constant 1 : i32
    %9 = tpu.dynamic_rotate %1 by %c1_i32 dim 0 : vector<8x32xf32>, i32 -> vector<8x32xf32>
    %c1_i32_4 = arith.constant 1 : i32
    %10 = vector.broadcast %c1_i32_4 : i32 to vector<8x32xi32>
    %11 = arith.cmpi sge, %3, %10 : vector<8x32xi32>
    %cst = arith.constant 0.000000e+00 : f32
    %12 = vector.broadcast %cst : f32 to vector<8x32xf32>
    %13 = arith.select %11, %9, %12 : vector<8x32xi1>, vector<8x32xf32>
    %14 = vector.extract_strided_slice %2 {offsets = [0, 0], sizes = [1, 32], strides = [1, 1]} : vector<3x32xf32> to vector<1x32xf32>
    %15 = vector.shape_cast %14 : vector<1x32xf32> to vector<32xf32>
    %16 = vector.shape_cast %15 : vector<32xf32> to vector<1x32xf32>
    %17 = vector.broadcast %16 : vector<1x32xf32> to vector<8x32xf32>
    %18 = arith.mulf %13, %17 : vector<8x32xf32>
    %19 = arith.addf %8, %18 : vector<8x32xf32>
    %c7_i32 = arith.constant 7 : i32
    %20 = tpu.dynamic_rotate %1 by %c7_i32 dim 0 : vector<8x32xf32>, i32 -> vector<8x32xf32>
    %c7_i32_5 = arith.constant 7 : i32
    %21 = vector.broadcast %c7_i32_5 : i32 to vector<8x32xi32>
    %22 = arith.cmpi slt, %3, %21 : vector<8x32xi32>
    %cst_6 = arith.constant 0.000000e+00 : f32
    %23 = vector.broadcast %cst_6 : f32 to vector<8x32xf32>
    %24 = arith.select %22, %20, %23 : vector<8x32xi1>, vector<8x32xf32>
    %25 = vector.extract_strided_slice %2 {offsets = [2, 0], sizes = [1, 32], strides = [1, 1]} : vector<3x32xf32> to vector<1x32xf32>
    %26 = vector.shape_cast %25 : vector<1x32xf32> to vector<32xf32>
    %27 = vector.shape_cast %26 : vector<32xf32> to vector<1x32xf32>
    %28 = vector.broadcast %27 : vector<1x32xf32> to vector<8x32xf32>
    %29 = arith.mulf %24, %28 : vector<8x32xf32>
    %30 = arith.addf %19, %29 : vector<8x32xf32>
    %c0_7 = arith.constant 0 : index
    %c0_8 = arith.constant 0 : index
    %c0_9 = arith.constant 0 : index
    %31 = vector.load %arg4[%c0_7, %c0_8, %c0_9] : memref<1x8x32xf32, #tpu.memory_space<vmem>>, vector<1x8x32xf32>
    %32 = vector.shape_cast %31 : vector<1x8x32xf32> to vector<8x32xf32>
    %33 = vector.shape_cast %30 : vector<8x32xf32> to vector<1x8x32xf32>
    tpu.vector_store %arg4[%c0_7, %c0_8, %c0_9], %33 {strides = array<i32>} : memref<1x8x32xf32, #tpu.memory_space<vmem>>, vector<1x8x32xf32>,
    return
  }
  func.func @transform_0(%arg0: i32, %arg1: i32) -> (i32, i32, i32) {
    %c0_i32 = arith.constant 0 : i32
    %c0_i32_0 = arith.constant 0 : i32
    return %arg0, %c0_i32, %arg1 : i32, i32, i32
  }
  func.func @transform_1(%arg0: i32, %arg1: i32) -> (i32, i32) {
    %c0_i32 = arith.constant 0 : i32
    %c0_i32_0 = arith.constant 0 : i32
    return %c0_i32, %arg1 : i32, i32
  }
  func.func @transform_2(%arg0: i32, %arg1: i32) -> (i32, i32, i32) {
    %c0_i32 = arith.constant 0 : i32
    %c0_i32_0 = arith.constant 0 : i32
    return %arg0, %c0_i32, %arg1 : i32, i32, i32
  }
}

module attributes {stable_mosaic.version = 11 : i64} {
  func.func @_glu_kernel(%arg0: i32, %arg1: i32, %arg2: i32, %arg3: memref<16x32xf32, #tpu.memory_space<vmem>>, %arg4: memref<32x32xbf16, #tpu.memory_space<vmem>>, %arg5: memref<32x32xbf16, #tpu.memory_space<vmem>>, %arg6: memref<1x32xf32, #tpu.memory_space<vmem>>, %arg7: memref<1x32xf32, #tpu.memory_space<vmem>>, %arg8: memref<16x32xf32, #tpu.memory_space<vmem>>, %arg9: memref<16x32xf32, #tpu.memory_space<vmem>>) attributes {dimension_semantics = [#tpu.dimension_semantics<parallel>, #tpu.dimension_semantics<parallel>, #tpu.dimension_semantics<arbitrary>], iteration_bounds = array<i64: 1, 1, 1>, scalar_prefetch = 0 : i64, scratch_operands = 1 : i64, tpu.core_type = #tpu.core_type<tc>, window_params = [{transform_indices = @transform_0, window_bounds = array<i64: 16, 32>}, {transform_indices = @transform_1, window_bounds = array<i64: 32, 32>}, {transform_indices = @transform_2, window_bounds = array<i64: 32, 32>}, {transform_indices = @transform_3, window_bounds = array<i64: 1, 32>}, {transform_indices = @transform_4, window_bounds = array<i64: 1, 32>}, {transform_indices = @transform_5, window_bounds = array<i64: 16, 32>}]} {
    %c0_i32 = arith.constant 0 : i32
    %0 = arith.cmpi eq, %arg2, %c0_i32 : i32
    %1 = arith.extui %0 : i1 to i32
    %c0_i32_0 = arith.constant 0 : i32
    %2 = arith.cmpi ne, %1, %c0_i32_0 : i32
    scf.if %2 {
      %cst_17 = arith.constant 0.000000e+00 : f32
      %18 = vector.broadcast %cst_17 : f32 to vector<16x32xf32>
      %c0_18 = arith.constant 0 : index
      %c0_19 = arith.constant 0 : index
      %19 = vector.load %arg8[%c0_18, %c0_19] : memref<16x32xf32, #tpu.memory_space<vmem>>, vector<16x32xf32>
      tpu.vector_store %arg8[%c0_18, %c0_19], %18 {strides = array<i32>} : memref<16x32xf32, #tpu.memory_space<vmem>>, vector<16x32xf32>,
      %cst_20 = arith.constant 0.000000e+00 : f32
      %20 = vector.broadcast %cst_20 : f32 to vector<16x32xf32>
      %c0_21 = arith.constant 0 : index
      %c0_22 = arith.constant 0 : index
      %21 = vector.load %arg9[%c0_21, %c0_22] : memref<16x32xf32, #tpu.memory_space<vmem>>, vector<16x32xf32>
      tpu.vector_store %arg9[%c0_21, %c0_22], %20 {strides = array<i32>} : memref<16x32xf32, #tpu.memory_space<vmem>>, vector<16x32xf32>,
    } else {
    }
    %c0 = arith.constant 0 : index
    %c0_1 = arith.constant 0 : index
    %3 = vector.load %arg3[%c0, %c0_1] : memref<16x32xf32, #tpu.memory_space<vmem>>, vector<16x32xf32>
    %4 = arith.truncf %3 : vector<16x32xf32> to vector<16x32xbf16>
    %c0_2 = arith.constant 0 : index
    %c0_3 = arith.constant 0 : index
    %5 = vector.load %arg8[%c0_2, %c0_3] : memref<16x32xf32, #tpu.memory_space<vmem>>, vector<16x32xf32>
    %c0_4 = arith.constant 0 : index
    %c0_5 = arith.constant 0 : index
    %6 = vector.load %arg4[%c0_4, %c0_5] : memref<32x32xbf16, #tpu.memory_space<vmem>>, vector<32x32xbf16>
    %cst = arith.constant dense<0.000000e+00> : vector<16x32xf32>
    %7 = tpu.matmul %4, %6, %cst {dimension_numbers = #tpu.dot_dimension_numbers<[1], [0], [0], [1], [0, 0, 1, 1], [], []>} : vector<16x32xbf16>, vector<32x32xbf16>, vector<16x32xf32> -> vector<16x32xf32>
    %8 = arith.addf %5, %7 : vector<16x32xf32>
    %c0_6 = arith.constant 0 : index
    %c0_7 = arith.constant 0 : index
    %9 = vector.load %arg8[%c0_6, %c0_7] : memref<16x32xf32, #tpu.memory_space<vmem>>, vector<16x32xf32>
    tpu.vector_store %arg8[%c0_6, %c0_7], %8 {strides = array<i32>} : memref<16x32xf32, #tpu.memory_space<vmem>>, vector<16x32xf32>,
    %c0_8 = arith.constant 0 : index
    %c0_9 = arith.constant 0 : index
    %10 = vector.load %arg9[%c0_8, %c0_9] : memref<16x32xf32, #tpu.memory_space<vmem>>, vector<16x32xf32>
    %c0_10 = arith.constant 0 : index
    %c0_11 = arith.constant 0 : index
    %11 = vector.load %arg5[%c0_10, %c0_11] : memref<32x32xbf16, #tpu.memory_space<vmem>>, vector<32x32xbf16>
    %cst_12 = arith.constant dense<0.000000e+00> : vector<16x32xf32>
    %12 = tpu.matmul %4, %11, %cst_12 {dimension_numbers = #tpu.dot_dimension_numbers<[1], [0], [0], [1], [0, 0, 1, 1], [], []>} : vector<16x32xbf16>, vector<32x32xbf16>, vector<16x32xf32> -> vector<16x32xf32>
    %13 = arith.addf %10, %12 : vector<16x32xf32>
    %c0_13 = arith.constant 0 : index
    %c0_14 = arith.constant 0 : index
    %14 = vector.load %arg9[%c0_13, %c0_14] : memref<16x32xf32, #tpu.memory_space<vmem>>, vector<16x32xf32>
    tpu.vector_store %arg9[%c0_13, %c0_14], %13 {strides = array<i32>} : memref<16x32xf32, #tpu.memory_space<vmem>>, vector<16x32xf32>,
    %c0_i32_15 = arith.constant 0 : i32
    %15 = arith.cmpi eq, %arg2, %c0_i32_15 : i32
    %16 = arith.extui %15 : i1 to i32
    %c0_i32_16 = arith.constant 0 : i32
    %17 = arith.cmpi ne, %16, %c0_i32_16 : i32
    scf.if %17 {
      %c0_17 = arith.constant 0 : index
      %c0_18 = arith.constant 0 : index
      %18 = vector.load %arg8[%c0_17, %c0_18] : memref<16x32xf32, #tpu.memory_space<vmem>>, vector<16x32xf32>
      %c0_19 = arith.constant 0 : index
      %c0_20 = arith.constant 0 : index
      %19 = vector.load %arg6[%c0_19, %c0_20] : memref<1x32xf32, #tpu.memory_space<vmem>>, vector<1x32xf32>
      %20 = vector.broadcast %19 : vector<1x32xf32> to vector<16x32xf32>
      %21 = arith.addf %18, %20 : vector<16x32xf32>
      %c0_21 = arith.constant 0 : index
      %c0_22 = arith.constant 0 : index
      %22 = vector.load %arg9[%c0_21, %c0_22] : memref<16x32xf32, #tpu.memory_space<vmem>>, vector<16x32xf32>
      %c0_23 = arith.constant 0 : index
      %c0_24 = arith.constant 0 : index
      %23 = vector.load %arg7[%c0_23, %c0_24] : memref<1x32xf32, #tpu.memory_space<vmem>>, vector<1x32xf32>
      %24 = vector.broadcast %23 : vector<1x32xf32> to vector<16x32xf32>
      %25 = arith.addf %22, %24 : vector<16x32xf32>
      %26 = arith.negf %25 : vector<16x32xf32>
      %27 = math.exp %26 : vector<16x32xf32>
      %cst_25 = arith.constant 1.000000e+00 : f32
      %28 = vector.broadcast %cst_25 : f32 to vector<16x32xf32>
      %29 = arith.addf %28, %27 : vector<16x32xf32>
      %30 = arith.divf %28, %29 : vector<16x32xf32>
      %31 = arith.mulf %21, %30 : vector<16x32xf32>
      %c0_26 = arith.constant 0 : index
      %c0_27 = arith.constant 0 : index
      %32 = vector.load %arg8[%c0_26, %c0_27] : memref<16x32xf32, #tpu.memory_space<vmem>>, vector<16x32xf32>
      tpu.vector_store %arg8[%c0_26, %c0_27], %31 {strides = array<i32>} : memref<16x32xf32, #tpu.memory_space<vmem>>, vector<16x32xf32>,
    } else {
    }
    return
  }
  func.func @transform_0(%arg0: i32, %arg1: i32, %arg2: i32) -> (i32, i32) {
    %c0_i32 = arith.constant 0 : i32
    return %arg0, %arg2 : i32, i32
  }
  func.func @transform_1(%arg0: i32, %arg1: i32, %arg2: i32) -> (i32, i32) {
    %c0_i32 = arith.constant 0 : i32
    return %arg2, %arg1 : i32, i32
  }
  func.func @transform_2(%arg0: i32, %arg1: i32, %arg2: i32) -> (i32, i32) {
    %c0_i32 = arith.constant 0 : i32
    return %arg2, %arg1 : i32, i32
  }
  func.func @transform_3(%arg0: i32, %arg1: i32, %arg2: i32) -> (i32, i32) {
    %c0_i32 = arith.constant 0 : i32
    %c0_i32_0 = arith.constant 0 : i32
    return %c0_i32, %arg1 : i32, i32
  }
  func.func @transform_4(%arg0: i32, %arg1: i32, %arg2: i32) -> (i32, i32) {
    %c0_i32 = arith.constant 0 : i32
    %c0_i32_0 = arith.constant 0 : i32
    return %c0_i32, %arg1 : i32, i32
  }
  func.func @transform_5(%arg0: i32, %arg1: i32, %arg2: i32) -> (i32, i32) {
    %c0_i32 = arith.constant 0 : i32
    return %arg0, %arg1 : i32, i32
  }
}

module attributes {stable_mosaic.version = 11 : i64} {
  func.func @_linear_add_ln_kernel(%arg0: i32, %arg1: i32, %arg2: memref<16x32xf32, #tpu.memory_space<vmem>>, %arg3: memref<32x32xbf16, #tpu.memory_space<vmem>>, %arg4: memref<1x32xf32, #tpu.memory_space<vmem>>, %arg5: memref<16x32xf32, #tpu.memory_space<vmem>>, %arg6: memref<1x32xf32, #tpu.memory_space<vmem>>, %arg7: memref<1x32xf32, #tpu.memory_space<vmem>>, %arg8: memref<16x32xf32, #tpu.memory_space<vmem>>) attributes {dimension_semantics = [#tpu.dimension_semantics<parallel>, #tpu.dimension_semantics<arbitrary>], iteration_bounds = array<i64: 1, 1>, scalar_prefetch = 0 : i64, scratch_operands = 0 : i64, tpu.core_type = #tpu.core_type<tc>, window_params = [{transform_indices = @transform_0, window_bounds = array<i64: 16, 32>}, {transform_indices = @transform_1, window_bounds = array<i64: 32, 32>}, {pipeline_mode = #tpu.pipeline_mode<synchronous>, transform_indices = @transform_2, window_bounds = array<i64: 1, 32>}, {transform_indices = @transform_3, window_bounds = array<i64: 16, 32>}, {pipeline_mode = #tpu.pipeline_mode<synchronous>, transform_indices = @transform_4, window_bounds = array<i64: 1, 32>}, {pipeline_mode = #tpu.pipeline_mode<synchronous>, transform_indices = @transform_5, window_bounds = array<i64: 1, 32>}, {transform_indices = @transform_6, window_bounds = array<i64: 16, 32>}]} {
    %c0_i32 = arith.constant 0 : i32
    %0 = arith.cmpi eq, %arg1, %c0_i32 : i32
    %1 = arith.extui %0 : i1 to i32
    %c0_i32_0 = arith.constant 0 : i32
    %2 = arith.cmpi ne, %1, %c0_i32_0 : i32
    scf.if %2 {
      %cst_10 = arith.constant 0.000000e+00 : f32
      %13 = vector.broadcast %cst_10 : f32 to vector<16x32xf32>
      %c0_11 = arith.constant 0 : index
      %c0_12 = arith.constant 0 : index
      %14 = vector.load %arg8[%c0_11, %c0_12] : memref<16x32xf32, #tpu.memory_space<vmem>>, vector<16x32xf32>
      tpu.vector_store %arg8[%c0_11, %c0_12], %13 {strides = array<i32>} : memref<16x32xf32, #tpu.memory_space<vmem>>, vector<16x32xf32>,
    } else {
    }
    %c0 = arith.constant 0 : index
    %c0_1 = arith.constant 0 : index
    %3 = vector.load %arg8[%c0, %c0_1] : memref<16x32xf32, #tpu.memory_space<vmem>>, vector<16x32xf32>
    %c0_2 = arith.constant 0 : index
    %c0_3 = arith.constant 0 : index
    %4 = vector.load %arg2[%c0_2, %c0_3] : memref<16x32xf32, #tpu.memory_space<vmem>>, vector<16x32xf32>
    %5 = arith.truncf %4 : vector<16x32xf32> to vector<16x32xbf16>
    %c0_4 = arith.constant 0 : index
    %c0_5 = arith.constant 0 : index
    %6 = vector.load %arg3[%c0_4, %c0_5] : memref<32x32xbf16, #tpu.memory_space<vmem>>, vector<32x32xbf16>
    %cst = arith.constant dense<0.000000e+00> : vector<16x32xf32>
    %7 = tpu.matmul %5, %6, %cst {dimension_numbers = #tpu.dot_dimension_numbers<[1], [0], [0], [1], [0, 0, 1, 1], [], []>} : vector<16x32xbf16>, vector<32x32xbf16>, vector<16x32xf32> -> vector<16x32xf32>
    %8 = arith.addf %3, %7 : vector<16x32xf32>
    %c0_6 = arith.constant 0 : index
    %c0_7 = arith.constant 0 : index
    %9 = vector.load %arg8[%c0_6, %c0_7] : memref<16x32xf32, #tpu.memory_space<vmem>>, vector<16x32xf32>
    tpu.vector_store %arg8[%c0_6, %c0_7], %8 {strides = array<i32>} : memref<16x32xf32, #tpu.memory_space<vmem>>, vector<16x32xf32>,
    %c0_i32_8 = arith.constant 0 : i32
    %10 = arith.cmpi eq, %arg1, %c0_i32_8 : i32
    %11 = arith.extui %10 : i1 to i32
    %c0_i32_9 = arith.constant 0 : i32
    %12 = arith.cmpi ne, %11, %c0_i32_9 : i32
    scf.if %12 {
      %c0_10 = arith.constant 0 : index
      %c0_11 = arith.constant 0 : index
      %13 = vector.load %arg8[%c0_10, %c0_11] : memref<16x32xf32, #tpu.memory_space<vmem>>, vector<16x32xf32>
      %c0_12 = arith.constant 0 : index
      %c0_13 = arith.constant 0 : index
      %14 = vector.load %arg4[%c0_12, %c0_13] : memref<1x32xf32, #tpu.memory_space<vmem>>, vector<1x32xf32>
      %15 = vector.broadcast %14 : vector<1x32xf32> to vector<16x32xf32>
      %16 = arith.addf %13, %15 : vector<16x32xf32>
      %c0_14 = arith.constant 0 : index
      %c0_15 = arith.constant 0 : index
      %17 = vector.load %arg5[%c0_14, %c0_15] : memref<16x32xf32, #tpu.memory_space<vmem>>, vector<16x32xf32>
      %18 = arith.addf %16, %17 : vector<16x32xf32>
      %cst_16 = arith.constant dense<0.000000e+00> : vector<16xf32>
      %19 = vector.multi_reduction <add>, %18, %cst_16 [1] : vector<16x32xf32> to vector<16xf32>
      %20 = vector.shape_cast %19 : vector<16xf32> to vector<16x1xf32>
      %cst_17 = arith.constant 3.200000e+01 : f32
      %21 = vector.broadcast %cst_17 : f32 to vector<16x1xf32>
      %22 = arith.divf %20, %21 : vector<16x1xf32>
      %23 = vector.broadcast %22 : vector<16x1xf32> to vector<16x32xf32>
      %24 = arith.subf %18, %23 : vector<16x32xf32>
      %25 = arith.mulf %24, %24 : vector<16x32xf32>
      %cst_18 = arith.constant dense<0.000000e+00> : vector<16xf32>
      %26 = vector.multi_reduction <add>, %25, %cst_18 [1] : vector<16x32xf32> to vector<16xf32>
      %27 = vector.shape_cast %26 : vector<16xf32> to vector<16x1xf32>
      %cst_19 = arith.constant 3.200000e+01 : f32
      %28 = vector.broadcast %cst_19 : f32 to vector<16x1xf32>
      %29 = arith.divf %27, %28 : vector<16x1xf32>
      %30 = vector.broadcast %22 : vector<16x1xf32> to vector<16x32xf32>
      %31 = arith.subf %18, %30 : vector<16x32xf32>
      %cst_20 = arith.constant 9.99999974E-6 : f32
      %32 = vector.broadcast %cst_20 : f32 to vector<16x1xf32>
      %33 = arith.addf %29, %32 : vector<16x1xf32>
      %34 = math.rsqrt %33 : vector<16x1xf32>
      %35 = vector.broadcast %34 : vector<16x1xf32> to vector<16x32xf32>
      %36 = arith.mulf %31, %35 : vector<16x32xf32>
      %c0_21 = arith.constant 0 : index
      %c0_22 = arith.constant 0 : index
      %37 = vector.load %arg6[%c0_21, %c0_22] : memref<1x32xf32, #tpu.memory_space<vmem>>, vector<1x32xf32>
      %38 = vector.broadcast %37 : vector<1x32xf32> to vector<16x32xf32>
      %39 = arith.mulf %36, %38 : vector<16x32xf32>
      %c0_23 = arith.constant 0 : index
      %c0_24 = arith.constant 0 : index
      %40 = vector.load %arg7[%c0_23, %c0_24] : memref<1x32xf32, #tpu.memory_space<vmem>>, vector<1x32xf32>
      %41 = vector.broadcast %40 : vector<1x32xf32> to vector<16x32xf32>
      %42 = arith.addf %39, %41 : vector<16x32xf32>
      %c0_25 = arith.constant 0 : index
      %c0_26 = arith.constant 0 : index
      %43 = vector.load %arg8[%c0_25, %c0_26] : memref<16x32xf32, #tpu.memory_space<vmem>>, vector<16x32xf32>
      tpu.vector_store %arg8[%c0_25, %c0_26], %42 {strides = array<i32>} : memref<16x32xf32, #tpu.memory_space<vmem>>, vector<16x32xf32>,
    } else {
    }
    return
  }
  func.func @transform_0(%arg0: i32, %arg1: i32) -> (i32, i32) {
    %c0_i32 = arith.constant 0 : i32
    return %arg0, %arg1 : i32, i32
  }
  func.func @transform_1(%arg0: i32, %arg1: i32) -> (i32, i32) {
    %c0_i32 = arith.constant 0 : i32
    %c0_i32_0 = arith.constant 0 : i32
    return %arg1, %c0_i32 : i32, i32
  }
  func.func @transform_2(%arg0: i32, %arg1: i32) -> (i32, i32) {
    %c0_i32 = arith.constant 0 : i32
    %c0_i32_0 = arith.constant 0 : i32
    %c0_i32_1 = arith.constant 0 : i32
    return %c0_i32, %c0_i32_0 : i32, i32
  }
  func.func @transform_3(%arg0: i32, %arg1: i32) -> (i32, i32) {
    %c0_i32 = arith.constant 0 : i32
    %c0_i32_0 = arith.constant 0 : i32
    return %arg0, %c0_i32 : i32, i32
  }
  func.func @transform_4(%arg0: i32, %arg1: i32) -> (i32, i32) {
    %c0_i32 = arith.constant 0 : i32
    %c0_i32_0 = arith.constant 0 : i32
    %c0_i32_1 = arith.constant 0 : i32
    return %c0_i32, %c0_i32_0 : i32, i32
  }
  func.func @transform_5(%arg0: i32, %arg1: i32) -> (i32, i32) {
    %c0_i32 = arith.constant 0 : i32
    %c0_i32_0 = arith.constant 0 : i32
    %c0_i32_1 = arith.constant 0 : i32
    return %c0_i32, %c0_i32_0 : i32, i32
  }
  func.func @transform_6(%arg0: i32, %arg1: i32) -> (i32, i32) {
    %c0_i32 = arith.constant 0 : i32
    %c0_i32_0 = arith.constant 0 : i32
    return %arg0, %c0_i32 : i32, i32
  }
}

module attributes {stable_mosaic.version = 11 : i64} {
  func.func @_linear_kernel(%arg0: i32, %arg1: i32, %arg2: i32, %arg3: memref<16x32xf32, #tpu.memory_space<vmem>>, %arg4: memref<32x64xbf16, #tpu.memory_space<vmem>>, %arg5: memref<1x64xf32, #tpu.memory_space<vmem>>, %arg6: memref<16x64xf32, #tpu.memory_space<vmem>>) attributes {dimension_semantics = [#tpu.dimension_semantics<parallel>, #tpu.dimension_semantics<parallel>, #tpu.dimension_semantics<arbitrary>], iteration_bounds = array<i64: 1, 1, 1>, scalar_prefetch = 0 : i64, scratch_operands = 0 : i64, tpu.core_type = #tpu.core_type<tc>, window_params = [{transform_indices = @transform_0, window_bounds = array<i64: 16, 32>}, {transform_indices = @transform_1, window_bounds = array<i64: 32, 64>}, {transform_indices = @transform_2, window_bounds = array<i64: 1, 64>}, {transform_indices = @transform_3, window_bounds = array<i64: 16, 64>}]} {
    %c0_i32 = arith.constant 0 : i32
    %0 = arith.cmpi eq, %arg2, %c0_i32 : i32
    %1 = arith.extui %0 : i1 to i32
    %c0_i32_0 = arith.constant 0 : i32
    %2 = arith.cmpi ne, %1, %c0_i32_0 : i32
    scf.if %2 {
      %cst_10 = arith.constant 0.000000e+00 : f32
      %13 = vector.broadcast %cst_10 : f32 to vector<16x64xf32>
      %c0_11 = arith.constant 0 : index
      %c0_12 = arith.constant 0 : index
      %14 = vector.load %arg6[%c0_11, %c0_12] : memref<16x64xf32, #tpu.memory_space<vmem>>, vector<16x64xf32>
      tpu.vector_store %arg6[%c0_11, %c0_12], %13 {strides = array<i32>} : memref<16x64xf32, #tpu.memory_space<vmem>>, vector<16x64xf32>,
    } else {
    }
    %c0 = arith.constant 0 : index
    %c0_1 = arith.constant 0 : index
    %3 = vector.load %arg6[%c0, %c0_1] : memref<16x64xf32, #tpu.memory_space<vmem>>, vector<16x64xf32>
    %c0_2 = arith.constant 0 : index
    %c0_3 = arith.constant 0 : index
    %4 = vector.load %arg3[%c0_2, %c0_3] : memref<16x32xf32, #tpu.memory_space<vmem>>, vector<16x32xf32>
    %5 = arith.truncf %4 : vector<16x32xf32> to vector<16x32xbf16>
    %c0_4 = arith.constant 0 : index
    %c0_5 = arith.constant 0 : index
    %6 = vector.load %arg4[%c0_4, %c0_5] : memref<32x64xbf16, #tpu.memory_space<vmem>>, vector<32x64xbf16>
    %cst = arith.constant dense<0.000000e+00> : vector<16x64xf32>
    %7 = tpu.matmul %5, %6, %cst {dimension_numbers = #tpu.dot_dimension_numbers<[1], [0], [0], [1], [0, 0, 1, 1], [], []>} : vector<16x32xbf16>, vector<32x64xbf16>, vector<16x64xf32> -> vector<16x64xf32>
    %8 = arith.addf %3, %7 : vector<16x64xf32>
    %c0_6 = arith.constant 0 : index
    %c0_7 = arith.constant 0 : index
    %9 = vector.load %arg6[%c0_6, %c0_7] : memref<16x64xf32, #tpu.memory_space<vmem>>, vector<16x64xf32>
    tpu.vector_store %arg6[%c0_6, %c0_7], %8 {strides = array<i32>} : memref<16x64xf32, #tpu.memory_space<vmem>>, vector<16x64xf32>,
    %c0_i32_8 = arith.constant 0 : i32
    %10 = arith.cmpi eq, %arg2, %c0_i32_8 : i32
    %11 = arith.extui %10 : i1 to i32
    %c0_i32_9 = arith.constant 0 : i32
    %12 = arith.cmpi ne, %11, %c0_i32_9 : i32
    scf.if %12 {
      %c0_10 = arith.constant 0 : index
      %c0_11 = arith.constant 0 : index
      %13 = vector.load %arg6[%c0_10, %c0_11] : memref<16x64xf32, #tpu.memory_space<vmem>>, vector<16x64xf32>
      %c0_12 = arith.constant 0 : index
      %c0_13 = arith.constant 0 : index
      %14 = vector.load %arg5[%c0_12, %c0_13] : memref<1x64xf32, #tpu.memory_space<vmem>>, vector<1x64xf32>
      %15 = vector.broadcast %14 : vector<1x64xf32> to vector<16x64xf32>
      %16 = arith.addf %13, %15 : vector<16x64xf32>
      %cst_14 = arith.constant 0.000000e+00 : f32
      %17 = vector.broadcast %cst_14 : f32 to vector<16x64xf32>
      %18 = arith.maximumf %16, %17 : vector<16x64xf32>
      %c0_15 = arith.constant 0 : index
      %c0_16 = arith.constant 0 : index
      %19 = vector.load %arg6[%c0_15, %c0_16] : memref<16x64xf32, #tpu.memory_space<vmem>>, vector<16x64xf32>
      tpu.vector_store %arg6[%c0_15, %c0_16], %18 {strides = array<i32>} : memref<16x64xf32, #tpu.memory_space<vmem>>, vector<16x64xf32>,
    } else {
    }
    return
  }
  func.func @transform_0(%arg0: i32, %arg1: i32, %arg2: i32) -> (i32, i32) {
    %c0_i32 = arith.constant 0 : i32
    return %arg0, %arg2 : i32, i32
  }
  func.func @transform_1(%arg0: i32, %arg1: i32, %arg2: i32) -> (i32, i32) {
    %c0_i32 = arith.constant 0 : i32
    return %arg2, %arg1 : i32, i32
  }
  func.func @transform_2(%arg0: i32, %arg1: i32, %arg2: i32) -> (i32, i32) {
    %c0_i32 = arith.constant 0 : i32
    %c0_i32_0 = arith.constant 0 : i32
    return %c0_i32, %arg1 : i32, i32
  }
  func.func @transform_3(%arg0: i32, %arg1: i32, %arg2: i32) -> (i32, i32) {
    %c0_i32 = arith.constant 0 : i32
    return %arg0, %arg1 : i32, i32
  }
}

module attributes {stable_mosaic.version = 11 : i64} {
  func.func @_linear_add_ln_kernel(%arg0: i32, %arg1: i32, %arg2: memref<16x64xf32, #tpu.memory_space<vmem>>, %arg3: memref<64x32xbf16, #tpu.memory_space<vmem>>, %arg4: memref<1x32xf32, #tpu.memory_space<vmem>>, %arg5: memref<16x32xf32, #tpu.memory_space<vmem>>, %arg6: memref<1x32xf32, #tpu.memory_space<vmem>>, %arg7: memref<1x32xf32, #tpu.memory_space<vmem>>, %arg8: memref<16x32xf32, #tpu.memory_space<vmem>>) attributes {dimension_semantics = [#tpu.dimension_semantics<parallel>, #tpu.dimension_semantics<arbitrary>], iteration_bounds = array<i64: 1, 1>, scalar_prefetch = 0 : i64, scratch_operands = 0 : i64, tpu.core_type = #tpu.core_type<tc>, window_params = [{transform_indices = @transform_0, window_bounds = array<i64: 16, 64>}, {transform_indices = @transform_1, window_bounds = array<i64: 64, 32>}, {pipeline_mode = #tpu.pipeline_mode<synchronous>, transform_indices = @transform_2, window_bounds = array<i64: 1, 32>}, {transform_indices = @transform_3, window_bounds = array<i64: 16, 32>}, {pipeline_mode = #tpu.pipeline_mode<synchronous>, transform_indices = @transform_4, window_bounds = array<i64: 1, 32>}, {pipeline_mode = #tpu.pipeline_mode<synchronous>, transform_indices = @transform_5, window_bounds = array<i64: 1, 32>}, {transform_indices = @transform_6, window_bounds = array<i64: 16, 32>}]} {
    %c0_i32 = arith.constant 0 : i32
    %0 = arith.cmpi eq, %arg1, %c0_i32 : i32
    %1 = arith.extui %0 : i1 to i32
    %c0_i32_0 = arith.constant 0 : i32
    %2 = arith.cmpi ne, %1, %c0_i32_0 : i32
    scf.if %2 {
      %cst_10 = arith.constant 0.000000e+00 : f32
      %13 = vector.broadcast %cst_10 : f32 to vector<16x32xf32>
      %c0_11 = arith.constant 0 : index
      %c0_12 = arith.constant 0 : index
      %14 = vector.load %arg8[%c0_11, %c0_12] : memref<16x32xf32, #tpu.memory_space<vmem>>, vector<16x32xf32>
      tpu.vector_store %arg8[%c0_11, %c0_12], %13 {strides = array<i32>} : memref<16x32xf32, #tpu.memory_space<vmem>>, vector<16x32xf32>,
    } else {
    }
    %c0 = arith.constant 0 : index
    %c0_1 = arith.constant 0 : index
    %3 = vector.load %arg8[%c0, %c0_1] : memref<16x32xf32, #tpu.memory_space<vmem>>, vector<16x32xf32>
    %c0_2 = arith.constant 0 : index
    %c0_3 = arith.constant 0 : index
    %4 = vector.load %arg2[%c0_2, %c0_3] : memref<16x64xf32, #tpu.memory_space<vmem>>, vector<16x64xf32>
    %5 = arith.truncf %4 : vector<16x64xf32> to vector<16x64xbf16>
    %c0_4 = arith.constant 0 : index
    %c0_5 = arith.constant 0 : index
    %6 = vector.load %arg3[%c0_4, %c0_5] : memref<64x32xbf16, #tpu.memory_space<vmem>>, vector<64x32xbf16>
    %cst = arith.constant dense<0.000000e+00> : vector<16x32xf32>
    %7 = tpu.matmul %5, %6, %cst {dimension_numbers = #tpu.dot_dimension_numbers<[1], [0], [0], [1], [0, 0, 1, 1], [], []>} : vector<16x64xbf16>, vector<64x32xbf16>, vector<16x32xf32> -> vector<16x32xf32>
    %8 = arith.addf %3, %7 : vector<16x32xf32>
    %c0_6 = arith.constant 0 : index
    %c0_7 = arith.constant 0 : index
    %9 = vector.load %arg8[%c0_6, %c0_7] : memref<16x32xf32, #tpu.memory_space<vmem>>, vector<16x32xf32>
    tpu.vector_store %arg8[%c0_6, %c0_7], %8 {strides = array<i32>} : memref<16x32xf32, #tpu.memory_space<vmem>>, vector<16x32xf32>,
    %c0_i32_8 = arith.constant 0 : i32
    %10 = arith.cmpi eq, %arg1, %c0_i32_8 : i32
    %11 = arith.extui %10 : i1 to i32
    %c0_i32_9 = arith.constant 0 : i32
    %12 = arith.cmpi ne, %11, %c0_i32_9 : i32
    scf.if %12 {
      %c0_10 = arith.constant 0 : index
      %c0_11 = arith.constant 0 : index
      %13 = vector.load %arg8[%c0_10, %c0_11] : memref<16x32xf32, #tpu.memory_space<vmem>>, vector<16x32xf32>
      %c0_12 = arith.constant 0 : index
      %c0_13 = arith.constant 0 : index
      %14 = vector.load %arg4[%c0_12, %c0_13] : memref<1x32xf32, #tpu.memory_space<vmem>>, vector<1x32xf32>
      %15 = vector.broadcast %14 : vector<1x32xf32> to vector<16x32xf32>
      %16 = arith.addf %13, %15 : vector<16x32xf32>
      %c0_14 = arith.constant 0 : index
      %c0_15 = arith.constant 0 : index
      %17 = vector.load %arg5[%c0_14, %c0_15] : memref<16x32xf32, #tpu.memory_space<vmem>>, vector<16x32xf32>
      %18 = arith.addf %16, %17 : vector<16x32xf32>
      %cst_16 = arith.constant dense<0.000000e+00> : vector<16xf32>
      %19 = vector.multi_reduction <add>, %18, %cst_16 [1] : vector<16x32xf32> to vector<16xf32>
      %20 = vector.shape_cast %19 : vector<16xf32> to vector<16x1xf32>
      %cst_17 = arith.constant 3.200000e+01 : f32
      %21 = vector.broadcast %cst_17 : f32 to vector<16x1xf32>
      %22 = arith.divf %20, %21 : vector<16x1xf32>
      %23 = vector.broadcast %22 : vector<16x1xf32> to vector<16x32xf32>
      %24 = arith.subf %18, %23 : vector<16x32xf32>
      %25 = arith.mulf %24, %24 : vector<16x32xf32>
      %cst_18 = arith.constant dense<0.000000e+00> : vector<16xf32>
      %26 = vector.multi_reduction <add>, %25, %cst_18 [1] : vector<16x32xf32> to vector<16xf32>
      %27 = vector.shape_cast %26 : vector<16xf32> to vector<16x1xf32>
      %cst_19 = arith.constant 3.200000e+01 : f32
      %28 = vector.broadcast %cst_19 : f32 to vector<16x1xf32>
      %29 = arith.divf %27, %28 : vector<16x1xf32>
      %30 = vector.broadcast %22 : vector<16x1xf32> to vector<16x32xf32>
      %31 = arith.subf %18, %30 : vector<16x32xf32>
      %cst_20 = arith.constant 9.99999974E-6 : f32
      %32 = vector.broadcast %cst_20 : f32 to vector<16x1xf32>
      %33 = arith.addf %29, %32 : vector<16x1xf32>
      %34 = math.rsqrt %33 : vector<16x1xf32>
      %35 = vector.broadcast %34 : vector<16x1xf32> to vector<16x32xf32>
      %36 = arith.mulf %31, %35 : vector<16x32xf32>
      %c0_21 = arith.constant 0 : index
      %c0_22 = arith.constant 0 : index
      %37 = vector.load %arg6[%c0_21, %c0_22] : memref<1x32xf32, #tpu.memory_space<vmem>>, vector<1x32xf32>
      %38 = vector.broadcast %37 : vector<1x32xf32> to vector<16x32xf32>
      %39 = arith.mulf %36, %38 : vector<16x32xf32>
      %c0_23 = arith.constant 0 : index
      %c0_24 = arith.constant 0 : index
      %40 = vector.load %arg7[%c0_23, %c0_24] : memref<1x32xf32, #tpu.memory_space<vmem>>, vector<1x32xf32>
      %41 = vector.broadcast %40 : vector<1x32xf32> to vector<16x32xf32>
      %42 = arith.addf %39, %41 : vector<16x32xf32>
      %c0_25 = arith.constant 0 : index
      %c0_26 = arith.constant 0 : index
      %43 = vector.load %arg8[%c0_25, %c0_26] : memref<16x32xf32, #tpu.memory_space<vmem>>, vector<16x32xf32>
      tpu.vector_store %arg8[%c0_25, %c0_26], %42 {strides = array<i32>} : memref<16x32xf32, #tpu.memory_space<vmem>>, vector<16x32xf32>,
    } else {
    }
    return
  }
  func.func @transform_0(%arg0: i32, %arg1: i32) -> (i32, i32) {
    %c0_i32 = arith.constant 0 : i32
    return %arg0, %arg1 : i32, i32
  }
  func.func @transform_1(%arg0: i32, %arg1: i32) -> (i32, i32) {
    %c0_i32 = arith.constant 0 : i32
    %c0_i32_0 = arith.constant 0 : i32
    return %arg1, %c0_i32 : i32, i32
  }
  func.func @transform_2(%arg0: i32, %arg1: i32) -> (i32, i32) {
    %c0_i32 = arith.constant 0 : i32
    %c0_i32_0 = arith.constant 0 : i32
    %c0_i32_1 = arith.constant 0 : i32
    return %c0_i32, %c0_i32_0 : i32, i32
  }
  func.func @transform_3(%arg0: i32, %arg1: i32) -> (i32, i32) {
    %c0_i32 = arith.constant 0 : i32
    %c0_i32_0 = arith.constant 0 : i32
    return %arg0, %c0_i32 : i32, i32
  }
  func.func @transform_4(%arg0: i32, %arg1: i32) -> (i32, i32) {
    %c0_i32 = arith.constant 0 : i32
    %c0_i32_0 = arith.constant 0 : i32
    %c0_i32_1 = arith.constant 0 : i32
    return %c0_i32, %c0_i32_0 : i32, i32
  }
  func.func @transform_5(%arg0: i32, %arg1: i32) -> (i32, i32) {
    %c0_i32 = arith.constant 0 : i32
    %c0_i32_0 = arith.constant 0 : i32
    %c0_i32_1 = arith.constant 0 : i32
    return %c0_i32, %c0_i32_0 : i32, i32
  }
  func.func @transform_6(%arg0: i32, %arg1: i32) -> (i32, i32) {
    %c0_i32 = arith.constant 0 : i32
    %c0_i32_0 = arith.constant 0 : i32
    return %arg0, %c0_i32 : i32, i32
  }
}

module attributes {stable_mosaic.version = 11 : i64} {
  func.func @_lightconv_kernel(%arg0: i32, %arg1: i32, %arg2: memref<1x8x32xf32, #tpu.memory_space<vmem>>, %arg3: memref<7x32xf32, #tpu.memory_space<vmem>>, %arg4: memref<1x8x32xf32, #tpu.memory_space<vmem>>) attributes {dimension_semantics = [#tpu.dimension_semantics<parallel>, #tpu.dimension_semantics<parallel>], iteration_bounds = array<i64: 2, 1>, scalar_prefetch = 0 : i64, scratch_operands = 0 : i64, tpu.core_type = #tpu.core_type<tc>, window_params = [{transform_indices = @transform_0, window_bounds = array<i64: 1, 8, 32>}, {transform_indices = @transform_1, window_bounds = array<i64: 7, 32>}, {transform_indices = @transform_2, window_bounds = array<i64: 1, 8, 32>}]} {
    %c0 = arith.constant 0 : index
    %c0_0 = arith.constant 0 : index
    %c0_1 = arith.constant 0 : index
    %0 = vector.load %arg2[%c0, %c0_0, %c0_1] : memref<1x8x32xf32, #tpu.memory_space<vmem>>, vector<1x8x32xf32>
    %1 = vector.shape_cast %0 : vector<1x8x32xf32> to vector<8x32xf32>
    %c0_2 = arith.constant 0 : index
    %c0_3 = arith.constant 0 : index
    %2 = vector.load %arg3[%c0_2, %c0_3] : memref<7x32xf32, #tpu.memory_space<vmem>>, vector<7x32xf32>
    %3 = tpu.iota {dimensions = array<i32: 0>} : vector<8x32xi32>
    %4 = vector.extract_strided_slice %2 {offsets = [3, 0], sizes = [1, 32], strides = [1, 1]} : vector<7x32xf32> to vector<1x32xf32>
    %5 = vector.shape_cast %4 : vector<1x32xf32> to vector<32xf32>
    %6 = vector.shape_cast %5 : vector<32xf32> to vector<1x32xf32>
    %7 = vector.broadcast %6 : vector<1x32xf32> to vector<8x32xf32>
    %8 = arith.mulf %1, %7 : vector<8x32xf32>
    %c3_i32 = arith.constant 3 : i32
    %9 = tpu.dynamic_rotate %1 by %c3_i32 dim 0 : vector<8x32xf32>, i32 -> vector<8x32xf32>
    %c3_i32_4 = arith.constant 3 : i32
    %10 = vector.broadcast %c3_i32_4 : i32 to vector<8x32xi32>
    %11 = arith.cmpi sge, %3, %10 : vector<8x32xi32>
    %cst = arith.constant 0.000000e+00 : f32
    %12 = vector.broadcast %cst : f32 to vector<8x32xf32>
    %13 = arith.select %11, %9, %12 : vector<8x32xi1>, vector<8x32xf32>
    %14 = vector.extract_strided_slice %2 {offsets = [0, 0], sizes = [1, 32], strides = [1, 1]} : vector<7x32xf32> to vector<1x32xf32>
    %15 = vector.shape_cast %14 : vector<1x32xf32> to vector<32xf32>
    %16 = vector.shape_cast %15 : vector<32xf32> to vector<1x32xf32>
    %17 = vector.broadcast %16 : vector<1x32xf32> to vector<8x32xf32>
    %18 = arith.mulf %13, %17 : vector<8x32xf32>
    %19 = arith.addf %8, %18 : vector<8x32xf32>
    %c2_i32 = arith.constant 2 : i32
    %20 = tpu.dynamic_rotate %1 by %c2_i32 dim 0 : vector<8x32xf32>, i32 -> vector<8x32xf32>
    %c2_i32_5 = arith.constant 2 : i32
    %21 = vector.broadcast %c2_i32_5 : i32 to vector<8x32xi32>
    %22 = arith.cmpi sge, %3, %21 : vector<8x32xi32>
    %cst_6 = arith.constant 0.000000e+00 : f32
    %23 = vector.broadcast %cst_6 : f32 to vector<8x32xf32>
    %24 = arith.select %22, %20, %23 : vector<8x32xi1>, vector<8x32xf32>
    %25 = vector.extract_strided_slice %2 {offsets = [1, 0], sizes = [1, 32], strides = [1, 1]} : vector<7x32xf32> to vector<1x32xf32>
    %26 = vector.shape_cast %25 : vector<1x32xf32> to vector<32xf32>
    %27 = vector.shape_cast %26 : vector<32xf32> to vector<1x32xf32>
    %28 = vector.broadcast %27 : vector<1x32xf32> to vector<8x32xf32>
    %29 = arith.mulf %24, %28 : vector<8x32xf32>
    %30 = arith.addf %19, %29 : vector<8x32xf32>
    %c1_i32 = arith.constant 1 : i32
    %31 = tpu.dynamic_rotate %1 by %c1_i32 dim 0 : vector<8x32xf32>, i32 -> vector<8x32xf32>
    %c1_i32_7 = arith.constant 1 : i32
    %32 = vector.broadcast %c1_i32_7 : i32 to vector<8x32xi32>
    %33 = arith.cmpi sge, %3, %32 : vector<8x32xi32>
    %cst_8 = arith.constant 0.000000e+00 : f32
    %34 = vector.broadcast %cst_8 : f32 to vector<8x32xf32>
    %35 = arith.select %33, %31, %34 : vector<8x32xi1>, vector<8x32xf32>
    %36 = vector.extract_strided_slice %2 {offsets = [2, 0], sizes = [1, 32], strides = [1, 1]} : vector<7x32xf32> to vector<1x32xf32>
    %37 = vector.shape_cast %36 : vector<1x32xf32> to vector<32xf32>
    %38 = vector.shape_cast %37 : vector<32xf32> to vector<1x32xf32>
    %39 = vector.broadcast %38 : vector<1x32xf32> to vector<8x32xf32>
    %40 = arith.mulf %35, %39 : vector<8x32xf32>
    %41 = arith.addf %30, %40 : vector<8x32xf32>
    %c7_i32 = arith.constant 7 : i32
    %42 = tpu.dynamic_rotate %1 by %c7_i32 dim 0 : vector<8x32xf32>, i32 -> vector<8x32xf32>
    %c7_i32_9 = arith.constant 7 : i32
    %43 = vector.broadcast %c7_i32_9 : i32 to vector<8x32xi32>
    %44 = arith.cmpi slt, %3, %43 : vector<8x32xi32>
    %cst_10 = arith.constant 0.000000e+00 : f32
    %45 = vector.broadcast %cst_10 : f32 to vector<8x32xf32>
    %46 = arith.select %44, %42, %45 : vector<8x32xi1>, vector<8x32xf32>
    %47 = vector.extract_strided_slice %2 {offsets = [4, 0], sizes = [1, 32], strides = [1, 1]} : vector<7x32xf32> to vector<1x32xf32>
    %48 = vector.shape_cast %47 : vector<1x32xf32> to vector<32xf32>
    %49 = vector.shape_cast %48 : vector<32xf32> to vector<1x32xf32>
    %50 = vector.broadcast %49 : vector<1x32xf32> to vector<8x32xf32>
    %51 = arith.mulf %46, %50 : vector<8x32xf32>
    %52 = arith.addf %41, %51 : vector<8x32xf32>
    %c6_i32 = arith.constant 6 : i32
    %53 = tpu.dynamic_rotate %1 by %c6_i32 dim 0 : vector<8x32xf32>, i32 -> vector<8x32xf32>
    %c6_i32_11 = arith.constant 6 : i32
    %54 = vector.broadcast %c6_i32_11 : i32 to vector<8x32xi32>
    %55 = arith.cmpi slt, %3, %54 : vector<8x32xi32>
    %cst_12 = arith.constant 0.000000e+00 : f32
    %56 = vector.broadcast %cst_12 : f32 to vector<8x32xf32>
    %57 = arith.select %55, %53, %56 : vector<8x32xi1>, vector<8x32xf32>
    %58 = vector.extract_strided_slice %2 {offsets = [5, 0], sizes = [1, 32], strides = [1, 1]} : vector<7x32xf32> to vector<1x32xf32>
    %59 = vector.shape_cast %58 : vector<1x32xf32> to vector<32xf32>
    %60 = vector.shape_cast %59 : vector<32xf32> to vector<1x32xf32>
    %61 = vector.broadcast %60 : vector<1x32xf32> to vector<8x32xf32>
    %62 = arith.mulf %57, %61 : vector<8x32xf32>
    %63 = arith.addf %52, %62 : vector<8x32xf32>
    %c5_i32 = arith.constant 5 : i32
    %64 = tpu.dynamic_rotate %1 by %c5_i32 dim 0 : vector<8x32xf32>, i32 -> vector<8x32xf32>
    %c5_i32_13 = arith.constant 5 : i32
    %65 = vector.broadcast %c5_i32_13 : i32 to vector<8x32xi32>
    %66 = arith.cmpi slt, %3, %65 : vector<8x32xi32>
    %cst_14 = arith.constant 0.000000e+00 : f32
    %67 = vector.broadcast %cst_14 : f32 to vector<8x32xf32>
    %68 = arith.select %66, %64, %67 : vector<8x32xi1>, vector<8x32xf32>
    %69 = vector.extract_strided_slice %2 {offsets = [6, 0], sizes = [1, 32], strides = [1, 1]} : vector<7x32xf32> to vector<1x32xf32>
    %70 = vector.shape_cast %69 : vector<1x32xf32> to vector<32xf32>
    %71 = vector.shape_cast %70 : vector<32xf32> to vector<1x32xf32>
    %72 = vector.broadcast %71 : vector<1x32xf32> to vector<8x32xf32>
    %73 = arith.mulf %68, %72 : vector<8x32xf32>
    %74 = arith.addf %63, %73 : vector<8x32xf32>
    %c0_15 = arith.constant 0 : index
    %c0_16 = arith.constant 0 : index
    %c0_17 = arith.constant 0 : index
    %75 = vector.load %arg4[%c0_15, %c0_16, %c0_17] : memref<1x8x32xf32, #tpu.memory_space<vmem>>, vector<1x8x32xf32>
    %76 = vector.shape_cast %75 : vector<1x8x32xf32> to vector<8x32xf32>
    %77 = vector.shape_cast %74 : vector<8x32xf32> to vector<1x8x32xf32>
    tpu.vector_store %arg4[%c0_15, %c0_16, %c0_17], %77 {strides = array<i32>} : memref<1x8x32xf32, #tpu.memory_space<vmem>>, vector<1x8x32xf32>,
    return
  }
  func.func @transform_0(%arg0: i32, %arg1: i32) -> (i32, i32, i32) {
    %c0_i32 = arith.constant 0 : i32
    %c0_i32_0 = arith.constant 0 : i32
    return %arg0, %c0_i32, %arg1 : i32, i32, i32
  }
  func.func @transform_1(%arg0: i32, %arg1: i32) -> (i32, i32) {
    %c0_i32 = arith.constant 0 : i32
    %c0_i32_0 = arith.constant 0 : i32
    return %c0_i32, %arg1 : i32, i32
  }
  func.func @transform_2(%arg0: i32, %arg1: i32) -> (i32, i32, i32) {
    %c0_i32 = arith.constant 0 : i32
    %c0_i32_0 = arith.constant 0 : i32
    return %arg0, %c0_i32, %arg1 : i32, i32, i32
  }
}

module attributes {stable_mosaic.version = 11 : i64} {
  func.func @_linear_kernel(%arg0: i32, %arg1: i32, %arg2: i32, %arg3: memref<16x32xf32, #tpu.memory_space<vmem>>, %arg4: memref<32x64xbf16, #tpu.memory_space<vmem>>, %arg5: memref<1x64xf32, #tpu.memory_space<vmem>>, %arg6: memref<16x64xf32, #tpu.memory_space<vmem>>) attributes {dimension_semantics = [#tpu.dimension_semantics<parallel>, #tpu.dimension_semantics<parallel>, #tpu.dimension_semantics<arbitrary>], iteration_bounds = array<i64: 1, 1, 1>, scalar_prefetch = 0 : i64, scratch_operands = 0 : i64, tpu.core_type = #tpu.core_type<tc>, window_params = [{transform_indices = @transform_0, window_bounds = array<i64: 16, 32>}, {transform_indices = @transform_1, window_bounds = array<i64: 32, 64>}, {transform_indices = @transform_2, window_bounds = array<i64: 1, 64>}, {transform_indices = @transform_3, window_bounds = array<i64: 16, 64>}]} {
    %c0_i32 = arith.constant 0 : i32
    %0 = arith.cmpi eq, %arg2, %c0_i32 : i32
    %1 = arith.extui %0 : i1 to i32
    %c0_i32_0 = arith.constant 0 : i32
    %2 = arith.cmpi ne, %1, %c0_i32_0 : i32
    scf.if %2 {
      %cst_10 = arith.constant 0.000000e+00 : f32
      %13 = vector.broadcast %cst_10 : f32 to vector<16x64xf32>
      %c0_11 = arith.constant 0 : index
      %c0_12 = arith.constant 0 : index
      %14 = vector.load %arg6[%c0_11, %c0_12] : memref<16x64xf32, #tpu.memory_space<vmem>>, vector<16x64xf32>
      tpu.vector_store %arg6[%c0_11, %c0_12], %13 {strides = array<i32>} : memref<16x64xf32, #tpu.memory_space<vmem>>, vector<16x64xf32>,
    } else {
    }
    %c0 = arith.constant 0 : index
    %c0_1 = arith.constant 0 : index
    %3 = vector.load %arg6[%c0, %c0_1] : memref<16x64xf32, #tpu.memory_space<vmem>>, vector<16x64xf32>
    %c0_2 = arith.constant 0 : index
    %c0_3 = arith.constant 0 : index
    %4 = vector.load %arg3[%c0_2, %c0_3] : memref<16x32xf32, #tpu.memory_space<vmem>>, vector<16x32xf32>
    %5 = arith.truncf %4 : vector<16x32xf32> to vector<16x32xbf16>
    %c0_4 = arith.constant 0 : index
    %c0_5 = arith.constant 0 : index
    %6 = vector.load %arg4[%c0_4, %c0_5] : memref<32x64xbf16, #tpu.memory_space<vmem>>, vector<32x64xbf16>
    %cst = arith.constant dense<0.000000e+00> : vector<16x64xf32>
    %7 = tpu.matmul %5, %6, %cst {dimension_numbers = #tpu.dot_dimension_numbers<[1], [0], [0], [1], [0, 0, 1, 1], [], []>} : vector<16x32xbf16>, vector<32x64xbf16>, vector<16x64xf32> -> vector<16x64xf32>
    %8 = arith.addf %3, %7 : vector<16x64xf32>
    %c0_6 = arith.constant 0 : index
    %c0_7 = arith.constant 0 : index
    %9 = vector.load %arg6[%c0_6, %c0_7] : memref<16x64xf32, #tpu.memory_space<vmem>>, vector<16x64xf32>
    tpu.vector_store %arg6[%c0_6, %c0_7], %8 {strides = array<i32>} : memref<16x64xf32, #tpu.memory_space<vmem>>, vector<16x64xf32>,
    %c0_i32_8 = arith.constant 0 : i32
    %10 = arith.cmpi eq, %arg2, %c0_i32_8 : i32
    %11 = arith.extui %10 : i1 to i32
    %c0_i32_9 = arith.constant 0 : i32
    %12 = arith.cmpi ne, %11, %c0_i32_9 : i32
    scf.if %12 {
      %c0_10 = arith.constant 0 : index
      %c0_11 = arith.constant 0 : index
      %13 = vector.load %arg6[%c0_10, %c0_11] : memref<16x64xf32, #tpu.memory_space<vmem>>, vector<16x64xf32>
      %c0_12 = arith.constant 0 : index
      %c0_13 = arith.constant 0 : index
      %14 = vector.load %arg5[%c0_12, %c0_13] : memref<1x64xf32, #tpu.memory_space<vmem>>, vector<1x64xf32>
      %15 = vector.broadcast %14 : vector<1x64xf32> to vector<16x64xf32>
      %16 = arith.addf %13, %15 : vector<16x64xf32>
      %c0_14 = arith.constant 0 : index
      %c0_15 = arith.constant 0 : index
      %17 = vector.load %arg6[%c0_14, %c0_15] : memref<16x64xf32, #tpu.memory_space<vmem>>, vector<16x64xf32>
      tpu.vector_store %arg6[%c0_14, %c0_15], %16 {strides = array<i32>} : memref<16x64xf32, #tpu.memory_space<vmem>>, vector<16x64xf32>,
    } else {
    }
    return
  }
  func.func @transform_0(%arg0: i32, %arg1: i32, %arg2: i32) -> (i32, i32) {
    %c0_i32 = arith.constant 0 : i32
    return %arg0, %arg2 : i32, i32
  }
  func.func @transform_1(%arg0: i32, %arg1: i32, %arg2: i32) -> (i32, i32) {
    %c0_i32 = arith.constant 0 : i32
    return %arg2, %arg1 : i32, i32
  }
  func.func @transform_2(%arg0: i32, %arg1: i32, %arg2: i32) -> (i32, i32) {
    %c0_i32 = arith.constant 0 : i32
    %c0_i32_0 = arith.constant 0 : i32
    return %c0_i32, %arg1 : i32, i32
  }
  func.func @transform_3(%arg0: i32, %arg1: i32, %arg2: i32) -> (i32, i32) {
    %c0_i32 = arith.constant 0 : i32
    return %arg0, %arg1 : i32, i32
  }
}

module attributes {stable_mosaic.version = 11 : i64} {
  func.func @_lightconv_kernel(%arg0: i32, %arg1: i32, %arg2: memref<1x8x32xf32, #tpu.memory_space<vmem>>, %arg3: memref<3x32xf32, #tpu.memory_space<vmem>>, %arg4: memref<1x8x32xf32, #tpu.memory_space<vmem>>) attributes {dimension_semantics = [#tpu.dimension_semantics<parallel>, #tpu.dimension_semantics<parallel>], iteration_bounds = array<i64: 2, 1>, scalar_prefetch = 0 : i64, scratch_operands = 0 : i64, tpu.core_type = #tpu.core_type<tc>, window_params = [{transform_indices = @transform_0, window_bounds = array<i64: 1, 8, 32>}, {transform_indices = @transform_1, window_bounds = array<i64: 3, 32>}, {transform_indices = @transform_2, window_bounds = array<i64: 1, 8, 32>}]} {
    %c0 = arith.constant 0 : index
    %c0_0 = arith.constant 0 : index
    %c0_1 = arith.constant 0 : index
    %0 = vector.load %arg2[%c0, %c0_0, %c0_1] : memref<1x8x32xf32, #tpu.memory_space<vmem>>, vector<1x8x32xf32>
    %1 = vector.shape_cast %0 : vector<1x8x32xf32> to vector<8x32xf32>
    %c0_2 = arith.constant 0 : index
    %c0_3 = arith.constant 0 : index
    %2 = vector.load %arg3[%c0_2, %c0_3] : memref<3x32xf32, #tpu.memory_space<vmem>>, vector<3x32xf32>
    %3 = tpu.iota {dimensions = array<i32: 0>} : vector<8x32xi32>
    %4 = vector.extract_strided_slice %2 {offsets = [2, 0], sizes = [1, 32], strides = [1, 1]} : vector<3x32xf32> to vector<1x32xf32>
    %5 = vector.shape_cast %4 : vector<1x32xf32> to vector<32xf32>
    %6 = vector.shape_cast %5 : vector<32xf32> to vector<1x32xf32>
    %7 = vector.broadcast %6 : vector<1x32xf32> to vector<8x32xf32>
    %8 = arith.mulf %1, %7 : vector<8x32xf32>
    %c2_i32 = arith.constant 2 : i32
    %9 = tpu.dynamic_rotate %1 by %c2_i32 dim 0 : vector<8x32xf32>, i32 -> vector<8x32xf32>
    %c2_i32_4 = arith.constant 2 : i32
    %10 = vector.broadcast %c2_i32_4 : i32 to vector<8x32xi32>
    %11 = arith.cmpi sge, %3, %10 : vector<8x32xi32>
    %cst = arith.constant 0.000000e+00 : f32
    %12 = vector.broadcast %cst : f32 to vector<8x32xf32>
    %13 = arith.select %11, %9, %12 : vector<8x32xi1>, vector<8x32xf32>
    %14 = vector.extract_strided_slice %2 {offsets = [0, 0], sizes = [1, 32], strides = [1, 1]} : vector<3x32xf32> to vector<1x32xf32>
    %15 = vector.shape_cast %14 : vector<1x32xf32> to vector<32xf32>
    %16 = vector.shape_cast %15 : vector<32xf32> to vector<1x32xf32>
    %17 = vector.broadcast %16 : vector<1x32xf32> to vector<8x32xf32>
    %18 = arith.mulf %13, %17 : vector<8x32xf32>
    %19 = arith.addf %8, %18 : vector<8x32xf32>
    %c1_i32 = arith.constant 1 : i32
    %20 = tpu.dynamic_rotate %1 by %c1_i32 dim 0 : vector<8x32xf32>, i32 -> vector<8x32xf32>
    %c1_i32_5 = arith.constant 1 : i32
    %21 = vector.broadcast %c1_i32_5 : i32 to vector<8x32xi32>
    %22 = arith.cmpi sge, %3, %21 : vector<8x32xi32>
    %cst_6 = arith.constant 0.000000e+00 : f32
    %23 = vector.broadcast %cst_6 : f32 to vector<8x32xf32>
    %24 = arith.select %22, %20, %23 : vector<8x32xi1>, vector<8x32xf32>
    %25 = vector.extract_strided_slice %2 {offsets = [1, 0], sizes = [1, 32], strides = [1, 1]} : vector<3x32xf32> to vector<1x32xf32>
    %26 = vector.shape_cast %25 : vector<1x32xf32> to vector<32xf32>
    %27 = vector.shape_cast %26 : vector<32xf32> to vector<1x32xf32>
    %28 = vector.broadcast %27 : vector<1x32xf32> to vector<8x32xf32>
    %29 = arith.mulf %24, %28 : vector<8x32xf32>
    %30 = arith.addf %19, %29 : vector<8x32xf32>
    %c0_7 = arith.constant 0 : index
    %c0_8 = arith.constant 0 : index
    %c0_9 = arith.constant 0 : index
    %31 = vector.load %arg4[%c0_7, %c0_8, %c0_9] : memref<1x8x32xf32, #tpu.memory_space<vmem>>, vector<1x8x32xf32>
    %32 = vector.shape_cast %31 : vector<1x8x32xf32> to vector<8x32xf32>
    %33 = vector.shape_cast %30 : vector<8x32xf32> to vector<1x8x32xf32>
    tpu.vector_store %arg4[%c0_7, %c0_8, %c0_9], %33 {strides = array<i32>} : memref<1x8x32xf32, #tpu.memory_space<vmem>>, vector<1x8x32xf32>,
    return
  }
  func.func @transform_0(%arg0: i32, %arg1: i32) -> (i32, i32, i32) {
    %c0_i32 = arith.constant 0 : i32
    %c0_i32_0 = arith.constant 0 : i32
    return %arg0, %c0_i32, %arg1 : i32, i32, i32
  }
  func.func @transform_1(%arg0: i32, %arg1: i32) -> (i32, i32) {
    %c0_i32 = arith.constant 0 : i32
    %c0_i32_0 = arith.constant 0 : i32
    return %c0_i32, %arg1 : i32, i32
  }
  func.func @transform_2(%arg0: i32, %arg1: i32) -> (i32, i32, i32) {
    %c0_i32 = arith.constant 0 : i32
    %c0_i32_0 = arith.constant 0 : i32
    return %arg0, %c0_i32, %arg1 : i32, i32, i32
  }
}

module attributes {stable_mosaic.version = 11 : i64} {
  func.func @_linear_kernel(%arg0: i32, %arg1: i32, %arg2: i32, %arg3: memref<16x32xf32, #tpu.memory_space<vmem>>, %arg4: memref<32x32xbf16, #tpu.memory_space<vmem>>, %arg5: memref<1x32xf32, #tpu.memory_space<vmem>>, %arg6: memref<16x32xf32, #tpu.memory_space<vmem>>) attributes {dimension_semantics = [#tpu.dimension_semantics<parallel>, #tpu.dimension_semantics<parallel>, #tpu.dimension_semantics<arbitrary>], iteration_bounds = array<i64: 1, 1, 1>, scalar_prefetch = 0 : i64, scratch_operands = 0 : i64, tpu.core_type = #tpu.core_type<tc>, window_params = [{transform_indices = @transform_0, window_bounds = array<i64: 16, 32>}, {transform_indices = @transform_1, window_bounds = array<i64: 32, 32>}, {transform_indices = @transform_2, window_bounds = array<i64: 1, 32>}, {transform_indices = @transform_3, window_bounds = array<i64: 16, 32>}]} {
    %c0_i32 = arith.constant 0 : i32
    %0 = arith.cmpi eq, %arg2, %c0_i32 : i32
    %1 = arith.extui %0 : i1 to i32
    %c0_i32_0 = arith.constant 0 : i32
    %2 = arith.cmpi ne, %1, %c0_i32_0 : i32
    scf.if %2 {
      %cst_10 = arith.constant 0.000000e+00 : f32
      %13 = vector.broadcast %cst_10 : f32 to vector<16x32xf32>
      %c0_11 = arith.constant 0 : index
      %c0_12 = arith.constant 0 : index
      %14 = vector.load %arg6[%c0_11, %c0_12] : memref<16x32xf32, #tpu.memory_space<vmem>>, vector<16x32xf32>
      tpu.vector_store %arg6[%c0_11, %c0_12], %13 {strides = array<i32>} : memref<16x32xf32, #tpu.memory_space<vmem>>, vector<16x32xf32>,
    } else {
    }
    %c0 = arith.constant 0 : index
    %c0_1 = arith.constant 0 : index
    %3 = vector.load %arg6[%c0, %c0_1] : memref<16x32xf32, #tpu.memory_space<vmem>>, vector<16x32xf32>
    %c0_2 = arith.constant 0 : index
    %c0_3 = arith.constant 0 : index
    %4 = vector.load %arg3[%c0_2, %c0_3] : memref<16x32xf32, #tpu.memory_space<vmem>>, vector<16x32xf32>
    %5 = arith.truncf %4 : vector<16x32xf32> to vector<16x32xbf16>
    %c0_4 = arith.constant 0 : index
    %c0_5 = arith.constant 0 : index
    %6 = vector.load %arg4[%c0_4, %c0_5] : memref<32x32xbf16, #tpu.memory_space<vmem>>, vector<32x32xbf16>
    %cst = arith.constant dense<0.000000e+00> : vector<16x32xf32>
    %7 = tpu.matmul %5, %6, %cst {dimension_numbers = #tpu.dot_dimension_numbers<[1], [0], [0], [1], [0, 0, 1, 1], [], []>} : vector<16x32xbf16>, vector<32x32xbf16>, vector<16x32xf32> -> vector<16x32xf32>
    %8 = arith.addf %3, %7 : vector<16x32xf32>
    %c0_6 = arith.constant 0 : index
    %c0_7 = arith.constant 0 : index
    %9 = vector.load %arg6[%c0_6, %c0_7] : memref<16x32xf32, #tpu.memory_space<vmem>>, vector<16x32xf32>
    tpu.vector_store %arg6[%c0_6, %c0_7], %8 {strides = array<i32>} : memref<16x32xf32, #tpu.memory_space<vmem>>, vector<16x32xf32>,
    %c0_i32_8 = arith.constant 0 : i32
    %10 = arith.cmpi eq, %arg2, %c0_i32_8 : i32
    %11 = arith.extui %10 : i1 to i32
    %c0_i32_9 = arith.constant 0 : i32
    %12 = arith.cmpi ne, %11, %c0_i32_9 : i32
    scf.if %12 {
      %c0_10 = arith.constant 0 : index
      %c0_11 = arith.constant 0 : index
      %13 = vector.load %arg6[%c0_10, %c0_11] : memref<16x32xf32, #tpu.memory_space<vmem>>, vector<16x32xf32>
      %c0_12 = arith.constant 0 : index
      %c0_13 = arith.constant 0 : index
      %14 = vector.load %arg5[%c0_12, %c0_13] : memref<1x32xf32, #tpu.memory_space<vmem>>, vector<1x32xf32>
      %15 = vector.broadcast %14 : vector<1x32xf32> to vector<16x32xf32>
      %16 = arith.addf %13, %15 : vector<16x32xf32>
      %c0_14 = arith.constant 0 : index
      %c0_15 = arith.constant 0 : index
      %17 = vector.load %arg6[%c0_14, %c0_15] : memref<16x32xf32, #tpu.memory_space<vmem>>, vector<16x32xf32>
      tpu.vector_store %arg6[%c0_14, %c0_15], %16 {strides = array<i32>} : memref<16x32xf32, #tpu.memory_space<vmem>>, vector<16x32xf32>,
    } else {
    }
    return
  }
  func.func @transform_0(%arg0: i32, %arg1: i32, %arg2: i32) -> (i32, i32) {
    %c0_i32 = arith.constant 0 : i32
    return %arg0, %arg2 : i32, i32
  }
  func.func @transform_1(%arg0: i32, %arg1: i32, %arg2: i32) -> (i32, i32) {
    %c0_i32 = arith.constant 0 : i32
    return %arg2, %arg1 : i32, i32
  }
  func.func @transform_2(%arg0: i32, %arg1: i32, %arg2: i32) -> (i32, i32) {
    %c0_i32 = arith.constant 0 : i32
    %c0_i32_0 = arith.constant 0 : i32
    return %c0_i32, %arg1 : i32, i32
  }
  func.func @transform_3(%arg0: i32, %arg1: i32, %arg2: i32) -> (i32, i32) {
    %c0_i32 = arith.constant 0 : i32
    return %arg0, %arg1 : i32, i32
  }
}

module attributes {stable_mosaic.version = 11 : i64} {
  func.func @_lightconv_kernel(%arg0: i32, %arg1: i32, %arg2: memref<1x8x32xf32, #tpu.memory_space<vmem>>, %arg3: memref<7x32xf32, #tpu.memory_space<vmem>>, %arg4: memref<1x8x32xf32, #tpu.memory_space<vmem>>) attributes {dimension_semantics = [#tpu.dimension_semantics<parallel>, #tpu.dimension_semantics<parallel>], iteration_bounds = array<i64: 2, 1>, scalar_prefetch = 0 : i64, scratch_operands = 0 : i64, tpu.core_type = #tpu.core_type<tc>, window_params = [{transform_indices = @transform_0, window_bounds = array<i64: 1, 8, 32>}, {transform_indices = @transform_1, window_bounds = array<i64: 7, 32>}, {transform_indices = @transform_2, window_bounds = array<i64: 1, 8, 32>}]} {
    %c0 = arith.constant 0 : index
    %c0_0 = arith.constant 0 : index
    %c0_1 = arith.constant 0 : index
    %0 = vector.load %arg2[%c0, %c0_0, %c0_1] : memref<1x8x32xf32, #tpu.memory_space<vmem>>, vector<1x8x32xf32>
    %1 = vector.shape_cast %0 : vector<1x8x32xf32> to vector<8x32xf32>
    %c0_2 = arith.constant 0 : index
    %c0_3 = arith.constant 0 : index
    %2 = vector.load %arg3[%c0_2, %c0_3] : memref<7x32xf32, #tpu.memory_space<vmem>>, vector<7x32xf32>
    %3 = tpu.iota {dimensions = array<i32: 0>} : vector<8x32xi32>
    %4 = vector.extract_strided_slice %2 {offsets = [6, 0], sizes = [1, 32], strides = [1, 1]} : vector<7x32xf32> to vector<1x32xf32>
    %5 = vector.shape_cast %4 : vector<1x32xf32> to vector<32xf32>
    %6 = vector.shape_cast %5 : vector<32xf32> to vector<1x32xf32>
    %7 = vector.broadcast %6 : vector<1x32xf32> to vector<8x32xf32>
    %8 = arith.mulf %1, %7 : vector<8x32xf32>
    %c6_i32 = arith.constant 6 : i32
    %9 = tpu.dynamic_rotate %1 by %c6_i32 dim 0 : vector<8x32xf32>, i32 -> vector<8x32xf32>
    %c6_i32_4 = arith.constant 6 : i32
    %10 = vector.broadcast %c6_i32_4 : i32 to vector<8x32xi32>
    %11 = arith.cmpi sge, %3, %10 : vector<8x32xi32>
    %cst = arith.constant 0.000000e+00 : f32
    %12 = vector.broadcast %cst : f32 to vector<8x32xf32>
    %13 = arith.select %11, %9, %12 : vector<8x32xi1>, vector<8x32xf32>
    %14 = vector.extract_strided_slice %2 {offsets = [0, 0], sizes = [1, 32], strides = [1, 1]} : vector<7x32xf32> to vector<1x32xf32>
    %15 = vector.shape_cast %14 : vector<1x32xf32> to vector<32xf32>
    %16 = vector.shape_cast %15 : vector<32xf32> to vector<1x32xf32>
    %17 = vector.broadcast %16 : vector<1x32xf32> to vector<8x32xf32>
    %18 = arith.mulf %13, %17 : vector<8x32xf32>
    %19 = arith.addf %8, %18 : vector<8x32xf32>
    %c5_i32 = arith.constant 5 : i32
    %20 = tpu.dynamic_rotate %1 by %c5_i32 dim 0 : vector<8x32xf32>, i32 -> vector<8x32xf32>
    %c5_i32_5 = arith.constant 5 : i32
    %21 = vector.broadcast %c5_i32_5 : i32 to vector<8x32xi32>
    %22 = arith.cmpi sge, %3, %21 : vector<8x32xi32>
    %cst_6 = arith.constant 0.000000e+00 : f32
    %23 = vector.broadcast %cst_6 : f32 to vector<8x32xf32>
    %24 = arith.select %22, %20, %23 : vector<8x32xi1>, vector<8x32xf32>
    %25 = vector.extract_strided_slice %2 {offsets = [1, 0], sizes = [1, 32], strides = [1, 1]} : vector<7x32xf32> to vector<1x32xf32>
    %26 = vector.shape_cast %25 : vector<1x32xf32> to vector<32xf32>
    %27 = vector.shape_cast %26 : vector<32xf32> to vector<1x32xf32>
    %28 = vector.broadcast %27 : vector<1x32xf32> to vector<8x32xf32>
    %29 = arith.mulf %24, %28 : vector<8x32xf32>
    %30 = arith.addf %19, %29 : vector<8x32xf32>
    %c4_i32 = arith.constant 4 : i32
    %31 = tpu.dynamic_rotate %1 by %c4_i32 dim 0 : vector<8x32xf32>, i32 -> vector<8x32xf32>
    %c4_i32_7 = arith.constant 4 : i32
    %32 = vector.broadcast %c4_i32_7 : i32 to vector<8x32xi32>
    %33 = arith.cmpi sge, %3, %32 : vector<8x32xi32>
    %cst_8 = arith.constant 0.000000e+00 : f32
    %34 = vector.broadcast %cst_8 : f32 to vector<8x32xf32>
    %35 = arith.select %33, %31, %34 : vector<8x32xi1>, vector<8x32xf32>
    %36 = vector.extract_strided_slice %2 {offsets = [2, 0], sizes = [1, 32], strides = [1, 1]} : vector<7x32xf32> to vector<1x32xf32>
    %37 = vector.shape_cast %36 : vector<1x32xf32> to vector<32xf32>
    %38 = vector.shape_cast %37 : vector<32xf32> to vector<1x32xf32>
    %39 = vector.broadcast %38 : vector<1x32xf32> to vector<8x32xf32>
    %40 = arith.mulf %35, %39 : vector<8x32xf32>
    %41 = arith.addf %30, %40 : vector<8x32xf32>
    %c3_i32 = arith.constant 3 : i32
    %42 = tpu.dynamic_rotate %1 by %c3_i32 dim 0 : vector<8x32xf32>, i32 -> vector<8x32xf32>
    %c3_i32_9 = arith.constant 3 : i32
    %43 = vector.broadcast %c3_i32_9 : i32 to vector<8x32xi32>
    %44 = arith.cmpi sge, %3, %43 : vector<8x32xi32>
    %cst_10 = arith.constant 0.000000e+00 : f32
    %45 = vector.broadcast %cst_10 : f32 to vector<8x32xf32>
    %46 = arith.select %44, %42, %45 : vector<8x32xi1>, vector<8x32xf32>
    %47 = vector.extract_strided_slice %2 {offsets = [3, 0], sizes = [1, 32], strides = [1, 1]} : vector<7x32xf32> to vector<1x32xf32>
    %48 = vector.shape_cast %47 : vector<1x32xf32> to vector<32xf32>
    %49 = vector.shape_cast %48 : vector<32xf32> to vector<1x32xf32>
    %50 = vector.broadcast %49 : vector<1x32xf32> to vector<8x32xf32>
    %51 = arith.mulf %46, %50 : vector<8x32xf32>
    %52 = arith.addf %41, %51 : vector<8x32xf32>
    %c2_i32 = arith.constant 2 : i32
    %53 = tpu.dynamic_rotate %1 by %c2_i32 dim 0 : vector<8x32xf32>, i32 -> vector<8x32xf32>
    %c2_i32_11 = arith.constant 2 : i32
    %54 = vector.broadcast %c2_i32_11 : i32 to vector<8x32xi32>
    %55 = arith.cmpi sge, %3, %54 : vector<8x32xi32>
    %cst_12 = arith.constant 0.000000e+00 : f32
    %56 = vector.broadcast %cst_12 : f32 to vector<8x32xf32>
    %57 = arith.select %55, %53, %56 : vector<8x32xi1>, vector<8x32xf32>
    %58 = vector.extract_strided_slice %2 {offsets = [4, 0], sizes = [1, 32], strides = [1, 1]} : vector<7x32xf32> to vector<1x32xf32>
    %59 = vector.shape_cast %58 : vector<1x32xf32> to vector<32xf32>
    %60 = vector.shape_cast %59 : vector<32xf32> to vector<1x32xf32>
    %61 = vector.broadcast %60 : vector<1x32xf32> to vector<8x32xf32>
    %62 = arith.mulf %57, %61 : vector<8x32xf32>
    %63 = arith.addf %52, %62 : vector<8x32xf32>
    %c1_i32 = arith.constant 1 : i32
    %64 = tpu.dynamic_rotate %1 by %c1_i32 dim 0 : vector<8x32xf32>, i32 -> vector<8x32xf32>
    %c1_i32_13 = arith.constant 1 : i32
    %65 = vector.broadcast %c1_i32_13 : i32 to vector<8x32xi32>
    %66 = arith.cmpi sge, %3, %65 : vector<8x32xi32>
    %cst_14 = arith.constant 0.000000e+00 : f32
    %67 = vector.broadcast %cst_14 : f32 to vector<8x32xf32>
    %68 = arith.select %66, %64, %67 : vector<8x32xi1>, vector<8x32xf32>
    %69 = vector.extract_strided_slice %2 {offsets = [5, 0], sizes = [1, 32], strides = [1, 1]} : vector<7x32xf32> to vector<1x32xf32>
    %70 = vector.shape_cast %69 : vector<1x32xf32> to vector<32xf32>
    %71 = vector.shape_cast %70 : vector<32xf32> to vector<1x32xf32>
    %72 = vector.broadcast %71 : vector<1x32xf32> to vector<8x32xf32>
    %73 = arith.mulf %68, %72 : vector<8x32xf32>
    %74 = arith.addf %63, %73 : vector<8x32xf32>
    %c0_15 = arith.constant 0 : index
    %c0_16 = arith.constant 0 : index
    %c0_17 = arith.constant 0 : index
    %75 = vector.load %arg4[%c0_15, %c0_16, %c0_17] : memref<1x8x32xf32, #tpu.memory_space<vmem>>, vector<1x8x32xf32>
    %76 = vector.shape_cast %75 : vector<1x8x32xf32> to vector<8x32xf32>
    %77 = vector.shape_cast %74 : vector<8x32xf32> to vector<1x8x32xf32>
    tpu.vector_store %arg4[%c0_15, %c0_16, %c0_17], %77 {strides = array<i32>} : memref<1x8x32xf32, #tpu.memory_space<vmem>>, vector<1x8x32xf32>,
    return
  }
  func.func @transform_0(%arg0: i32, %arg1: i32) -> (i32, i32, i32) {
    %c0_i32 = arith.constant 0 : i32
    %c0_i32_0 = arith.constant 0 : i32
    return %arg0, %c0_i32, %arg1 : i32, i32, i32
  }
  func.func @transform_1(%arg0: i32, %arg1: i32) -> (i32, i32) {
    %c0_i32 = arith.constant 0 : i32
    %c0_i32_0 = arith.constant 0 : i32
    return %c0_i32, %arg1 : i32, i32
  }
  func.func @transform_2(%arg0: i32, %arg1: i32) -> (i32, i32, i32) {
    %c0_i32 = arith.constant 0 : i32
    %c0_i32_0 = arith.constant 0 : i32
    return %arg0, %c0_i32, %arg1 : i32, i32, i32
  }
}

module attributes {stable_mosaic.version = 11 : i64} {
  func.func @_flash_attn_kernel(%arg0: i32, %arg1: i32, %arg2: i32, %arg3: memref<1x8x32xf32, #tpu.memory_space<vmem>>, %arg4: memref<1x8x32xf32, #tpu.memory_space<vmem>>, %arg5: memref<1x8x32xf32, #tpu.memory_space<vmem>>, %arg6: memref<1x8x32xf32, #tpu.memory_space<vmem>>, %arg7: memref<4x8x1xf32, #tpu.memory_space<vmem>>, %arg8: memref<4x8x1xf32, #tpu.memory_space<vmem>>, %arg9: memref<4x8x8xf32, #tpu.memory_space<vmem>>) attributes {dimension_semantics = [#tpu.dimension_semantics<parallel>, #tpu.dimension_semantics<parallel>, #tpu.dimension_semantics<arbitrary>], iteration_bounds = array<i64: 2, 1, 1>, scalar_prefetch = 0 : i64, scratch_operands = 3 : i64, tpu.core_type = #tpu.core_type<tc>, window_params = [{transform_indices = @transform_0, window_bounds = array<i64: 1, 8, 32>}, {transform_indices = @transform_1, window_bounds = array<i64: 1, 8, 32>}, {transform_indices = @transform_2, window_bounds = array<i64: 1, 8, 32>}, {transform_indices = @transform_3, window_bounds = array<i64: 1, 8, 32>}]} {
    %c0_i32 = arith.constant 0 : i32
    %0 = arith.cmpi eq, %arg2, %c0_i32 : i32
    %1 = arith.extui %0 : i1 to i32
    %c0_i32_0 = arith.constant 0 : i32
    %2 = arith.cmpi ne, %1, %c0_i32_0 : i32
    scf.if %2 {
      %cst_96 = arith.constant 0xFF800000 : f32
      %170 = vector.broadcast %cst_96 : f32 to vector<4x8x1xf32>
      %c0_97 = arith.constant 0 : index
      %c0_98 = arith.constant 0 : index
      %c0_99 = arith.constant 0 : index
      %171 = vector.load %arg7[%c0_97, %c0_98, %c0_99] : memref<4x8x1xf32, #tpu.memory_space<vmem>>, vector<4x8x1xf32>
      tpu.vector_store %arg7[%c0_97, %c0_98, %c0_99], %170 {strides = array<i32>} : memref<4x8x1xf32, #tpu.memory_space<vmem>>, vector<4x8x1xf32>,
      %cst_100 = arith.constant 0.000000e+00 : f32
      %172 = vector.broadcast %cst_100 : f32 to vector<4x8x1xf32>
      %c0_101 = arith.constant 0 : index
      %c0_102 = arith.constant 0 : index
      %c0_103 = arith.constant 0 : index
      %173 = vector.load %arg8[%c0_101, %c0_102, %c0_103] : memref<4x8x1xf32, #tpu.memory_space<vmem>>, vector<4x8x1xf32>
      tpu.vector_store %arg8[%c0_101, %c0_102, %c0_103], %172 {strides = array<i32>} : memref<4x8x1xf32, #tpu.memory_space<vmem>>, vector<4x8x1xf32>,
      %cst_104 = arith.constant 0.000000e+00 : f32
      %174 = vector.broadcast %cst_104 : f32 to vector<4x8x8xf32>
      %c0_105 = arith.constant 0 : index
      %c0_106 = arith.constant 0 : index
      %c0_107 = arith.constant 0 : index
      %175 = vector.load %arg9[%c0_105, %c0_106, %c0_107] : memref<4x8x8xf32, #tpu.memory_space<vmem>>, vector<4x8x8xf32>
      tpu.vector_store %arg9[%c0_105, %c0_106, %c0_107], %174 {strides = array<i32>} : memref<4x8x8xf32, #tpu.memory_space<vmem>>, vector<4x8x8xf32>,
    } else {
    }
    %c0 = arith.constant 0 : index
    %c0_1 = arith.constant 0 : index
    %c0_2 = arith.constant 0 : index
    %3 = vector.load %arg3[%c0, %c0_1, %c0_2] : memref<1x8x32xf32, #tpu.memory_space<vmem>>, vector<1x8x32xf32>
    %4 = vector.shape_cast %3 : vector<1x8x32xf32> to vector<8x32xf32>
    %cst = arith.constant 0.353553385 : f32
    %5 = vector.broadcast %cst : f32 to vector<8x32xf32>
    %6 = arith.mulf %4, %5 : vector<8x32xf32>
    %c0_3 = arith.constant 0 : index
    %c0_4 = arith.constant 0 : index
    %c0_5 = arith.constant 0 : index
    %7 = vector.load %arg4[%c0_3, %c0_4, %c0_5] : memref<1x8x32xf32, #tpu.memory_space<vmem>>, vector<1x8x32xf32>
    %8 = vector.shape_cast %7 : vector<1x8x32xf32> to vector<8x32xf32>
    %c0_6 = arith.constant 0 : index
    %c0_7 = arith.constant 0 : index
    %c0_8 = arith.constant 0 : index
    %9 = vector.load %arg5[%c0_6, %c0_7, %c0_8] : memref<1x8x32xf32, #tpu.memory_space<vmem>>, vector<1x8x32xf32>
    %10 = vector.shape_cast %9 : vector<1x8x32xf32> to vector<8x32xf32>
    %11 = vector.extract_strided_slice %6 {offsets = [0, 0], sizes = [8, 8], strides = [1, 1]} : vector<8x32xf32> to vector<8x8xf32>
    %12 = arith.truncf %11 : vector<8x8xf32> to vector<8x8xbf16>
    %13 = vector.extract_strided_slice %8 {offsets = [0, 0], sizes = [8, 8], strides = [1, 1]} : vector<8x32xf32> to vector<8x8xf32>
    %14 = arith.truncf %13 : vector<8x8xf32> to vector<8x8xbf16>
    %cst_9 = arith.constant dense<0.000000e+00> : vector<8x8xf32>
    %15 = tpu.matmul %12, %14, %cst_9 {dimension_numbers = #tpu.dot_dimension_numbers<[1], [1], [0], [0], [0, 0, 1, 0], [], []>} : vector<8x8xbf16>, vector<8x8xbf16>, vector<8x8xf32> -> vector<8x8xf32>
    %c0_10 = arith.constant 0 : index
    %c0_11 = arith.constant 0 : index
    %c0_12 = arith.constant 0 : index
    %16 = vector.load %arg7[%c0_10, %c0_11, %c0_12] : memref<4x8x1xf32, #tpu.memory_space<vmem>>, vector<1x8x1xf32>
    %17 = vector.shape_cast %16 : vector<1x8x1xf32> to vector<8x1xf32>
    %cst_13 = arith.constant dense<0xFF800000> : vector<8xf32>
    %18 = vector.multi_reduction <maximumf>, %15, %cst_13 [1] : vector<8x8xf32> to vector<8xf32>
    %19 = vector.shape_cast %18 : vector<8xf32> to vector<8x1xf32>
    %20 = arith.maximumf %17, %19 : vector<8x1xf32>
    %21 = arith.subf %17, %20 : vector<8x1xf32>
    %22 = math.exp %21 : vector<8x1xf32>
    %23 = vector.broadcast %20 : vector<8x1xf32> to vector<8x8xf32>
    %24 = arith.subf %15, %23 : vector<8x8xf32>
    %25 = math.exp %24 : vector<8x8xf32>
    %c0_14 = arith.constant 0 : index
    %c0_15 = arith.constant 0 : index
    %c0_16 = arith.constant 0 : index
    %26 = vector.load %arg8[%c0_14, %c0_15, %c0_16] : memref<4x8x1xf32, #tpu.memory_space<vmem>>, vector<1x8x1xf32>
    %27 = vector.shape_cast %26 : vector<1x8x1xf32> to vector<8x1xf32>
    %28 = arith.mulf %22, %27 : vector<8x1xf32>
    %cst_17 = arith.constant dense<0.000000e+00> : vector<8xf32>
    %29 = vector.multi_reduction <add>, %25, %cst_17 [1] : vector<8x8xf32> to vector<8xf32>
    %30 = vector.shape_cast %29 : vector<8xf32> to vector<8x1xf32>
    %31 = arith.addf %28, %30 : vector<8x1xf32>
    %c0_18 = arith.constant 0 : index
    %c0_19 = arith.constant 0 : index
    %c0_20 = arith.constant 0 : index
    %32 = vector.load %arg8[%c0_18, %c0_19, %c0_20] : memref<4x8x1xf32, #tpu.memory_space<vmem>>, vector<1x8x1xf32>
    %33 = vector.shape_cast %32 : vector<1x8x1xf32> to vector<8x1xf32>
    %34 = vector.shape_cast %31 : vector<8x1xf32> to vector<1x8x1xf32>
    tpu.vector_store %arg8[%c0_18, %c0_19, %c0_20], %34 {strides = array<i32>} : memref<4x8x1xf32, #tpu.memory_space<vmem>>, vector<1x8x1xf32>,
    %35 = arith.truncf %25 : vector<8x8xf32> to vector<8x8xbf16>
    %36 = vector.extract_strided_slice %10 {offsets = [0, 0], sizes = [8, 8], strides = [1, 1]} : vector<8x32xf32> to vector<8x8xf32>
    %37 = arith.truncf %36 : vector<8x8xf32> to vector<8x8xbf16>
    %cst_21 = arith.constant dense<0.000000e+00> : vector<8x8xf32>
    %38 = tpu.matmul %35, %37, %cst_21 {dimension_numbers = #tpu.dot_dimension_numbers<[1], [0], [0], [1], [0, 0, 1, 1], [], []>} : vector<8x8xbf16>, vector<8x8xbf16>, vector<8x8xf32> -> vector<8x8xf32>
    %c0_22 = arith.constant 0 : index
    %c0_23 = arith.constant 0 : index
    %c0_24 = arith.constant 0 : index
    %39 = vector.load %arg9[%c0_22, %c0_23, %c0_24] : memref<4x8x8xf32, #tpu.memory_space<vmem>>, vector<1x8x8xf32>
    %40 = vector.shape_cast %39 : vector<1x8x8xf32> to vector<8x8xf32>
    %41 = vector.broadcast %22 : vector<8x1xf32> to vector<8x8xf32>
    %42 = arith.mulf %41, %40 : vector<8x8xf32>
    %43 = arith.addf %42, %38 : vector<8x8xf32>
    %c0_25 = arith.constant 0 : index
    %c0_26 = arith.constant 0 : index
    %c0_27 = arith.constant 0 : index
    %44 = vector.load %arg9[%c0_25, %c0_26, %c0_27] : memref<4x8x8xf32, #tpu.memory_space<vmem>>, vector<1x8x8xf32>
    %45 = vector.shape_cast %44 : vector<1x8x8xf32> to vector<8x8xf32>
    %46 = vector.shape_cast %43 : vector<8x8xf32> to vector<1x8x8xf32>
    tpu.vector_store %arg9[%c0_25, %c0_26, %c0_27], %46 {strides = array<i32>} : memref<4x8x8xf32, #tpu.memory_space<vmem>>, vector<1x8x8xf32>,
    %c0_28 = arith.constant 0 : index
    %c0_29 = arith.constant 0 : index
    %c0_30 = arith.constant 0 : index
    %47 = vector.load %arg7[%c0_28, %c0_29, %c0_30] : memref<4x8x1xf32, #tpu.memory_space<vmem>>, vector<1x8x1xf32>
    %48 = vector.shape_cast %47 : vector<1x8x1xf32> to vector<8x1xf32>
    %49 = vector.shape_cast %20 : vector<8x1xf32> to vector<1x8x1xf32>
    tpu.vector_store %arg7[%c0_28, %c0_29, %c0_30], %49 {strides = array<i32>} : memref<4x8x1xf32, #tpu.memory_space<vmem>>, vector<1x8x1xf32>,
    %50 = vector.extract_strided_slice %6 {offsets = [0, 8], sizes = [8, 8], strides = [1, 1]} : vector<8x32xf32> to vector<8x8xf32>
    %51 = arith.truncf %50 : vector<8x8xf32> to vector<8x8xbf16>
    %52 = vector.extract_strided_slice %8 {offsets = [0, 8], sizes = [8, 8], strides = [1, 1]} : vector<8x32xf32> to vector<8x8xf32>
    %53 = arith.truncf %52 : vector<8x8xf32> to vector<8x8xbf16>
    %cst_31 = arith.constant dense<0.000000e+00> : vector<8x8xf32>
    %54 = tpu.matmul %51, %53, %cst_31 {dimension_numbers = #tpu.dot_dimension_numbers<[1], [1], [0], [0], [0, 0, 1, 0], [], []>} : vector<8x8xbf16>, vector<8x8xbf16>, vector<8x8xf32> -> vector<8x8xf32>
    %c1 = arith.constant 1 : index
    %c0_32 = arith.constant 0 : index
    %c0_33 = arith.constant 0 : index
    %55 = vector.load %arg7[%c1, %c0_32, %c0_33] : memref<4x8x1xf32, #tpu.memory_space<vmem>>, vector<1x8x1xf32>
    %56 = vector.shape_cast %55 : vector<1x8x1xf32> to vector<8x1xf32>
    %cst_34 = arith.constant dense<0xFF800000> : vector<8xf32>
    %57 = vector.multi_reduction <maximumf>, %54, %cst_34 [1] : vector<8x8xf32> to vector<8xf32>
    %58 = vector.shape_cast %57 : vector<8xf32> to vector<8x1xf32>
    %59 = arith.maximumf %56, %58 : vector<8x1xf32>
    %60 = arith.subf %56, %59 : vector<8x1xf32>
    %61 = math.exp %60 : vector<8x1xf32>
    %62 = vector.broadcast %59 : vector<8x1xf32> to vector<8x8xf32>
    %63 = arith.subf %54, %62 : vector<8x8xf32>
    %64 = math.exp %63 : vector<8x8xf32>
    %c1_35 = arith.constant 1 : index
    %c0_36 = arith.constant 0 : index
    %c0_37 = arith.constant 0 : index
    %65 = vector.load %arg8[%c1_35, %c0_36, %c0_37] : memref<4x8x1xf32, #tpu.memory_space<vmem>>, vector<1x8x1xf32>
    %66 = vector.shape_cast %65 : vector<1x8x1xf32> to vector<8x1xf32>
    %67 = arith.mulf %61, %66 : vector<8x1xf32>
    %cst_38 = arith.constant dense<0.000000e+00> : vector<8xf32>
    %68 = vector.multi_reduction <add>, %64, %cst_38 [1] : vector<8x8xf32> to vector<8xf32>
    %69 = vector.shape_cast %68 : vector<8xf32> to vector<8x1xf32>
    %70 = arith.addf %67, %69 : vector<8x1xf32>
    %c1_39 = arith.constant 1 : index
    %c0_40 = arith.constant 0 : index
    %c0_41 = arith.constant 0 : index
    %71 = vector.load %arg8[%c1_39, %c0_40, %c0_41] : memref<4x8x1xf32, #tpu.memory_space<vmem>>, vector<1x8x1xf32>
    %72 = vector.shape_cast %71 : vector<1x8x1xf32> to vector<8x1xf32>
    %73 = vector.shape_cast %70 : vector<8x1xf32> to vector<1x8x1xf32>
    tpu.vector_store %arg8[%c1_39, %c0_40, %c0_41], %73 {strides = array<i32>} : memref<4x8x1xf32, #tpu.memory_space<vmem>>, vector<1x8x1xf32>,
    %74 = arith.truncf %64 : vector<8x8xf32> to vector<8x8xbf16>
    %75 = vector.extract_strided_slice %10 {offsets = [0, 8], sizes = [8, 8], strides = [1, 1]} : vector<8x32xf32> to vector<8x8xf32>
    %76 = arith.truncf %75 : vector<8x8xf32> to vector<8x8xbf16>
    %cst_42 = arith.constant dense<0.000000e+00> : vector<8x8xf32>
    %77 = tpu.matmul %74, %76, %cst_42 {dimension_numbers = #tpu.dot_dimension_numbers<[1], [0], [0], [1], [0, 0, 1, 1], [], []>} : vector<8x8xbf16>, vector<8x8xbf16>, vector<8x8xf32> -> vector<8x8xf32>
    %c1_43 = arith.constant 1 : index
    %c0_44 = arith.constant 0 : index
    %c0_45 = arith.constant 0 : index
    %78 = vector.load %arg9[%c1_43, %c0_44, %c0_45] : memref<4x8x8xf32, #tpu.memory_space<vmem>>, vector<1x8x8xf32>
    %79 = vector.shape_cast %78 : vector<1x8x8xf32> to vector<8x8xf32>
    %80 = vector.broadcast %61 : vector<8x1xf32> to vector<8x8xf32>
    %81 = arith.mulf %80, %79 : vector<8x8xf32>
    %82 = arith.addf %81, %77 : vector<8x8xf32>
    %c1_46 = arith.constant 1 : index
    %c0_47 = arith.constant 0 : index
    %c0_48 = arith.constant 0 : index
    %83 = vector.load %arg9[%c1_46, %c0_47, %c0_48] : memref<4x8x8xf32, #tpu.memory_space<vmem>>, vector<1x8x8xf32>
    %84 = vector.shape_cast %83 : vector<1x8x8xf32> to vector<8x8xf32>
    %85 = vector.shape_cast %82 : vector<8x8xf32> to vector<1x8x8xf32>
    tpu.vector_store %arg9[%c1_46, %c0_47, %c0_48], %85 {strides = array<i32>} : memref<4x8x8xf32, #tpu.memory_space<vmem>>, vector<1x8x8xf32>,
    %c1_49 = arith.constant 1 : index
    %c0_50 = arith.constant 0 : index
    %c0_51 = arith.constant 0 : index
    %86 = vector.load %arg7[%c1_49, %c0_50, %c0_51] : memref<4x8x1xf32, #tpu.memory_space<vmem>>, vector<1x8x1xf32>
    %87 = vector.shape_cast %86 : vector<1x8x1xf32> to vector<8x1xf32>
    %88 = vector.shape_cast %59 : vector<8x1xf32> to vector<1x8x1xf32>
    tpu.vector_store %arg7[%c1_49, %c0_50, %c0_51], %88 {strides = array<i32>} : memref<4x8x1xf32, #tpu.memory_space<vmem>>, vector<1x8x1xf32>,
    %89 = vector.extract_strided_slice %6 {offsets = [0, 16], sizes = [8, 8], strides = [1, 1]} : vector<8x32xf32> to vector<8x8xf32>
    %90 = arith.truncf %89 : vector<8x8xf32> to vector<8x8xbf16>
    %91 = vector.extract_strided_slice %8 {offsets = [0, 16], sizes = [8, 8], strides = [1, 1]} : vector<8x32xf32> to vector<8x8xf32>
    %92 = arith.truncf %91 : vector<8x8xf32> to vector<8x8xbf16>
    %cst_52 = arith.constant dense<0.000000e+00> : vector<8x8xf32>
    %93 = tpu.matmul %90, %92, %cst_52 {dimension_numbers = #tpu.dot_dimension_numbers<[1], [1], [0], [0], [0, 0, 1, 0], [], []>} : vector<8x8xbf16>, vector<8x8xbf16>, vector<8x8xf32> -> vector<8x8xf32>
    %c2 = arith.constant 2 : index
    %c0_53 = arith.constant 0 : index
    %c0_54 = arith.constant 0 : index
    %94 = vector.load %arg7[%c2, %c0_53, %c0_54] : memref<4x8x1xf32, #tpu.memory_space<vmem>>, vector<1x8x1xf32>
    %95 = vector.shape_cast %94 : vector<1x8x1xf32> to vector<8x1xf32>
    %cst_55 = arith.constant dense<0xFF800000> : vector<8xf32>
    %96 = vector.multi_reduction <maximumf>, %93, %cst_55 [1] : vector<8x8xf32> to vector<8xf32>
    %97 = vector.shape_cast %96 : vector<8xf32> to vector<8x1xf32>
    %98 = arith.maximumf %95, %97 : vector<8x1xf32>
    %99 = arith.subf %95, %98 : vector<8x1xf32>
    %100 = math.exp %99 : vector<8x1xf32>
    %101 = vector.broadcast %98 : vector<8x1xf32> to vector<8x8xf32>
    %102 = arith.subf %93, %101 : vector<8x8xf32>
    %103 = math.exp %102 : vector<8x8xf32>
    %c2_56 = arith.constant 2 : index
    %c0_57 = arith.constant 0 : index
    %c0_58 = arith.constant 0 : index
    %104 = vector.load %arg8[%c2_56, %c0_57, %c0_58] : memref<4x8x1xf32, #tpu.memory_space<vmem>>, vector<1x8x1xf32>
    %105 = vector.shape_cast %104 : vector<1x8x1xf32> to vector<8x1xf32>
    %106 = arith.mulf %100, %105 : vector<8x1xf32>
    %cst_59 = arith.constant dense<0.000000e+00> : vector<8xf32>
    %107 = vector.multi_reduction <add>, %103, %cst_59 [1] : vector<8x8xf32> to vector<8xf32>
    %108 = vector.shape_cast %107 : vector<8xf32> to vector<8x1xf32>
    %109 = arith.addf %106, %108 : vector<8x1xf32>
    %c2_60 = arith.constant 2 : index
    %c0_61 = arith.constant 0 : index
    %c0_62 = arith.constant 0 : index
    %110 = vector.load %arg8[%c2_60, %c0_61, %c0_62] : memref<4x8x1xf32, #tpu.memory_space<vmem>>, vector<1x8x1xf32>
    %111 = vector.shape_cast %110 : vector<1x8x1xf32> to vector<8x1xf32>
    %112 = vector.shape_cast %109 : vector<8x1xf32> to vector<1x8x1xf32>
    tpu.vector_store %arg8[%c2_60, %c0_61, %c0_62], %112 {strides = array<i32>} : memref<4x8x1xf32, #tpu.memory_space<vmem>>, vector<1x8x1xf32>,
    %113 = arith.truncf %103 : vector<8x8xf32> to vector<8x8xbf16>
    %114 = vector.extract_strided_slice %10 {offsets = [0, 16], sizes = [8, 8], strides = [1, 1]} : vector<8x32xf32> to vector<8x8xf32>
    %115 = arith.truncf %114 : vector<8x8xf32> to vector<8x8xbf16>
    %cst_63 = arith.constant dense<0.000000e+00> : vector<8x8xf32>
    %116 = tpu.matmul %113, %115, %cst_63 {dimension_numbers = #tpu.dot_dimension_numbers<[1], [0], [0], [1], [0, 0, 1, 1], [], []>} : vector<8x8xbf16>, vector<8x8xbf16>, vector<8x8xf32> -> vector<8x8xf32>
    %c2_64 = arith.constant 2 : index
    %c0_65 = arith.constant 0 : index
    %c0_66 = arith.constant 0 : index
    %117 = vector.load %arg9[%c2_64, %c0_65, %c0_66] : memref<4x8x8xf32, #tpu.memory_space<vmem>>, vector<1x8x8xf32>
    %118 = vector.shape_cast %117 : vector<1x8x8xf32> to vector<8x8xf32>
    %119 = vector.broadcast %100 : vector<8x1xf32> to vector<8x8xf32>
    %120 = arith.mulf %119, %118 : vector<8x8xf32>
    %121 = arith.addf %120, %116 : vector<8x8xf32>
    %c2_67 = arith.constant 2 : index
    %c0_68 = arith.constant 0 : index
    %c0_69 = arith.constant 0 : index
    %122 = vector.load %arg9[%c2_67, %c0_68, %c0_69] : memref<4x8x8xf32, #tpu.memory_space<vmem>>, vector<1x8x8xf32>
    %123 = vector.shape_cast %122 : vector<1x8x8xf32> to vector<8x8xf32>
    %124 = vector.shape_cast %121 : vector<8x8xf32> to vector<1x8x8xf32>
    tpu.vector_store %arg9[%c2_67, %c0_68, %c0_69], %124 {strides = array<i32>} : memref<4x8x8xf32, #tpu.memory_space<vmem>>, vector<1x8x8xf32>,
    %c2_70 = arith.constant 2 : index
    %c0_71 = arith.constant 0 : index
    %c0_72 = arith.constant 0 : index
    %125 = vector.load %arg7[%c2_70, %c0_71, %c0_72] : memref<4x8x1xf32, #tpu.memory_space<vmem>>, vector<1x8x1xf32>
    %126 = vector.shape_cast %125 : vector<1x8x1xf32> to vector<8x1xf32>
    %127 = vector.shape_cast %98 : vector<8x1xf32> to vector<1x8x1xf32>
    tpu.vector_store %arg7[%c2_70, %c0_71, %c0_72], %127 {strides = array<i32>} : memref<4x8x1xf32, #tpu.memory_space<vmem>>, vector<1x8x1xf32>,
    %128 = vector.extract_strided_slice %6 {offsets = [0, 24], sizes = [8, 8], strides = [1, 1]} : vector<8x32xf32> to vector<8x8xf32>
    %129 = arith.truncf %128 : vector<8x8xf32> to vector<8x8xbf16>
    %130 = vector.extract_strided_slice %8 {offsets = [0, 24], sizes = [8, 8], strides = [1, 1]} : vector<8x32xf32> to vector<8x8xf32>
    %131 = arith.truncf %130 : vector<8x8xf32> to vector<8x8xbf16>
    %cst_73 = arith.constant dense<0.000000e+00> : vector<8x8xf32>
    %132 = tpu.matmul %129, %131, %cst_73 {dimension_numbers = #tpu.dot_dimension_numbers<[1], [1], [0], [0], [0, 0, 1, 0], [], []>} : vector<8x8xbf16>, vector<8x8xbf16>, vector<8x8xf32> -> vector<8x8xf32>
    %c3 = arith.constant 3 : index
    %c0_74 = arith.constant 0 : index
    %c0_75 = arith.constant 0 : index
    %133 = vector.load %arg7[%c3, %c0_74, %c0_75] : memref<4x8x1xf32, #tpu.memory_space<vmem>>, vector<1x8x1xf32>
    %134 = vector.shape_cast %133 : vector<1x8x1xf32> to vector<8x1xf32>
    %cst_76 = arith.constant dense<0xFF800000> : vector<8xf32>
    %135 = vector.multi_reduction <maximumf>, %132, %cst_76 [1] : vector<8x8xf32> to vector<8xf32>
    %136 = vector.shape_cast %135 : vector<8xf32> to vector<8x1xf32>
    %137 = arith.maximumf %134, %136 : vector<8x1xf32>
    %138 = arith.subf %134, %137 : vector<8x1xf32>
    %139 = math.exp %138 : vector<8x1xf32>
    %140 = vector.broadcast %137 : vector<8x1xf32> to vector<8x8xf32>
    %141 = arith.subf %132, %140 : vector<8x8xf32>
    %142 = math.exp %141 : vector<8x8xf32>
    %c3_77 = arith.constant 3 : index
    %c0_78 = arith.constant 0 : index
    %c0_79 = arith.constant 0 : index
    %143 = vector.load %arg8[%c3_77, %c0_78, %c0_79] : memref<4x8x1xf32, #tpu.memory_space<vmem>>, vector<1x8x1xf32>
    %144 = vector.shape_cast %143 : vector<1x8x1xf32> to vector<8x1xf32>
    %145 = arith.mulf %139, %144 : vector<8x1xf32>
    %cst_80 = arith.constant dense<0.000000e+00> : vector<8xf32>
    %146 = vector.multi_reduction <add>, %142, %cst_80 [1] : vector<8x8xf32> to vector<8xf32>
    %147 = vector.shape_cast %146 : vector<8xf32> to vector<8x1xf32>
    %148 = arith.addf %145, %147 : vector<8x1xf32>
    %c3_81 = arith.constant 3 : index
    %c0_82 = arith.constant 0 : index
    %c0_83 = arith.constant 0 : index
    %149 = vector.load %arg8[%c3_81, %c0_82, %c0_83] : memref<4x8x1xf32, #tpu.memory_space<vmem>>, vector<1x8x1xf32>
    %150 = vector.shape_cast %149 : vector<1x8x1xf32> to vector<8x1xf32>
    %151 = vector.shape_cast %148 : vector<8x1xf32> to vector<1x8x1xf32>
    tpu.vector_store %arg8[%c3_81, %c0_82, %c0_83], %151 {strides = array<i32>} : memref<4x8x1xf32, #tpu.memory_space<vmem>>, vector<1x8x1xf32>,
    %152 = arith.truncf %142 : vector<8x8xf32> to vector<8x8xbf16>
    %153 = vector.extract_strided_slice %10 {offsets = [0, 24], sizes = [8, 8], strides = [1, 1]} : vector<8x32xf32> to vector<8x8xf32>
    %154 = arith.truncf %153 : vector<8x8xf32> to vector<8x8xbf16>
    %cst_84 = arith.constant dense<0.000000e+00> : vector<8x8xf32>
    %155 = tpu.matmul %152, %154, %cst_84 {dimension_numbers = #tpu.dot_dimension_numbers<[1], [0], [0], [1], [0, 0, 1, 1], [], []>} : vector<8x8xbf16>, vector<8x8xbf16>, vector<8x8xf32> -> vector<8x8xf32>
    %c3_85 = arith.constant 3 : index
    %c0_86 = arith.constant 0 : index
    %c0_87 = arith.constant 0 : index
    %156 = vector.load %arg9[%c3_85, %c0_86, %c0_87] : memref<4x8x8xf32, #tpu.memory_space<vmem>>, vector<1x8x8xf32>
    %157 = vector.shape_cast %156 : vector<1x8x8xf32> to vector<8x8xf32>
    %158 = vector.broadcast %139 : vector<8x1xf32> to vector<8x8xf32>
    %159 = arith.mulf %158, %157 : vector<8x8xf32>
    %160 = arith.addf %159, %155 : vector<8x8xf32>
    %c3_88 = arith.constant 3 : index
    %c0_89 = arith.constant 0 : index
    %c0_90 = arith.constant 0 : index
    %161 = vector.load %arg9[%c3_88, %c0_89, %c0_90] : memref<4x8x8xf32, #tpu.memory_space<vmem>>, vector<1x8x8xf32>
    %162 = vector.shape_cast %161 : vector<1x8x8xf32> to vector<8x8xf32>
    %163 = vector.shape_cast %160 : vector<8x8xf32> to vector<1x8x8xf32>
    tpu.vector_store %arg9[%c3_88, %c0_89, %c0_90], %163 {strides = array<i32>} : memref<4x8x8xf32, #tpu.memory_space<vmem>>, vector<1x8x8xf32>,
    %c3_91 = arith.constant 3 : index
    %c0_92 = arith.constant 0 : index
    %c0_93 = arith.constant 0 : index
    %164 = vector.load %arg7[%c3_91, %c0_92, %c0_93] : memref<4x8x1xf32, #tpu.memory_space<vmem>>, vector<1x8x1xf32>
    %165 = vector.shape_cast %164 : vector<1x8x1xf32> to vector<8x1xf32>
    %166 = vector.shape_cast %137 : vector<8x1xf32> to vector<1x8x1xf32>
    tpu.vector_store %arg7[%c3_91, %c0_92, %c0_93], %166 {strides = array<i32>} : memref<4x8x1xf32, #tpu.memory_space<vmem>>, vector<1x8x1xf32>,
    %c0_i32_94 = arith.constant 0 : i32
    %167 = arith.cmpi eq, %arg2, %c0_i32_94 : i32
    %168 = arith.extui %167 : i1 to i32
    %c0_i32_95 = arith.constant 0 : i32
    %169 = arith.cmpi ne, %168, %c0_i32_95 : i32
    scf.if %169 {
      %c0_96 = arith.constant 0 : index
      %c0_97 = arith.constant 0 : index
      %c0_98 = arith.constant 0 : index
      %170 = vector.load %arg9[%c0_96, %c0_97, %c0_98] : memref<4x8x8xf32, #tpu.memory_space<vmem>>, vector<1x8x8xf32>
      %171 = vector.shape_cast %170 : vector<1x8x8xf32> to vector<8x8xf32>
      %c0_99 = arith.constant 0 : index
      %c0_100 = arith.constant 0 : index
      %c0_101 = arith.constant 0 : index
      %172 = vector.load %arg8[%c0_99, %c0_100, %c0_101] : memref<4x8x1xf32, #tpu.memory_space<vmem>>, vector<1x8x1xf32>
      %173 = vector.shape_cast %172 : vector<1x8x1xf32> to vector<8x1xf32>
      %174 = tpu.reciprocal %173 {approx = true} : vector<8x1xf32> -> vector<8x1xf32>
      %175 = vector.broadcast %174 : vector<8x1xf32> to vector<8x8xf32>
      %176 = arith.mulf %171, %175 : vector<8x8xf32>
      %c1_102 = arith.constant 1 : index
      %c0_103 = arith.constant 0 : index
      %c0_104 = arith.constant 0 : index
      %177 = vector.load %arg9[%c1_102, %c0_103, %c0_104] : memref<4x8x8xf32, #tpu.memory_space<vmem>>, vector<1x8x8xf32>
      %178 = vector.shape_cast %177 : vector<1x8x8xf32> to vector<8x8xf32>
      %c1_105 = arith.constant 1 : index
      %c0_106 = arith.constant 0 : index
      %c0_107 = arith.constant 0 : index
      %179 = vector.load %arg8[%c1_105, %c0_106, %c0_107] : memref<4x8x1xf32, #tpu.memory_space<vmem>>, vector<1x8x1xf32>
      %180 = vector.shape_cast %179 : vector<1x8x1xf32> to vector<8x1xf32>
      %181 = tpu.reciprocal %180 {approx = true} : vector<8x1xf32> -> vector<8x1xf32>
      %182 = vector.broadcast %181 : vector<8x1xf32> to vector<8x8xf32>
      %183 = arith.mulf %178, %182 : vector<8x8xf32>
      %c2_108 = arith.constant 2 : index
      %c0_109 = arith.constant 0 : index
      %c0_110 = arith.constant 0 : index
      %184 = vector.load %arg9[%c2_108, %c0_109, %c0_110] : memref<4x8x8xf32, #tpu.memory_space<vmem>>, vector<1x8x8xf32>
      %185 = vector.shape_cast %184 : vector<1x8x8xf32> to vector<8x8xf32>
      %c2_111 = arith.constant 2 : index
      %c0_112 = arith.constant 0 : index
      %c0_113 = arith.constant 0 : index
      %186 = vector.load %arg8[%c2_111, %c0_112, %c0_113] : memref<4x8x1xf32, #tpu.memory_space<vmem>>, vector<1x8x1xf32>
      %187 = vector.shape_cast %186 : vector<1x8x1xf32> to vector<8x1xf32>
      %188 = tpu.reciprocal %187 {approx = true} : vector<8x1xf32> -> vector<8x1xf32>
      %189 = vector.broadcast %188 : vector<8x1xf32> to vector<8x8xf32>
      %190 = arith.mulf %185, %189 : vector<8x8xf32>
      %c3_114 = arith.constant 3 : index
      %c0_115 = arith.constant 0 : index
      %c0_116 = arith.constant 0 : index
      %191 = vector.load %arg9[%c3_114, %c0_115, %c0_116] : memref<4x8x8xf32, #tpu.memory_space<vmem>>, vector<1x8x8xf32>
      %192 = vector.shape_cast %191 : vector<1x8x8xf32> to vector<8x8xf32>
      %c3_117 = arith.constant 3 : index
      %c0_118 = arith.constant 0 : index
      %c0_119 = arith.constant 0 : index
      %193 = vector.load %arg8[%c3_117, %c0_118, %c0_119] : memref<4x8x1xf32, #tpu.memory_space<vmem>>, vector<1x8x1xf32>
      %194 = vector.shape_cast %193 : vector<1x8x1xf32> to vector<8x1xf32>
      %195 = tpu.reciprocal %194 {approx = true} : vector<8x1xf32> -> vector<8x1xf32>
      %196 = vector.broadcast %195 : vector<8x1xf32> to vector<8x8xf32>
      %197 = arith.mulf %192, %196 : vector<8x8xf32>
      %198 = tpu.concatenate %176, %183, %190, %197 in 1 : vector<8x8xf32>, vector<8x8xf32>, vector<8x8xf32>, vector<8x8xf32> -> vector<8x32xf32>
      %c0_120 = arith.constant 0 : index
      %c0_121 = arith.constant 0 : index
      %c0_122 = arith.constant 0 : index
      %199 = vector.load %arg6[%c0_120, %c0_121, %c0_122] : memref<1x8x32xf32, #tpu.memory_space<vmem>>, vector<1x8x32xf32>
      %200 = vector.shape_cast %199 : vector<1x8x32xf32> to vector<8x32xf32>
      %201 = vector.shape_cast %198 : vector<8x32xf32> to vector<1x8x32xf32>
      tpu.vector_store %arg6[%c0_120, %c0_121, %c0_122], %201 {strides = array<i32>} : memref<1x8x32xf32, #tpu.memory_space<vmem>>, vector<1x8x32xf32>,
    } else {
    }
    return
  }
  func.func @transform_0(%arg0: i32, %arg1: i32, %arg2: i32) -> (i32, i32, i32) {
    %c0_i32 = arith.constant 0 : i32
    %c0_i32_0 = arith.constant 0 : i32
    return %arg0, %arg1, %c0_i32 : i32, i32, i32
  }
  func.func @transform_1(%arg0: i32, %arg1: i32, %arg2: i32) -> (i32, i32, i32) {
    %c0_i32 = arith.constant 0 : i32
    %c0_i32_0 = arith.constant 0 : i32
    return %arg0, %arg2, %c0_i32 : i32, i32, i32
  }
  func.func @transform_2(%arg0: i32, %arg1: i32, %arg2: i32) -> (i32, i32, i32) {
    %c0_i32 = arith.constant 0 : i32
    %c0_i32_0 = arith.constant 0 : i32
    return %arg0, %arg2, %c0_i32 : i32, i32, i32
  }
  func.func @transform_3(%arg0: i32, %arg1: i32, %arg2: i32) -> (i32, i32, i32) {
    %c0_i32 = arith.constant 0 : i32
    %c0_i32_0 = arith.constant 0 : i32
    return %arg0, %arg1, %c0_i32 : i32, i32, i32
  }
}

module attributes {stable_mosaic.version = 11 : i64} {
  func.func @_linear_kernel(%arg0: i32, %arg1: i32, %arg2: i32, %arg3: memref<16x32xf32, #tpu.memory_space<vmem>>, %arg4: memref<32x32xbf16, #tpu.memory_space<vmem>>, %arg5: memref<1x32xf32, #tpu.memory_space<vmem>>, %arg6: memref<16x32xf32, #tpu.memory_space<vmem>>) attributes {dimension_semantics = [#tpu.dimension_semantics<parallel>, #tpu.dimension_semantics<parallel>, #tpu.dimension_semantics<arbitrary>], iteration_bounds = array<i64: 1, 1, 1>, scalar_prefetch = 0 : i64, scratch_operands = 0 : i64, tpu.core_type = #tpu.core_type<tc>, window_params = [{transform_indices = @transform_0, window_bounds = array<i64: 16, 32>}, {transform_indices = @transform_1, window_bounds = array<i64: 32, 32>}, {transform_indices = @transform_2, window_bounds = array<i64: 1, 32>}, {transform_indices = @transform_3, window_bounds = array<i64: 16, 32>}]} {
    %c0_i32 = arith.constant 0 : i32
    %0 = arith.cmpi eq, %arg2, %c0_i32 : i32
    %1 = arith.extui %0 : i1 to i32
    %c0_i32_0 = arith.constant 0 : i32
    %2 = arith.cmpi ne, %1, %c0_i32_0 : i32
    scf.if %2 {
      %cst_10 = arith.constant 0.000000e+00 : f32
      %13 = vector.broadcast %cst_10 : f32 to vector<16x32xf32>
      %c0_11 = arith.constant 0 : index
      %c0_12 = arith.constant 0 : index
      %14 = vector.load %arg6[%c0_11, %c0_12] : memref<16x32xf32, #tpu.memory_space<vmem>>, vector<16x32xf32>
      tpu.vector_store %arg6[%c0_11, %c0_12], %13 {strides = array<i32>} : memref<16x32xf32, #tpu.memory_space<vmem>>, vector<16x32xf32>,
    } else {
    }
    %c0 = arith.constant 0 : index
    %c0_1 = arith.constant 0 : index
    %3 = vector.load %arg6[%c0, %c0_1] : memref<16x32xf32, #tpu.memory_space<vmem>>, vector<16x32xf32>
    %c0_2 = arith.constant 0 : index
    %c0_3 = arith.constant 0 : index
    %4 = vector.load %arg3[%c0_2, %c0_3] : memref<16x32xf32, #tpu.memory_space<vmem>>, vector<16x32xf32>
    %5 = arith.truncf %4 : vector<16x32xf32> to vector<16x32xbf16>
    %c0_4 = arith.constant 0 : index
    %c0_5 = arith.constant 0 : index
    %6 = vector.load %arg4[%c0_4, %c0_5] : memref<32x32xbf16, #tpu.memory_space<vmem>>, vector<32x32xbf16>
    %cst = arith.constant dense<0.000000e+00> : vector<16x32xf32>
    %7 = tpu.matmul %5, %6, %cst {dimension_numbers = #tpu.dot_dimension_numbers<[1], [0], [0], [1], [0, 0, 1, 1], [], []>} : vector<16x32xbf16>, vector<32x32xbf16>, vector<16x32xf32> -> vector<16x32xf32>
    %8 = arith.addf %3, %7 : vector<16x32xf32>
    %c0_6 = arith.constant 0 : index
    %c0_7 = arith.constant 0 : index
    %9 = vector.load %arg6[%c0_6, %c0_7] : memref<16x32xf32, #tpu.memory_space<vmem>>, vector<16x32xf32>
    tpu.vector_store %arg6[%c0_6, %c0_7], %8 {strides = array<i32>} : memref<16x32xf32, #tpu.memory_space<vmem>>, vector<16x32xf32>,
    %c0_i32_8 = arith.constant 0 : i32
    %10 = arith.cmpi eq, %arg2, %c0_i32_8 : i32
    %11 = arith.extui %10 : i1 to i32
    %c0_i32_9 = arith.constant 0 : i32
    %12 = arith.cmpi ne, %11, %c0_i32_9 : i32
    scf.if %12 {
      %c0_10 = arith.constant 0 : index
      %c0_11 = arith.constant 0 : index
      %13 = vector.load %arg6[%c0_10, %c0_11] : memref<16x32xf32, #tpu.memory_space<vmem>>, vector<16x32xf32>
      %c0_12 = arith.constant 0 : index
      %c0_13 = arith.constant 0 : index
      %14 = vector.load %arg5[%c0_12, %c0_13] : memref<1x32xf32, #tpu.memory_space<vmem>>, vector<1x32xf32>
      %15 = vector.broadcast %14 : vector<1x32xf32> to vector<16x32xf32>
      %16 = arith.addf %13, %15 : vector<16x32xf32>
      %c0_14 = arith.constant 0 : index
      %c0_15 = arith.constant 0 : index
      %17 = vector.load %arg6[%c0_14, %c0_15] : memref<16x32xf32, #tpu.memory_space<vmem>>, vector<16x32xf32>
      tpu.vector_store %arg6[%c0_14, %c0_15], %16 {strides = array<i32>} : memref<16x32xf32, #tpu.memory_space<vmem>>, vector<16x32xf32>,
    } else {
    }
    return
  }
  func.func @transform_0(%arg0: i32, %arg1: i32, %arg2: i32) -> (i32, i32) {
    %c0_i32 = arith.constant 0 : i32
    return %arg0, %arg2 : i32, i32
  }
  func.func @transform_1(%arg0: i32, %arg1: i32, %arg2: i32) -> (i32, i32) {
    %c0_i32 = arith.constant 0 : i32
    return %arg2, %arg1 : i32, i32
  }
  func.func @transform_2(%arg0: i32, %arg1: i32, %arg2: i32) -> (i32, i32) {
    %c0_i32 = arith.constant 0 : i32
    %c0_i32_0 = arith.constant 0 : i32
    return %c0_i32, %arg1 : i32, i32
  }
  func.func @transform_3(%arg0: i32, %arg1: i32, %arg2: i32) -> (i32, i32) {
    %c0_i32 = arith.constant 0 : i32
    return %arg0, %arg1 : i32, i32
  }
}

</mosaic_0001>

<llo_original>
// kernel: lightconv_model_fwd.30
$region0: #{lightconv_model_fwd.30}
  #allocation0 [shape = 'u32[]', space=smem, size = 0x4, offset = 0x4, fixed_abs, tag = 'smem constant byte address 0x4 - core index']
  #allocation1 [shape = 'u32[144,128]{1,0:T(1,128)}', space=vmem, size = 0x12000, scoped, tag = 'internal scratch']
  %s0 = inlined_call_operand.vmem [shape: f32[2,8,32], index: 0, kind: input, shape index: {}]
  %s1 = inlined_call_operand.vmem [shape: f32[3,32], index: 1, kind: input, shape index: {}]
  %s2 = inlined_call_operand.vmem [shape: f32[2,8,32], index: 2, kind: output, shape index: {}]
  %s3 = sld [smem:[#allocation0]]
  $region41: #{lightconv_model_fwd.30} parent=0
    _
  %s5 = ssub.s32 1, %s3
  %s6 = scalar_select 0, %s5, %s3
  loop: start=0, step=1, limit=4
  $region2: #{lightconv_model_fwd.30} parent=0 // loop_pre_header
    _
  $region3: #{lightconv_model_fwd.30} parent=0 // loop_header
    %s8 = sphi 0, %s12
    %p9 = scmp.ge.s32.totalorder %s8, 4
    %s15 = sphi 0, %s27
    %s16 = sphi 0, %s23
    %s17 = sphi 0, %s15
    %s18 = sphi 0, %s16
    %s19 = sphi 0, %s17
    %s20 = sphi 0, %s18
    %s32 = sphi 0, %s34
    %s35 = sphi 0, %s32
    %s36 = sphi 0, %s35
    %s52 = sphi 0, %s36
    %s58 = sphi 0, %s60
    %s61 = sphi 0, %s58
    %s62 = sphi 0, %s61
    %s78 = sphi 0, %s62
    %s86 = sphi 0, %s88
    %s89 = sphi 0, %s86
    %s90 = sphi 0, %s89
    %s106 = sphi 0, %s90
  $region4: #{lightconv_model_fwd.30} parent=0 // loop_header_branch
    %11 = sbr.rel (%p9) target = $region8
  $region5: #{lightconv_model_fwd.30} parent=0 // loop_body
    %s13 = ssub.s32 %s8, 1
    %s14 = ssub.s32 %s8, 2
    %s21 = sadd.s32 1, %s16
    %p22 = scmp.ge.s32.totalorder %s21, 1
    %s23 = scalar_select %p22, 0, %s21
    %s24 = sadd.s32 1, %s15
    %s25 = scalar_select %p22, %s24, %s15
    %p26 = scmp.ge.s32.totalorder %s25, 2
    %s27 = scalar_select %p26, 0, %s25
    %s28 = ssub.s32 %s15, %s27
    %s29 = ssub.s32 %s16, %s23
    %s30 = sor.u32 %s28, %s29
    %p31 = scmp.eq.s32.totalorder %s30, 0
    %s33 = sadd.s32 %s32, 1
    %s34 = scalar_select %p31, %s32, %s33
    %p37 = pneg %p31
    %p38 = scmp.eq.s32.totalorder %s8, 1
    %p39 = por %p37, %p38
    %p40 = scmp.ne.s32.totalorder %s32, %s35
    %p41 = scmp.eq.s32.totalorder %s8, 0
    %p42 = por %p40, %p41
    %p43 = scmp.ne.s32.totalorder %s32, %s35
    %p44 = scmp.eq.s32.totalorder %s13, 1
    %p45 = por %p43, %p44
    %p46 = scmp.ne.s32.totalorder %s35, %s36
    %p47 = scmp.eq.s32.totalorder %s13, 0
    %p48 = por %p46, %p47
    %p49 = scmp.ne.s32.totalorder %s35, %s36
    %p50 = scmp.eq.s32.totalorder %s14, 1
    %p51 = por %p49, %p50
    %p53 = scmp.ne.s32.totalorder %s36, %s52
    %p54 = scmp.eq.s32.totalorder %s14, 0
    %p55 = por %p53, %p54
    %s56 = ssub.s32 %s16, %s23
    %p57 = scmp.eq.s32.totalorder %s56, 0
    %s59 = sadd.s32 %s58, 1
    %s60 = scalar_select %p57, %s58, %s59
    %p63 = pneg %p57
    %p64 = scmp.eq.s32.totalorder %s8, 1
    %p65 = por %p63, %p64
    %p66 = scmp.ne.s32.totalorder %s58, %s61
    %p67 = scmp.eq.s32.totalorder %s8, 0
    %p68 = por %p66, %p67
    %p69 = scmp.ne.s32.totalorder %s58, %s61
    %p70 = scmp.eq.s32.totalorder %s13, 1
    %p71 = por %p69, %p70
    %p72 = scmp.ne.s32.totalorder %s61, %s62
    %p73 = scmp.eq.s32.totalorder %s13, 0
    %p74 = por %p72, %p73
    %p75 = scmp.ne.s32.totalorder %s61, %s62
    %p76 = scmp.eq.s32.totalorder %s14, 1
    %p77 = por %p75, %p76
    %p79 = scmp.ne.s32.totalorder %s62, %s78
    %p80 = scmp.eq.s32.totalorder %s14, 0
    %p81 = por %p79, %p80
    %s82 = ssub.s32 %s15, %s27
    %s83 = ssub.s32 %s16, %s23
    %s84 = sor.u32 %s82, %s83
    %p85 = scmp.eq.s32.totalorder %s84, 0
    %s87 = sadd.s32 %s86, 1
    %s88 = scalar_select %p85, %s86, %s87
    %p91 = pneg %p85
    %p92 = scmp.eq.s32.totalorder %s8, 1
    %p93 = por %p91, %p92
    %p94 = scmp.ne.s32.totalorder %s86, %s89
    %p95 = scmp.eq.s32.totalorder %s8, 0
    %p96 = por %p94, %p95
    %p97 = scmp.ne.s32.totalorder %s86, %s89
    %p98 = scmp.eq.s32.totalorder %s13, 1
    %p99 = por %p97, %p98
    %p100 = scmp.ne.s32.totalorder %s89, %s90
    %p101 = scmp.eq.s32.totalorder %s13, 0
    %p102 = por %p100, %p101
    %p103 = scmp.ne.s32.totalorder %s89, %s90
    %p104 = scmp.eq.s32.totalorder %s14, 1
    %p105 = por %p103, %p104
    %p107 = scmp.ne.s32.totalorder %s90, %s106
    %p108 = scmp.eq.s32.totalorder %s14, 0
    %p109 = por %p107, %p108
    %p110 = scmp.le.s32.totalorder 1, %s8
    %p111 = scmp.lt.s32.totalorder %s8, 3
    %p112 = pnand %p110, %p111
    %p113 = pneg %p112
    // Predicated region
    $region9: #{lightconv_model_fwd.30} parent=5 // pred_check
      _
    $region10: #{lightconv_model_fwd.30} parent=5 // pred_check_branch
      %115 = sbr.rel (%p112) target = $region12
    $region11: #{lightconv_model_fwd.30} parent=5 // pred_region
      %s116 = ssub.s32 %s8, 1
      // Predicated region
      $region13: #{lightconv_model_fwd.30} parent=11 // pred_check
        %p117 = pneg %p74
      $region14: #{lightconv_model_fwd.30} parent=11 // pred_check_branch
        %119 = sbr.rel (%p117) target = $region16
      $region15: #{lightconv_model_fwd.30} parent=11 // pred_region
        %p120 = scmp.lt.s32.totalorder %s18, 0
        %s121 = scalar_select %p120, %s18, 0
        %s122 = smul.addr %s121, 4
        %s123 = scalar_lea.vmem %s1, %s122
      $region16: #{lightconv_model_fwd.30} parent=11 // pred_fallthru
        _
    $region12: #{lightconv_model_fwd.30} parent=5 // pred_fallthru
      _
    %p124 = scmp.lt.s32.totalorder %s8, 2
    // Predicated region
    $region17: #{lightconv_model_fwd.30} parent=5 // pred_check
      %p125 = pneg %p124
    $region18: #{lightconv_model_fwd.30} parent=5 // pred_check_branch
      %127 = sbr.rel (%p125) target = $region20
    $region19: #{lightconv_model_fwd.30} parent=5 // pred_region
      // Predicated region
      $region21: #{lightconv_model_fwd.30} parent=19 // pred_check
        %p128 = pneg %p42
      $region22: #{lightconv_model_fwd.30} parent=19 // pred_check_branch
        %130 = sbr.rel (%p128) target = $region24
      $region23: #{lightconv_model_fwd.30} parent=19 // pred_region
        %p131 = scmp.lt.s32.totalorder %s15, 1
        %s132 = scalar_select %p131, %s15, 1
        %p133 = scmp.lt.s32.totalorder %s16, 0
        %s134 = scalar_select %p133, %s16, 0
        %s135 = sadd.s32 %s134, %s132
        %s136 = smul.addr %s135, 8
        %s137 = scalar_lea.vmem %s0, %s136
      $region24: #{lightconv_model_fwd.30} parent=19 // pred_fallthru
        _
    $region20: #{lightconv_model_fwd.30} parent=5 // pred_fallthru
      _
    %p138 = scmp.le.s32.totalorder 1, %s8
    %p139 = scmp.lt.s32.totalorder %s8, 3
    %p140 = pnand %p138, %p139
    %p141 = pneg %p140
    // Predicated region
    $region25: #{lightconv_model_fwd.30} parent=5 // pred_check
      _
    $region26: #{lightconv_model_fwd.30} parent=5 // pred_check_branch
      %143 = sbr.rel (%p140) target = $region28
    $region27: #{lightconv_model_fwd.30} parent=5 // pred_region
      %s144 = ssub.s32 %s8, 1
      %p145 = scmp.lt.s32.totalorder %s17, 1
      %s146 = scalar_select %p145, %s17, 1
      %p147 = scmp.lt.s32.totalorder %s18, 0
      %s148 = scalar_select %p147, %s18, 0
      %s149 = sadd.s32 %s148, %s146
      %s150 = smul.addr %s149, 8
      %s151 = scalar_lea.vmem %s0, %s150
      %p152 = pneg %p48
      %p153 = pneg %p45
      %p154 = scmp.lt.s32.totalorder %s18, 0
      %s155 = scalar_select %p154, %s18, 0
      %s156 = smul.addr %s155, 4
      %s157 = scalar_lea.vmem %s1, %s156
      %p158 = pneg %p74
      %p159 = pneg %p71
      %p160 = pneg %p102
      %p161 = pneg %p99
      %p162 = scmp.lt.s32.totalorder %s17, 1
      %s163 = scalar_select %p162, %s17, 1
      %p164 = scmp.lt.s32.totalorder %s18, 0
      %s165 = scalar_select %p164, %s18, 0
      %s166 = sadd.s32 %s165, %s163
      %s167 = smul.addr %s166, 8
      %s168 = scalar_lea.vmem %s2, %s167
      %p169 = scmp.lt.s32.totalorder %s17, 1
      %s170 = scalar_select %p169, %s17, 1
      %p171 = scmp.lt.s32.totalorder %s18, 0
      %s172 = scalar_select %p171, %s18, 0
      %s173 = sadd.s32 %s172, %s170
      %s174 = smul.addr %s173, 8
      %s175 = scalar_lea.vmem %s0, %s174
      %p176 = scmp.lt.s32.totalorder %s18, 0
      %s177 = scalar_select %p176, %s18, 0
      %s178 = smul.addr %s177, 4
      %s179 = scalar_lea.vmem %s1, %s178
      %p180 = scmp.lt.s32.totalorder %s17, 1
      %s181 = scalar_select %p180, %s17, 1
      %p182 = scmp.lt.s32.totalorder %s18, 0
      %s183 = scalar_select %p182, %s18, 0
      %s184 = sadd.s32 %s183, %s181
      %s185 = smul.addr %s184, 8
      %s186 = scalar_lea.vmem %s2, %s185
      %v187 = vld [vmem:[%s175] sm:$0xff]
      %v188 = vld [vmem:[%s179] sm:$0x7]
      %v189 = vlaneseq
      %v190 = vshrl.u32 %v189, 7
      %v191 = vlaneseq
      %v192 = vshrl.u32 %v191, 7
      %v193 = vsub.s32 1, %v192
      %v194 = vrot.slane %v188, %v193
      %v195 = vmul.f32 %v187, %v194
      %v196 = vrot.slane %v187, 7
      %vm197 = vcmp.ge.s32.totalorder %v190, 1
      %v198 = vsel %vm197, %v196, 0.0
      %v199 = vlaneseq
      %v200 = vshrl.u32 %v199, 7
      %v201 = vsub.s32 0, %v200
      %v202 = vrot.slane %v188, %v201
      %v203 = vmul.f32 %v198, %v202
      %v204 = vadd.f32 %v195, %v203
      %v205 = vrot.slane %v187, 1
      %vm206 = vcmp.lt.s32.totalorder %v190, 7
      %v207 = vsel %vm206, %v205, 0.0
      %v208 = vlaneseq
      %v209 = vshrl.u32 %v208, 7
      %v210 = vsub.s32 2, %v209
      %v211 = vrot.slane %v188, %v210
      %v212 = vmul.f32 %v207, %v211
      %v213 = vadd.f32 %v204, %v212
      %vm214 = vcmask 261120
      %215 = vst.msk [vmem:[%s186] sm:$0xff] %vm214, %v213
      %p216 = scmp.lt.s32.totalorder %s17, 1
      %s217 = scalar_select %p216, %s17, 1
      %p218 = scmp.lt.s32.totalorder %s18, 0
      %s219 = scalar_select %p218, %s18, 0
      %s220 = sadd.s32 %s219, %s217
      %s221 = smul.addr %s220, 8
      %s222 = scalar_lea.vmem %s2, %s221
      // Predicated region
      $region29: #{lightconv_model_fwd.30} parent=27 // pred_check
        %p223 = pneg %p99
      $region30: #{lightconv_model_fwd.30} parent=27 // pred_check_branch
        %225 = sbr.rel (%p223) target = $region32
      $region31: #{lightconv_model_fwd.30} parent=27 // pred_region
        _
      $region32: #{lightconv_model_fwd.30} parent=27 // pred_fallthru
        _
    $region28: #{lightconv_model_fwd.30} parent=5 // pred_fallthru
      _
    %p226 = scmp.le.s32.totalorder 2, %s8
    // Predicated region
    $region33: #{lightconv_model_fwd.30} parent=5 // pred_check
      %p227 = pneg %p226
    $region34: #{lightconv_model_fwd.30} parent=5 // pred_check_branch
      %229 = sbr.rel (%p227) target = $region36
    $region35: #{lightconv_model_fwd.30} parent=5 // pred_region
      %s230 = ssub.s32 %s8, 2
      // Predicated region
      $region37: #{lightconv_model_fwd.30} parent=35 // pred_check
        %p231 = pneg %p105
      $region38: #{lightconv_model_fwd.30} parent=35 // pred_check_branch
        %233 = sbr.rel (%p231) target = $region40
      $region39: #{lightconv_model_fwd.30} parent=35 // pred_region
        %p234 = scmp.lt.s32.totalorder %s19, 1
        %s235 = scalar_select %p234, %s19, 1
        %p236 = scmp.lt.s32.totalorder %s20, 0
        %s237 = scalar_select %p236, %s20, 0
        %s238 = sadd.s32 %s237, %s235
        %s239 = smul.addr %s238, 8
        %s240 = scalar_lea.vmem %s2, %s239
      $region40: #{lightconv_model_fwd.30} parent=35 // pred_fallthru
        _
    $region36: #{lightconv_model_fwd.30} parent=5 // pred_fallthru
      _
  $region6: #{lightconv_model_fwd.30} parent=0 // loop_footer
    %s12 = sadd.s32 1, %s8
  $region7: #{lightconv_model_fwd.30} parent=0 // loop_footer_branch
    %7 = sbr.rel target = $region3
  $region8: #{lightconv_model_fwd.30} parent=0 // loop_exit
    _

// kernel: lightconv_model_fwd.32
$region0: #{lightconv_model_fwd.32}
  #allocation0 [shape = 'u32[]', space=smem, size = 0x4, offset = 0x4, fixed_abs, tag = 'smem constant byte address 0x4 - core index']
  #allocation1 [shape = 'u32[144,128]{1,0:T(1,128)}', space=vmem, size = 0x12000, scoped, tag = 'internal scratch']
  %s0 = inlined_call_operand.vmem [shape: f32[16,32], index: 0, kind: input, shape index: {}]
  %s1 = inlined_call_operand.vmem [shape: bf16[32,64], index: 1, kind: input, shape index: {}]
  %s2 = inlined_call_operand.vmem [shape: f32[1,64], index: 2, kind: input, shape index: {}]
  %s3 = inlined_call_operand.vmem [shape: f32[16,64], index: 3, kind: output, shape index: {}]
  %s4 = sld [smem:[#allocation0]]
  $region30: #{lightconv_model_fwd.32} parent=0
    _
  %s6 = ssub.s32 1, %s4
  %s7 = scalar_select 0, %s6, %s4
  // Predicated region
  $region2: #{lightconv_model_fwd.32} parent=0 // pred_check
    _
  $region3: #{lightconv_model_fwd.32} parent=0 // pred_check_branch
    %9 = sbr.rel (0) target = $region5
  $region4: #{lightconv_model_fwd.32} parent=0 // pred_region
    _
  $region5: #{lightconv_model_fwd.32} parent=0 // pred_fallthru
    _
  // Predicated region
  $region6: #{lightconv_model_fwd.32} parent=0 // pred_check
    _
  $region7: #{lightconv_model_fwd.32} parent=0 // pred_check_branch
    %11 = sbr.rel (0) target = $region9
  $region8: #{lightconv_model_fwd.32} parent=0 // pred_region
    _
  $region9: #{lightconv_model_fwd.32} parent=0 // pred_fallthru
    _
  // Predicated region
  $region10: #{lightconv_model_fwd.32} parent=0 // pred_check
    _
  $region11: #{lightconv_model_fwd.32} parent=0 // pred_check_branch
    %13 = sbr.rel (0) target = $region13
  $region12: #{lightconv_model_fwd.32} parent=0 // pred_region
    _
  $region13: #{lightconv_model_fwd.32} parent=0 // pred_fallthru
    _
  %p15 = scmp.eq.s32.totalorder 0, 0
  // Predicated region
  $region14: #{lightconv_model_fwd.32} parent=0 // pred_check
    %p16 = pneg %p15
  $region15: #{lightconv_model_fwd.32} parent=0 // pred_check_branch
    %18 = sbr.rel (%p16) target = $region17
  $region16: #{lightconv_model_fwd.32} parent=0 // pred_region
    %vm19 = vcmask 523264
    %20 = vst.msk [vmem:[%s3] sm:$0xff] %vm19, 0.0
    %21 = vst.msk [vmem:[%s3 + $0x8] sm:$0xff] %vm19, 0.0
  $region17: #{lightconv_model_fwd.32} parent=0 // pred_fallthru
    _
  %v22 = vld [vmem:[%s3] sm:$0xff]
  %v23 = vld [vmem:[%s3 + $0x8] sm:$0xff]
  %v24 = vld [vmem:[%s0] sm:$0xff]
  %v25 = vld [vmem:[%s0 + $0x8] sm:$0xff]
  %v26 = vpack.c.bf16 %v25, %v24
  %v27 = vld [vmem:[%s1] sm:$0xf]
  %v28 = vld [vmem:[%s1 + $0x4] sm:$0xf]
  %v29 = vld [vmem:[%s1 + $0x8] sm:$0xf]
  %v30 = vld [vmem:[%s1 + $0xc] sm:$0xf]
  %v35 = vunpack.c.l.b16 %v27
  %v36 = vunpack.c.l.b16 %v28
  %v37 = vunpack.c.l.b16 %v29
  %v38 = vunpack.c.l.b16 %v30
  %v39 = vpack.c.b16 %v36, %v35
  %v40 = vpack.c.b16 %v38, %v37
  %vm43 = vcmask 261120
  %v45 = vsel %vm43, %v26, 0
  %47 = vmatprep.subr.bf16.mxu0 0
  %48 = vmatpush1.bf16.msra.mxu0 0
  %49 = vmatprep.subr.bf16.mxu0 0
  %50 = vmatpush1.bf16.msra.mxu0 0
  %51 = vmatprep.subr.bf16.mxu0 0
  %52 = vmatpush1.bf16.msra.mxu0 0
  %53 = vmatprep.subr.bf16.mxu0 0
  %54 = vmatpush1.bf16.msra.mxu0 0
  %55 = vmatprep.subr.bf16.mxu0 0
  %56 = vmatpush1.bf16.msra.mxu0 0
  %57 = vmatprep.subr.bf16.mxu0 0
  %58 = vmatpush1.bf16.msra.mxu0 0
  %59 = vmatprep.subr.bf16.mxu0 0
  %60 = vmatpush1.bf16.msra.mxu0 %v40
  %61 = vmatprep.subr.bf16.mxu0 0
  %62 = vmatpush1.bf16.msra.mxu0 %v39
  %63 = vmatprep.subr.bf16.mxu0 0
  %64 = vmatpush2.bf16.msra.mxu0 0
  %65 = vmatprep.subr.bf16.mxu0 0
  %66 = vmatpush2.bf16.msra.mxu0 0
  %67 = vmatprep.subr.bf16.mxu0 0
  %68 = vmatpush2.bf16.msra.mxu0 0
  %69 = vmatprep.subr.bf16.mxu0 0
  %70 = vmatpush2.bf16.msra.mxu0 0
  %71 = vmatprep.subr.bf16.mxu0 0
  %72 = vmatpush2.bf16.msra.mxu0 0
  %73 = vmatprep.subr.bf16.mxu0 0
  %74 = vmatpush2.bf16.msra.mxu0 0
  %75 = vmatprep.subr.bf16.mxu0 0
  %76 = vmatpush2.bf16.msra.mxu0 0
  %77 = vmatprep.subr.bf16.mxu0 0
  %78 = vmatpush2.bf16.msra.mxu0 0
  %79 = vmatprep.mubr.bf16.mxu0 0
  %80 = vmatmul.mubr.bf16.gmra.mxu0 %v45
  %v81 = vpop.f32.mrf.mxu0
  %v82 = vadd.f32 0.0, %v81
  %v83 = vpop.f32.mrf.mxu0
  %v84 = vpop.f32.mrf.mxu0
  %v85 = vadd.f32 0.0, %v84
  %v86 = vpop.f32.mrf.mxu0
  %87 = vdwg.mxu0
  %v88 = vadd.f32 %v22, %v82
  %v89 = vadd.f32 %v23, %v85
  %vm90 = vcmask 523264
  %91 = vst.msk [vmem:[%s3] sm:$0xff] %vm90, %v88
  %92 = vst.msk [vmem:[%s3 + $0x8] sm:$0xff] %vm90, %v89
  // Predicated region
  $region18: #{lightconv_model_fwd.32} parent=0 // pred_check
    %p93 = pneg %p15
  $region19: #{lightconv_model_fwd.32} parent=0 // pred_check_branch
    %95 = sbr.rel (%p93) target = $region21
  $region20: #{lightconv_model_fwd.32} parent=0 // pred_region
    %v96 = vld [vmem:[%s3] sm:$0xff]
    %v97 = vld [vmem:[%s3 + $0x8] sm:$0xff]
    %v98 = vld [vmem:[%s2] sm:$0x1]
    %v100 = vlaneseq
    %v101 = vshrl.u32 %v100, 7
    %v102 = vsub.s32 0, %v101
    %v103 = vrot.slane %v98, %v102
    %v105 = vadd.f32 %v96, %v103
    %v106 = vadd.f32 %v97, %v103
    %v107 = vmax.f32 %v105, 0.0
    %v108 = vmax.f32 %v106, 0.0
    %109 = vst.msk [vmem:[%s3] sm:$0xff] %vm90, %v107
    %110 = vst.msk [vmem:[%s3 + $0x8] sm:$0xff] %vm90, %v108
  $region21: #{lightconv_model_fwd.32} parent=0 // pred_fallthru
    _
  // Predicated region
  $region22: #{lightconv_model_fwd.32} parent=0 // pred_check
    _
  $region23: #{lightconv_model_fwd.32} parent=0 // pred_check_branch
    %112 = sbr.rel (0) target = $region25
  $region24: #{lightconv_model_fwd.32} parent=0 // pred_region
    _
  $region25: #{lightconv_model_fwd.32} parent=0 // pred_fallthru
    _
  // Predicated region
  $region26: #{lightconv_model_fwd.32} parent=0 // pred_check
    _
  $region27: #{lightconv_model_fwd.32} parent=0 // pred_check_branch
    %114 = sbr.rel (0) target = $region29
  $region28: #{lightconv_model_fwd.32} parent=0 // pred_region
    _
  $region29: #{lightconv_model_fwd.32} parent=0 // pred_fallthru
    _

// kernel: lightconv_model_fwd.31
$region0: #{lightconv_model_fwd.31}
  #allocation0 [shape = 'u32[]', space=smem, size = 0x4, offset = 0x4, fixed_abs, tag = 'smem constant byte address 0x4 - core index']
  #allocation1 [shape = 'u32[144,128]{1,0:T(1,128)}', space=vmem, size = 0x12000, scoped, tag = 'internal scratch']
  %s0 = inlined_call_operand.vmem [shape: f32[16,32], index: 0, kind: input, shape index: {}]
  %s1 = inlined_call_operand.vmem [shape: bf16[32,32], index: 1, kind: input, shape index: {}]
  %s2 = inlined_call_operand.vmem [shape: f32[1,32], index: 2, kind: input, shape index: {}]
  %s3 = inlined_call_operand.vmem [shape: f32[16,32], index: 3, kind: input, shape index: {}]
  %s4 = inlined_call_operand.vmem [shape: f32[1,32], index: 4, kind: input, shape index: {}]
  %s5 = inlined_call_operand.vmem [shape: f32[1,32], index: 5, kind: input, shape index: {}]
  %s6 = inlined_call_operand.vmem [shape: f32[16,32], index: 6, kind: output, shape index: {}]
  %s7 = sld [smem:[#allocation0]]
  $region42: #{lightconv_model_fwd.31} parent=0
    _
  %s9 = ssub.s32 1, %s7
  %s10 = scalar_select 0, %s9, %s7
  // Predicated region
  $region2: #{lightconv_model_fwd.31} parent=0 // pred_check
    _
  $region3: #{lightconv_model_fwd.31} parent=0 // pred_check_branch
    %12 = sbr.rel (0) target = $region5
  $region4: #{lightconv_model_fwd.31} parent=0 // pred_region
    _
  $region5: #{lightconv_model_fwd.31} parent=0 // pred_fallthru
    _
  // Predicated region
  $region6: #{lightconv_model_fwd.31} parent=0 // pred_check
    _
  $region7: #{lightconv_model_fwd.31} parent=0 // pred_check_branch
    %14 = sbr.rel (0) target = $region9
  $region8: #{lightconv_model_fwd.31} parent=0 // pred_region
    _
  $region9: #{lightconv_model_fwd.31} parent=0 // pred_fallthru
    _
  // Predicated region
  $region10: #{lightconv_model_fwd.31} parent=0 // pred_check
    _
  $region11: #{lightconv_model_fwd.31} parent=0 // pred_check_branch
    %16 = sbr.rel (0) target = $region13
  $region12: #{lightconv_model_fwd.31} parent=0 // pred_region
    _
  $region13: #{lightconv_model_fwd.31} parent=0 // pred_fallthru
    _
  // Predicated region
  $region14: #{lightconv_model_fwd.31} parent=0 // pred_check
    _
  $region15: #{lightconv_model_fwd.31} parent=0 // pred_check_branch
    %18 = sbr.rel (0) target = $region17
  $region16: #{lightconv_model_fwd.31} parent=0 // pred_region
    _
  $region17: #{lightconv_model_fwd.31} parent=0 // pred_fallthru
    _
  // Predicated region
  $region18: #{lightconv_model_fwd.31} parent=0 // pred_check
    _
  $region19: #{lightconv_model_fwd.31} parent=0 // pred_check_branch
    %20 = sbr.rel (0) target = $region21
  $region20: #{lightconv_model_fwd.31} parent=0 // pred_region
    _
  $region21: #{lightconv_model_fwd.31} parent=0 // pred_fallthru
    _
  // Predicated region
  $region22: #{lightconv_model_fwd.31} parent=0 // pred_check
    _
  $region23: #{lightconv_model_fwd.31} parent=0 // pred_check_branch
    %22 = sbr.rel (0) target = $region25
  $region24: #{lightconv_model_fwd.31} parent=0 // pred_region
    _
  $region25: #{lightconv_model_fwd.31} parent=0 // pred_fallthru
    _
  %p24 = scmp.eq.s32.totalorder 0, 0
  // Predicated region
  $region26: #{lightconv_model_fwd.31} parent=0 // pred_check
    %p25 = pneg %p24
  $region27: #{lightconv_model_fwd.31} parent=0 // pred_check_branch
    %27 = sbr.rel (%p25) target = $region29
  $region28: #{lightconv_model_fwd.31} parent=0 // pred_region
    %vm28 = vcmask 261120
    %29 = vst.msk [vmem:[%s6] sm:$0xff] %vm28, 0.0
    %30 = vst.msk [vmem:[%s6 + $0x8] sm:$0xff] %vm28, 0.0
  $region29: #{lightconv_model_fwd.31} parent=0 // pred_fallthru
    _
  %v31 = vld [vmem:[%s6] sm:$0xff]
  %v32 = vld [vmem:[%s6 + $0x8] sm:$0xff]
  %v33 = vld [vmem:[%s0] sm:$0xff]
  %v34 = vld [vmem:[%s0 + $0x8] sm:$0xff]
  %v35 = vpack.c.bf16 %v34, %v33
  %v36 = vld [vmem:[%s1] sm:$0xf]
  %v37 = vld [vmem:[%s1 + $0x4] sm:$0xf]
  %v38 = vld [vmem:[%s1 + $0x8] sm:$0xf]
  %v39 = vld [vmem:[%s1 + $0xc] sm:$0xf]
  %v44 = vunpack.c.l.b16 %v36
  %v45 = vunpack.c.l.b16 %v37
  %v46 = vunpack.c.l.b16 %v38
  %v47 = vunpack.c.l.b16 %v39
  %v48 = vpack.c.b16 %v45, %v44
  %v49 = vpack.c.b16 %v47, %v46
  %vm52 = vcmask 261120
  %v54 = vsel %vm52, %v35, 0
  %56 = vmatprep.subr.bf16.mxu0 0
  %57 = vmatpush1.bf16.msra.mxu0 0
  %58 = vmatprep.subr.bf16.mxu0 0
  %59 = vmatpush1.bf16.msra.mxu0 0
  %60 = vmatprep.subr.bf16.mxu0 0
  %61 = vmatpush1.bf16.msra.mxu0 0
  %62 = vmatprep.subr.bf16.mxu0 0
  %63 = vmatpush1.bf16.msra.mxu0 0
  %64 = vmatprep.subr.bf16.mxu0 0
  %65 = vmatpush1.bf16.msra.mxu0 0
  %66 = vmatprep.subr.bf16.mxu0 0
  %67 = vmatpush1.bf16.msra.mxu0 0
  %68 = vmatprep.subr.bf16.mxu0 0
  %69 = vmatpush1.bf16.msra.mxu0 %v49
  %70 = vmatprep.subr.bf16.mxu0 0
  %71 = vmatpush1.bf16.msra.mxu0 %v48
  %72 = vmatprep.subr.bf16.mxu0 0
  %73 = vmatpush2.bf16.msra.mxu0 0
  %74 = vmatprep.subr.bf16.mxu0 0
  %75 = vmatpush2.bf16.msra.mxu0 0
  %76 = vmatprep.subr.bf16.mxu0 0
  %77 = vmatpush2.bf16.msra.mxu0 0
  %78 = vmatprep.subr.bf16.mxu0 0
  %79 = vmatpush2.bf16.msra.mxu0 0
  %80 = vmatprep.subr.bf16.mxu0 0
  %81 = vmatpush2.bf16.msra.mxu0 0
  %82 = vmatprep.subr.bf16.mxu0 0
  %83 = vmatpush2.bf16.msra.mxu0 0
  %84 = vmatprep.subr.bf16.mxu0 0
  %85 = vmatpush2.bf16.msra.mxu0 0
  %86 = vmatprep.subr.bf16.mxu0 0
  %87 = vmatpush2.bf16.msra.mxu0 0
  %88 = vmatprep.mubr.bf16.mxu0 0
  %89 = vmatmul.mubr.bf16.gmra.mxu0 %v54
  %v90 = vpop.f32.mrf.mxu0
  %v91 = vadd.f32 0.0, %v90
  %v92 = vpop.f32.mrf.mxu0
  %v93 = vpop.f32.mrf.mxu0
  %v94 = vadd.f32 0.0, %v93
  %v95 = vpop.f32.mrf.mxu0
  %96 = vdwg.mxu0
  %v97 = vadd.f32 %v31, %v91
  %v98 = vadd.f32 %v32, %v94
  %99 = vst.msk [vmem:[%s6] sm:$0xff] %vm52, %v97
  %100 = vst.msk [vmem:[%s6 + $0x8] sm:$0xff] %vm52, %v98
  // Predicated region
  $region30: #{lightconv_model_fwd.31} parent=0 // pred_check
    %p101 = pneg %p24
  $region31: #{lightconv_model_fwd.31} parent=0 // pred_check_branch
    %103 = sbr.rel (%p101) target = $region33
  $region32: #{lightconv_model_fwd.31} parent=0 // pred_region
    %v104 = vld [vmem:[%s6] sm:$0xff]
    %v105 = vld [vmem:[%s6 + $0x8] sm:$0xff]
    %v106 = vld [vmem:[%s2] sm:$0x1]
    %v108 = vlaneseq
    %v109 = vshrl.u32 %v108, 7
    %v110 = vsub.s32 0, %v109
    %v111 = vrot.slane %v106, %v110
    %v113 = vadd.f32 %v104, %v111
    %v114 = vadd.f32 %v105, %v111
    %v115 = vld [vmem:[%s3] sm:$0xff]
    %v116 = vld [vmem:[%s3 + $0x8] sm:$0xff]
    %v117 = vadd.f32 %v113, %v115
    %v118 = vadd.f32 %v114, %v116
    %v119 = vsel %vm52, %v117, 0.0
    %120 = vadd.xlane.f32.xlu0 %v119
    %v121 = vpop.xlane.xlu0 %120
    %v122 = vsel %vm52, %v118, 0.0
    %123 = vadd.xlane.f32.xlu0 %v122
    %v124 = vpop.xlane.xlu0 %123
    %v125 = vrcp.pop 32.0
    %v126 = vmul.f32 %v121, %v125
    %v127 = vmul.f32 %v124, %v125
    %v128 = vsub.f32 %v117, %v126
    %v129 = vsub.f32 %v118, %v127
    %v130 = vmul.f32 %v128, %v128
    %v131 = vmul.f32 %v129, %v129
    %v132 = vsel %vm52, %v130, 0.0
    %133 = vadd.xlane.f32.xlu0 %v132
    %v134 = vpop.xlane.xlu0 %133
    %v135 = vsel %vm52, %v131, 0.0
    %136 = vadd.xlane.f32.xlu0 %v135
    %v137 = vpop.xlane.xlu0 %136
    %v138 = vmul.f32 %v134, %v125
    %v139 = vmul.f32 %v137, %v125
    %v140 = vadd.f32 %v138, 1e-05
    %v141 = vadd.f32 %v139, 1e-05
    %v142 = vrsqrt.pop %v140
    %v143 = vrsqrt.pop %v141
    %v144 = vmul.f32 %v128, %v142
    %v145 = vmul.f32 %v129, %v143
    %v146 = vld [vmem:[%s4] sm:$0x1]
    %v148 = vlaneseq
    %v149 = vshrl.u32 %v148, 7
    %v150 = vsub.s32 0, %v149
    %v151 = vrot.slane %v146, %v150
    %v153 = vmul.f32 %v144, %v151
    %v154 = vmul.f32 %v145, %v151
    %v155 = vld [vmem:[%s5] sm:$0x1]
    %v157 = vlaneseq
    %v158 = vshrl.u32 %v157, 7
    %v159 = vsub.s32 0, %v158
    %v160 = vrot.slane %v155, %v159
    %v162 = vadd.f32 %v153, %v160
    %v163 = vadd.f32 %v154, %v160
    %164 = vst.msk [vmem:[%s6] sm:$0xff] %vm52, %v162
    %165 = vst.msk [vmem:[%s6 + $0x8] sm:$0xff] %vm52, %v163
  $region33: #{lightconv_model_fwd.31} parent=0 // pred_fallthru
    _
  // Predicated region
  $region34: #{lightconv_model_fwd.31} parent=0 // pred_check
    _
  $region35: #{lightconv_model_fwd.31} parent=0 // pred_check_branch
    %167 = sbr.rel (0) target = $region37
  $region36: #{lightconv_model_fwd.31} parent=0 // pred_region
    _
  $region37: #{lightconv_model_fwd.31} parent=0 // pred_fallthru
    _
  // Predicated region
  $region38: #{lightconv_model_fwd.31} parent=0 // pred_check
    _
  $region39: #{lightconv_model_fwd.31} parent=0 // pred_check_branch
    %169 = sbr.rel (0) target = $region41
  $region40: #{lightconv_model_fwd.31} parent=0 // pred_region
    _
  $region41: #{lightconv_model_fwd.31} parent=0 // pred_fallthru
    _

// kernel: lightconv_model_fwd.29
$region0: #{lightconv_model_fwd.29}
  #allocation0 [shape = 'u32[]', space=smem, size = 0x4, offset = 0x4, fixed_abs, tag = 'smem constant byte address 0x4 - core index']
  #allocation1 [shape = 'u32[144,128]{1,0:T(1,128)}', space=vmem, size = 0x12000, scoped, tag = 'internal scratch']
  #allocation2 [shape = 'f32[16,32]{1,0:T(8,128)}', space=vmem, size = 0x2000, scoped, tag = 'scratch operand']
  %s0 = inlined_call_operand.vmem [shape: f32[16,32], index: 0, kind: input, shape index: {}]
  %s1 = inlined_call_operand.vmem [shape: bf16[32,32], index: 1, kind: input, shape index: {}]
  %s2 = inlined_call_operand.vmem [shape: bf16[32,32], index: 2, kind: input, shape index: {}]
  %s3 = inlined_call_operand.vmem [shape: f32[1,32], index: 3, kind: input, shape index: {}]
  %s4 = inlined_call_operand.vmem [shape: f32[1,32], index: 4, kind: input, shape index: {}]
  %s5 = inlined_call_operand.vmem [shape: f32[16,32], index: 5, kind: output, shape index: {}]
  %s6 = sld [smem:[#allocation0]]
  $region38: #{lightconv_model_fwd.29} parent=0
    _
  %s8 = ssub.s32 1, %s6
  %s9 = scalar_select 0, %s8, %s6
  // Predicated region
  $region2: #{lightconv_model_fwd.29} parent=0 // pred_check
    _
  $region3: #{lightconv_model_fwd.29} parent=0 // pred_check_branch
    %11 = sbr.rel (0) target = $region5
  $region4: #{lightconv_model_fwd.29} parent=0 // pred_region
    _
  $region5: #{lightconv_model_fwd.29} parent=0 // pred_fallthru
    _
  // Predicated region
  $region6: #{lightconv_model_fwd.29} parent=0 // pred_check
    _
  $region7: #{lightconv_model_fwd.29} parent=0 // pred_check_branch
    %13 = sbr.rel (0) target = $region9
  $region8: #{lightconv_model_fwd.29} parent=0 // pred_region
    _
  $region9: #{lightconv_model_fwd.29} parent=0 // pred_fallthru
    _
  // Predicated region
  $region10: #{lightconv_model_fwd.29} parent=0 // pred_check
    _
  $region11: #{lightconv_model_fwd.29} parent=0 // pred_check_branch
    %15 = sbr.rel (0) target = $region13
  $region12: #{lightconv_model_fwd.29} parent=0 // pred_region
    _
  $region13: #{lightconv_model_fwd.29} parent=0 // pred_fallthru
    _
  // Predicated region
  $region14: #{lightconv_model_fwd.29} parent=0 // pred_check
    _
  $region15: #{lightconv_model_fwd.29} parent=0 // pred_check_branch
    %17 = sbr.rel (0) target = $region17
  $region16: #{lightconv_model_fwd.29} parent=0 // pred_region
    _
  $region17: #{lightconv_model_fwd.29} parent=0 // pred_fallthru
    _
  // Predicated region
  $region18: #{lightconv_model_fwd.29} parent=0 // pred_check
    _
  $region19: #{lightconv_model_fwd.29} parent=0 // pred_check_branch
    %19 = sbr.rel (0) target = $region21
  $region20: #{lightconv_model_fwd.29} parent=0 // pred_region
    _
  $region21: #{lightconv_model_fwd.29} parent=0 // pred_fallthru
    _
  %p21 = scmp.eq.s32.totalorder 0, 0
  // Predicated region
  $region22: #{lightconv_model_fwd.29} parent=0 // pred_check
    %p22 = pneg %p21
  $region23: #{lightconv_model_fwd.29} parent=0 // pred_check_branch
    %24 = sbr.rel (%p22) target = $region25
  $region24: #{lightconv_model_fwd.29} parent=0 // pred_region
    %vm25 = vcmask 261120
    %26 = vst.msk [vmem:[%s5] sm:$0xff] %vm25, 0.0
    %27 = vst.msk [vmem:[%s5 + $0x8] sm:$0xff] %vm25, 0.0
    %28 = vst.msk [vmem:[#allocation2] sm:$0xff] %vm25, 0.0
    %29 = vst.msk [vmem:[#allocation2 + $0x8] sm:$0xff] %vm25, 0.0
  $region25: #{lightconv_model_fwd.29} parent=0 // pred_fallthru
    _
  %v30 = vld [vmem:[%s0] sm:$0xff]
  %v31 = vld [vmem:[%s0 + $0x8] sm:$0xff]
  %v32 = vpack.c.bf16 %v31, %v30
  %v33 = vld [vmem:[%s5] sm:$0xff]
  %v34 = vld [vmem:[%s5 + $0x8] sm:$0xff]
  %v35 = vld [vmem:[%s1] sm:$0xf]
  %v36 = vld [vmem:[%s1 + $0x4] sm:$0xf]
  %v37 = vld [vmem:[%s1 + $0x8] sm:$0xf]
  %v38 = vld [vmem:[%s1 + $0xc] sm:$0xf]
  %v43 = vunpack.c.l.b16 %v35
  %v44 = vunpack.c.l.b16 %v36
  %v45 = vunpack.c.l.b16 %v37
  %v46 = vunpack.c.l.b16 %v38
  %v47 = vpack.c.b16 %v44, %v43
  %v48 = vpack.c.b16 %v46, %v45
  %vm51 = vcmask 261120
  %v53 = vsel %vm51, %v32, 0
  %55 = vmatprep.subr.bf16.mxu0 0
  %56 = vmatpush1.bf16.msra.mxu0 0
  %57 = vmatprep.subr.bf16.mxu0 0
  %58 = vmatpush1.bf16.msra.mxu0 0
  %59 = vmatprep.subr.bf16.mxu0 0
  %60 = vmatpush1.bf16.msra.mxu0 0
  %61 = vmatprep.subr.bf16.mxu0 0
  %62 = vmatpush1.bf16.msra.mxu0 0
  %63 = vmatprep.subr.bf16.mxu0 0
  %64 = vmatpush1.bf16.msra.mxu0 0
  %65 = vmatprep.subr.bf16.mxu0 0
  %66 = vmatpush1.bf16.msra.mxu0 0
  %67 = vmatprep.subr.bf16.mxu0 0
  %68 = vmatpush1.bf16.msra.mxu0 %v48
  %69 = vmatprep.subr.bf16.mxu0 0
  %70 = vmatpush1.bf16.msra.mxu0 %v47
  %71 = vmatprep.subr.bf16.mxu0 0
  %72 = vmatpush2.bf16.msra.mxu0 0
  %73 = vmatprep.subr.bf16.mxu0 0
  %74 = vmatpush2.bf16.msra.mxu0 0
  %75 = vmatprep.subr.bf16.mxu0 0
  %76 = vmatpush2.bf16.msra.mxu0 0
  %77 = vmatprep.subr.bf16.mxu0 0
  %78 = vmatpush2.bf16.msra.mxu0 0
  %79 = vmatprep.subr.bf16.mxu0 0
  %80 = vmatpush2.bf16.msra.mxu0 0
  %81 = vmatprep.subr.bf16.mxu0 0
  %82 = vmatpush2.bf16.msra.mxu0 0
  %83 = vmatprep.subr.bf16.mxu0 0
  %84 = vmatpush2.bf16.msra.mxu0 0
  %85 = vmatprep.subr.bf16.mxu0 0
  %86 = vmatpush2.bf16.msra.mxu0 0
  %87 = vmatprep.mubr.bf16.mxu0 0
  %88 = vmatmul.mubr.bf16.gmra.mxu0 %v53
  %v89 = vpop.f32.mrf.mxu0
  %v90 = vadd.f32 0.0, %v89
  %v91 = vpop.f32.mrf.mxu0
  %v92 = vpop.f32.mrf.mxu0
  %v93 = vadd.f32 0.0, %v92
  %v94 = vpop.f32.mrf.mxu0
  %95 = vdwg.mxu0
  %v96 = vadd.f32 %v33, %v90
  %v97 = vadd.f32 %v34, %v93
  %98 = vst.msk [vmem:[%s5] sm:$0xff] %vm51, %v96
  %99 = vst.msk [vmem:[%s5 + $0x8] sm:$0xff] %vm51, %v97
  %v100 = vld [vmem:[#allocation2] sm:$0xff]
  %v101 = vld [vmem:[#allocation2 + $0x8] sm:$0xff]
  %v102 = vld [vmem:[%s2] sm:$0xf]
  %v103 = vld [vmem:[%s2 + $0x4] sm:$0xf]
  %v104 = vld [vmem:[%s2 + $0x8] sm:$0xf]
  %v105 = vld [vmem:[%s2 + $0xc] sm:$0xf]
  %v110 = vunpack.c.l.b16 %v102
  %v111 = vunpack.c.l.b16 %v103
  %v112 = vunpack.c.l.b16 %v104
  %v113 = vunpack.c.l.b16 %v105
  %v114 = vpack.c.b16 %v111, %v110
  %v115 = vpack.c.b16 %v113, %v112
  %118 = vmatprep.subr.bf16.mxu0 0
  %119 = vmatpush1.bf16.msra.mxu0 0
  %120 = vmatprep.subr.bf16.mxu0 0
  %121 = vmatpush1.bf16.msra.mxu0 0
  %122 = vmatprep.subr.bf16.mxu0 0
  %123 = vmatpush1.bf16.msra.mxu0 0
  %124 = vmatprep.subr.bf16.mxu0 0
  %125 = vmatpush1.bf16.msra.mxu0 0
  %126 = vmatprep.subr.bf16.mxu0 0
  %127 = vmatpush1.bf16.msra.mxu0 0
  %128 = vmatprep.subr.bf16.mxu0 0
  %129 = vmatpush1.bf16.msra.mxu0 0
  %130 = vmatprep.subr.bf16.mxu0 0
  %131 = vmatpush1.bf16.msra.mxu0 %v115
  %132 = vmatprep.subr.bf16.mxu0 0
  %133 = vmatpush1.bf16.msra.mxu0 %v114
  %134 = vmatprep.subr.bf16.mxu0 0
  %135 = vmatpush2.bf16.msra.mxu0 0
  %136 = vmatprep.subr.bf16.mxu0 0
  %137 = vmatpush2.bf16.msra.mxu0 0
  %138 = vmatprep.subr.bf16.mxu0 0
  %139 = vmatpush2.bf16.msra.mxu0 0
  %140 = vmatprep.subr.bf16.mxu0 0
  %141 = vmatpush2.bf16.msra.mxu0 0
  %142 = vmatprep.subr.bf16.mxu0 0
  %143 = vmatpush2.bf16.msra.mxu0 0
  %144 = vmatprep.subr.bf16.mxu0 0
  %145 = vmatpush2.bf16.msra.mxu0 0
  %146 = vmatprep.subr.bf16.mxu0 0
  %147 = vmatpush2.bf16.msra.mxu0 0
  %148 = vmatprep.subr.bf16.mxu0 0
  %149 = vmatpush2.bf16.msra.mxu0 0
  %150 = vmatprep.mubr.bf16.mxu0 0
  %151 = vmatmul.mubr.bf16.gmra.mxu0 %v53
  %v152 = vpop.f32.mrf.mxu0
  %v153 = vadd.f32 0.0, %v152
  %v154 = vpop.f32.mrf.mxu0
  %v155 = vpop.f32.mrf.mxu0
  %v156 = vadd.f32 0.0, %v155
  %v157 = vpop.f32.mrf.mxu0
  %158 = vdwg.mxu0
  %v159 = vadd.f32 %v100, %v153
  %v160 = vadd.f32 %v101, %v156
  %161 = vst.msk [vmem:[#allocation2] sm:$0xff] %vm51, %v159
  %162 = vst.msk [vmem:[#allocation2 + $0x8] sm:$0xff] %vm51, %v160
  // Predicated region
  $region26: #{lightconv_model_fwd.29} parent=0 // pred_check
    %p163 = pneg %p21
  $region27: #{lightconv_model_fwd.29} parent=0 // pred_check_branch
    %165 = sbr.rel (%p163) target = $region29
  $region28: #{lightconv_model_fwd.29} parent=0 // pred_region
    %v166 = vld [vmem:[%s5] sm:$0xff]
    %v167 = vld [vmem:[%s5 + $0x8] sm:$0xff]
    %v168 = vld [vmem:[%s3] sm:$0x1]
    %v170 = vlaneseq
    %v171 = vshrl.u32 %v170, 7
    %v172 = vsub.s32 0, %v171
    %v173 = vrot.slane %v168, %v172
    %v175 = vadd.f32 %v166, %v173
    %v176 = vadd.f32 %v167, %v173
    %v177 = vld [vmem:[#allocation2] sm:$0xff]
    %v178 = vld [vmem:[#allocation2 + $0x8] sm:$0xff]
    %v179 = vld [vmem:[%s4] sm:$0x1]
    %v181 = vlaneseq
    %v182 = vshrl.u32 %v181, 7
    %v183 = vsub.s32 0, %v182
    %v184 = vrot.slane %v179, %v183
    %v186 = vadd.f32 %v177, %v184
    %v187 = vadd.f32 %v178, %v184
    %v188 = vxor.u32 %v186, 2147483648
    %v189 = vxor.u32 %v187, 2147483648
    %v190 = vmul.f32 %v188, 1.442695
    %v191 = vpow.pop %v190
    %v192 = vmul.f32 %v189, 1.442695
    %v193 = vpow.pop %v192
    %v194 = vadd.f32 %v191, 1.0
    %v195 = vadd.f32 %v193, 1.0
    %v196 = vrcp.pop %v194
    %v197 = vmul.f32 1.0, %v196
    %v198 = vrcp.pop %v195
    %v199 = vmul.f32 1.0, %v198
    %v200 = vmul.f32 %v175, %v197
    %v201 = vmul.f32 %v176, %v199
    %202 = vst.msk [vmem:[%s5] sm:$0xff] %vm51, %v200
    %203 = vst.msk [vmem:[%s5 + $0x8] sm:$0xff] %vm51, %v201
  $region29: #{lightconv_model_fwd.29} parent=0 // pred_fallthru
    _
  // Predicated region
  $region30: #{lightconv_model_fwd.29} parent=0 // pred_check
    _
  $region31: #{lightconv_model_fwd.29} parent=0 // pred_check_branch
    %205 = sbr.rel (0) target = $region33
  $region32: #{lightconv_model_fwd.29} parent=0 // pred_region
    _
  $region33: #{lightconv_model_fwd.29} parent=0 // pred_fallthru
    _
  // Predicated region
  $region34: #{lightconv_model_fwd.29} parent=0 // pred_check
    _
  $region35: #{lightconv_model_fwd.29} parent=0 // pred_check_branch
    %207 = sbr.rel (0) target = $region37
  $region36: #{lightconv_model_fwd.29} parent=0 // pred_region
    _
  $region37: #{lightconv_model_fwd.29} parent=0 // pred_fallthru
    _

// kernel: lightconv_model_fwd.33
$region0: #{lightconv_model_fwd.33}
  #allocation0 [shape = 'u32[]', space=smem, size = 0x4, offset = 0x4, fixed_abs, tag = 'smem constant byte address 0x4 - core index']
  #allocation1 [shape = 'u32[144,128]{1,0:T(1,128)}', space=vmem, size = 0x12000, scoped, tag = 'internal scratch']
  %s0 = inlined_call_operand.vmem [shape: f32[16,64], index: 0, kind: input, shape index: {}]
  %s1 = inlined_call_operand.vmem [shape: bf16[64,32], index: 1, kind: input, shape index: {}]
  %s2 = inlined_call_operand.vmem [shape: f32[1,32], index: 2, kind: input, shape index: {}]
  %s3 = inlined_call_operand.vmem [shape: f32[16,32], index: 3, kind: input, shape index: {}]
  %s4 = inlined_call_operand.vmem [shape: f32[1,32], index: 4, kind: input, shape index: {}]
  %s5 = inlined_call_operand.vmem [shape: f32[1,32], index: 5, kind: input, shape index: {}]
  %s6 = inlined_call_operand.vmem [shape: f32[16,32], index: 6, kind: output, shape index: {}]
  %s7 = sld [smem:[#allocation0]]
  $region42: #{lightconv_model_fwd.33} parent=0
    _
  %s9 = ssub.s32 1, %s7
  %s10 = scalar_select 0, %s9, %s7
  // Predicated region
  $region2: #{lightconv_model_fwd.33} parent=0 // pred_check
    _
  $region3: #{lightconv_model_fwd.33} parent=0 // pred_check_branch
    %12 = sbr.rel (0) target = $region5
  $region4: #{lightconv_model_fwd.33} parent=0 // pred_region
    _
  $region5: #{lightconv_model_fwd.33} parent=0 // pred_fallthru
    _
  // Predicated region
  $region6: #{lightconv_model_fwd.33} parent=0 // pred_check
    _
  $region7: #{lightconv_model_fwd.33} parent=0 // pred_check_branch
    %14 = sbr.rel (0) target = $region9
  $region8: #{lightconv_model_fwd.33} parent=0 // pred_region
    _
  $region9: #{lightconv_model_fwd.33} parent=0 // pred_fallthru
    _
  // Predicated region
  $region10: #{lightconv_model_fwd.33} parent=0 // pred_check
    _
  $region11: #{lightconv_model_fwd.33} parent=0 // pred_check_branch
    %16 = sbr.rel (0) target = $region13
  $region12: #{lightconv_model_fwd.33} parent=0 // pred_region
    _
  $region13: #{lightconv_model_fwd.33} parent=0 // pred_fallthru
    _
  // Predicated region
  $region14: #{lightconv_model_fwd.33} parent=0 // pred_check
    _
  $region15: #{lightconv_model_fwd.33} parent=0 // pred_check_branch
    %18 = sbr.rel (0) target = $region17
  $region16: #{lightconv_model_fwd.33} parent=0 // pred_region
    _
  $region17: #{lightconv_model_fwd.33} parent=0 // pred_fallthru
    _
  // Predicated region
  $region18: #{lightconv_model_fwd.33} parent=0 // pred_check
    _
  $region19: #{lightconv_model_fwd.33} parent=0 // pred_check_branch
    %20 = sbr.rel (0) target = $region21
  $region20: #{lightconv_model_fwd.33} parent=0 // pred_region
    _
  $region21: #{lightconv_model_fwd.33} parent=0 // pred_fallthru
    _
  // Predicated region
  $region22: #{lightconv_model_fwd.33} parent=0 // pred_check
    _
  $region23: #{lightconv_model_fwd.33} parent=0 // pred_check_branch
    %22 = sbr.rel (0) target = $region25
  $region24: #{lightconv_model_fwd.33} parent=0 // pred_region
    _
  $region25: #{lightconv_model_fwd.33} parent=0 // pred_fallthru
    _
  %p24 = scmp.eq.s32.totalorder 0, 0
  // Predicated region
  $region26: #{lightconv_model_fwd.33} parent=0 // pred_check
    %p25 = pneg %p24
  $region27: #{lightconv_model_fwd.33} parent=0 // pred_check_branch
    %27 = sbr.rel (%p25) target = $region29
  $region28: #{lightconv_model_fwd.33} parent=0 // pred_region
    %vm28 = vcmask 261120
    %29 = vst.msk [vmem:[%s6] sm:$0xff] %vm28, 0.0
    %30 = vst.msk [vmem:[%s6 + $0x8] sm:$0xff] %vm28, 0.0
  $region29: #{lightconv_model_fwd.33} parent=0 // pred_fallthru
    _
  %v31 = vld [vmem:[%s6] sm:$0xff]
  %v32 = vld [vmem:[%s6 + $0x8] sm:$0xff]
  %v33 = vld [vmem:[%s0] sm:$0xff]
  %v34 = vld [vmem:[%s0 + $0x8] sm:$0xff]
  %v35 = vpack.c.bf16 %v34, %v33
  %v36 = vld [vmem:[%s1] sm:$0xf]
  %v37 = vld [vmem:[%s1 + $0x4] sm:$0xf]
  %v38 = vld [vmem:[%s1 + $0x8] sm:$0xf]
  %v39 = vld [vmem:[%s1 + $0xc] sm:$0xf]
  %v40 = vld [vmem:[%s1 + $0x10] sm:$0xf]
  %v41 = vld [vmem:[%s1 + $0x14] sm:$0xf]
  %v42 = vld [vmem:[%s1 + $0x18] sm:$0xf]
  %v43 = vld [vmem:[%s1 + $0x1c] sm:$0xf]
  %v52 = vunpack.c.l.b16 %v36
  %v53 = vunpack.c.l.b16 %v37
  %v54 = vunpack.c.l.b16 %v38
  %v55 = vunpack.c.l.b16 %v39
  %v56 = vunpack.c.l.b16 %v40
  %v57 = vunpack.c.l.b16 %v41
  %v58 = vunpack.c.l.b16 %v42
  %v59 = vunpack.c.l.b16 %v43
  %v60 = vpack.c.b16 %v53, %v52
  %v61 = vpack.c.b16 %v55, %v54
  %v62 = vpack.c.b16 %v57, %v56
  %v63 = vpack.c.b16 %v59, %v58
  %vm68 = vcmask 523264
  %v70 = vsel %vm68, %v35, 0
  %72 = vmatprep.subr.bf16.mxu0 0
  %73 = vmatpush1.bf16.msra.mxu0 0
  %74 = vmatprep.subr.bf16.mxu0 0
  %75 = vmatpush1.bf16.msra.mxu0 0
  %76 = vmatprep.subr.bf16.mxu0 0
  %77 = vmatpush1.bf16.msra.mxu0 0
  %78 = vmatprep.subr.bf16.mxu0 0
  %79 = vmatpush1.bf16.msra.mxu0 0
  %80 = vmatprep.subr.bf16.mxu0 0
  %81 = vmatpush1.bf16.msra.mxu0 %v63
  %82 = vmatprep.subr.bf16.mxu0 0
  %83 = vmatpush1.bf16.msra.mxu0 %v62
  %84 = vmatprep.subr.bf16.mxu0 0
  %85 = vmatpush1.bf16.msra.mxu0 %v61
  %86 = vmatprep.subr.bf16.mxu0 0
  %87 = vmatpush1.bf16.msra.mxu0 %v60
  %88 = vmatprep.subr.bf16.mxu0 0
  %89 = vmatpush2.bf16.msra.mxu0 0
  %90 = vmatprep.subr.bf16.mxu0 0
  %91 = vmatpush2.bf16.msra.mxu0 0
  %92 = vmatprep.subr.bf16.mxu0 0
  %93 = vmatpush2.bf16.msra.mxu0 0
  %94 = vmatprep.subr.bf16.mxu0 0
  %95 = vmatpush2.bf16.msra.mxu0 0
  %96 = vmatprep.subr.bf16.mxu0 0
  %97 = vmatpush2.bf16.msra.mxu0 0
  %98 = vmatprep.subr.bf16.mxu0 0
  %99 = vmatpush2.bf16.msra.mxu0 0
  %100 = vmatprep.subr.bf16.mxu0 0
  %101 = vmatpush2.bf16.msra.mxu0 0
  %102 = vmatprep.subr.bf16.mxu0 0
  %103 = vmatpush2.bf16.msra.mxu0 0
  %104 = vmatprep.mubr.bf16.mxu0 0
  %105 = vmatmul.mubr.bf16.gmra.mxu0 %v70
  %v106 = vpop.f32.mrf.mxu0
  %v107 = vadd.f32 0.0, %v106
  %v108 = vpop.f32.mrf.mxu0
  %v109 = vpop.f32.mrf.mxu0
  %v110 = vadd.f32 0.0, %v109
  %v111 = vpop.f32.mrf.mxu0
  %112 = vdwg.mxu0
  %v113 = vadd.f32 %v31, %v107
  %v114 = vadd.f32 %v32, %v110
  %vm115 = vcmask 261120
  %116 = vst.msk [vmem:[%s6] sm:$0xff] %vm115, %v113
  %117 = vst.msk [vmem:[%s6 + $0x8] sm:$0xff] %vm115, %v114
  // Predicated region
  $region30: #{lightconv_model_fwd.33} parent=0 // pred_check
    %p118 = pneg %p24
  $region31: #{lightconv_model_fwd.33} parent=0 // pred_check_branch
    %120 = sbr.rel (%p118) target = $region33
  $region32: #{lightconv_model_fwd.33} parent=0 // pred_region
    %v121 = vld [vmem:[%s6] sm:$0xff]
    %v122 = vld [vmem:[%s6 + $0x8] sm:$0xff]
    %v123 = vld [vmem:[%s2] sm:$0x1]
    %v125 = vlaneseq
    %v126 = vshrl.u32 %v125, 7
    %v127 = vsub.s32 0, %v126
    %v128 = vrot.slane %v123, %v127
    %v130 = vadd.f32 %v121, %v128
    %v131 = vadd.f32 %v122, %v128
    %v132 = vld [vmem:[%s3] sm:$0xff]
    %v133 = vld [vmem:[%s3 + $0x8] sm:$0xff]
    %v134 = vadd.f32 %v130, %v132
    %v135 = vadd.f32 %v131, %v133
    %v136 = vsel %vm115, %v134, 0.0
    %137 = vadd.xlane.f32.xlu0 %v136
    %v138 = vpop.xlane.xlu0 %137
    %v139 = vsel %vm115, %v135, 0.0
    %140 = vadd.xlane.f32.xlu0 %v139
    %v141 = vpop.xlane.xlu0 %140
    %v142 = vrcp.pop 32.0
    %v143 = vmul.f32 %v138, %v142
    %v144 = vmul.f32 %v141, %v142
    %v145 = vsub.f32 %v134, %v143
    %v146 = vsub.f32 %v135, %v144
    %v147 = vmul.f32 %v145, %v145
    %v148 = vmul.f32 %v146, %v146
    %v149 = vsel %vm115, %v147, 0.0
    %150 = vadd.xlane.f32.xlu0 %v149
    %v151 = vpop.xlane.xlu0 %150
    %v152 = vsel %vm115, %v148, 0.0
    %153 = vadd.xlane.f32.xlu0 %v152
    %v154 = vpop.xlane.xlu0 %153
    %v155 = vmul.f32 %v151, %v142
    %v156 = vmul.f32 %v154, %v142
    %v157 = vadd.f32 %v155, 1e-05
    %v158 = vadd.f32 %v156, 1e-05
    %v159 = vrsqrt.pop %v157
    %v160 = vrsqrt.pop %v158
    %v161 = vmul.f32 %v145, %v159
    %v162 = vmul.f32 %v146, %v160
    %v163 = vld [vmem:[%s4] sm:$0x1]
    %v165 = vlaneseq
    %v166 = vshrl.u32 %v165, 7
    %v167 = vsub.s32 0, %v166
    %v168 = vrot.slane %v163, %v167
    %v170 = vmul.f32 %v161, %v168
    %v171 = vmul.f32 %v162, %v168
    %v172 = vld [vmem:[%s5] sm:$0x1]
    %v174 = vlaneseq
    %v175 = vshrl.u32 %v174, 7
    %v176 = vsub.s32 0, %v175
    %v177 = vrot.slane %v172, %v176
    %v179 = vadd.f32 %v170, %v177
    %v180 = vadd.f32 %v171, %v177
    %181 = vst.msk [vmem:[%s6] sm:$0xff] %vm115, %v179
    %182 = vst.msk [vmem:[%s6 + $0x8] sm:$0xff] %vm115, %v180
  $region33: #{lightconv_model_fwd.33} parent=0 // pred_fallthru
    _
  // Predicated region
  $region34: #{lightconv_model_fwd.33} parent=0 // pred_check
    _
  $region35: #{lightconv_model_fwd.33} parent=0 // pred_check_branch
    %184 = sbr.rel (0) target = $region37
  $region36: #{lightconv_model_fwd.33} parent=0 // pred_region
    _
  $region37: #{lightconv_model_fwd.33} parent=0 // pred_fallthru
    _
  // Predicated region
  $region38: #{lightconv_model_fwd.33} parent=0 // pred_check
    _
  $region39: #{lightconv_model_fwd.33} parent=0 // pred_check_branch
    %186 = sbr.rel (0) target = $region41
  $region40: #{lightconv_model_fwd.33} parent=0 // pred_region
    _
  $region41: #{lightconv_model_fwd.33} parent=0 // pred_fallthru
    _

// kernel: lightconv_model_fwd.43
$region0: #{lightconv_model_fwd.43}
  #allocation0 [shape = 'u32[]', space=smem, size = 0x4, offset = 0x4, fixed_abs, tag = 'smem constant byte address 0x4 - core index']
  #allocation1 [shape = 'u32[144,128]{1,0:T(1,128)}', space=vmem, size = 0x12000, scoped, tag = 'internal scratch']
  %s0 = inlined_call_operand.vmem [shape: f32[16,32], index: 0, kind: input, shape index: {}]
  %s1 = inlined_call_operand.vmem [shape: bf16[32,64], index: 1, kind: input, shape index: {}]
  %s2 = inlined_call_operand.vmem [shape: f32[1,64], index: 2, kind: input, shape index: {}]
  %s3 = inlined_call_operand.vmem [shape: f32[16,64], index: 3, kind: output, shape index: {}]
  %s4 = sld [smem:[#allocation0]]
  $region30: #{lightconv_model_fwd.43} parent=0
    _
  %s6 = ssub.s32 1, %s4
  %s7 = scalar_select 0, %s6, %s4
  // Predicated region
  $region2: #{lightconv_model_fwd.43} parent=0 // pred_check
    _
  $region3: #{lightconv_model_fwd.43} parent=0 // pred_check_branch
    %9 = sbr.rel (0) target = $region5
  $region4: #{lightconv_model_fwd.43} parent=0 // pred_region
    _
  $region5: #{lightconv_model_fwd.43} parent=0 // pred_fallthru
    _
  // Predicated region
  $region6: #{lightconv_model_fwd.43} parent=0 // pred_check
    _
  $region7: #{lightconv_model_fwd.43} parent=0 // pred_check_branch
    %11 = sbr.rel (0) target = $region9
  $region8: #{lightconv_model_fwd.43} parent=0 // pred_region
    _
  $region9: #{lightconv_model_fwd.43} parent=0 // pred_fallthru
    _
  // Predicated region
  $region10: #{lightconv_model_fwd.43} parent=0 // pred_check
    _
  $region11: #{lightconv_model_fwd.43} parent=0 // pred_check_branch
    %13 = sbr.rel (0) target = $region13
  $region12: #{lightconv_model_fwd.43} parent=0 // pred_region
    _
  $region13: #{lightconv_model_fwd.43} parent=0 // pred_fallthru
    _
  %p15 = scmp.eq.s32.totalorder 0, 0
  // Predicated region
  $region14: #{lightconv_model_fwd.43} parent=0 // pred_check
    %p16 = pneg %p15
  $region15: #{lightconv_model_fwd.43} parent=0 // pred_check_branch
    %18 = sbr.rel (%p16) target = $region17
  $region16: #{lightconv_model_fwd.43} parent=0 // pred_region
    %vm19 = vcmask 523264
    %20 = vst.msk [vmem:[%s3] sm:$0xff] %vm19, 0.0
    %21 = vst.msk [vmem:[%s3 + $0x8] sm:$0xff] %vm19, 0.0
  $region17: #{lightconv_model_fwd.43} parent=0 // pred_fallthru
    _
  %v22 = vld [vmem:[%s3] sm:$0xff]
  %v23 = vld [vmem:[%s3 + $0x8] sm:$0xff]
  %v24 = vld [vmem:[%s0] sm:$0xff]
  %v25 = vld [vmem:[%s0 + $0x8] sm:$0xff]
  %v26 = vpack.c.bf16 %v25, %v24
  %v27 = vld [vmem:[%s1] sm:$0xf]
  %v28 = vld [vmem:[%s1 + $0x4] sm:$0xf]
  %v29 = vld [vmem:[%s1 + $0x8] sm:$0xf]
  %v30 = vld [vmem:[%s1 + $0xc] sm:$0xf]
  %v35 = vunpack.c.l.b16 %v27
  %v36 = vunpack.c.l.b16 %v28
  %v37 = vunpack.c.l.b16 %v29
  %v38 = vunpack.c.l.b16 %v30
  %v39 = vpack.c.b16 %v36, %v35
  %v40 = vpack.c.b16 %v38, %v37
  %vm43 = vcmask 261120
  %v45 = vsel %vm43, %v26, 0
  %47 = vmatprep.subr.bf16.mxu0 0
  %48 = vmatpush1.bf16.msra.mxu0 0
  %49 = vmatprep.subr.bf16.mxu0 0
  %50 = vmatpush1.bf16.msra.mxu0 0
  %51 = vmatprep.subr.bf16.mxu0 0
  %52 = vmatpush1.bf16.msra.mxu0 0
  %53 = vmatprep.subr.bf16.mxu0 0
  %54 = vmatpush1.bf16.msra.mxu0 0
  %55 = vmatprep.subr.bf16.mxu0 0
  %56 = vmatpush1.bf16.msra.mxu0 0
  %57 = vmatprep.subr.bf16.mxu0 0
  %58 = vmatpush1.bf16.msra.mxu0 0
  %59 = vmatprep.subr.bf16.mxu0 0
  %60 = vmatpush1.bf16.msra.mxu0 %v40
  %61 = vmatprep.subr.bf16.mxu0 0
  %62 = vmatpush1.bf16.msra.mxu0 %v39
  %63 = vmatprep.subr.bf16.mxu0 0
  %64 = vmatpush2.bf16.msra.mxu0 0
  %65 = vmatprep.subr.bf16.mxu0 0
  %66 = vmatpush2.bf16.msra.mxu0 0
  %67 = vmatprep.subr.bf16.mxu0 0
  %68 = vmatpush2.bf16.msra.mxu0 0
  %69 = vmatprep.subr.bf16.mxu0 0
  %70 = vmatpush2.bf16.msra.mxu0 0
  %71 = vmatprep.subr.bf16.mxu0 0
  %72 = vmatpush2.bf16.msra.mxu0 0
  %73 = vmatprep.subr.bf16.mxu0 0
  %74 = vmatpush2.bf16.msra.mxu0 0
  %75 = vmatprep.subr.bf16.mxu0 0
  %76 = vmatpush2.bf16.msra.mxu0 0
  %77 = vmatprep.subr.bf16.mxu0 0
  %78 = vmatpush2.bf16.msra.mxu0 0
  %79 = vmatprep.mubr.bf16.mxu0 0
  %80 = vmatmul.mubr.bf16.gmra.mxu0 %v45
  %v81 = vpop.f32.mrf.mxu0
  %v82 = vadd.f32 0.0, %v81
  %v83 = vpop.f32.mrf.mxu0
  %v84 = vpop.f32.mrf.mxu0
  %v85 = vadd.f32 0.0, %v84
  %v86 = vpop.f32.mrf.mxu0
  %87 = vdwg.mxu0
  %v88 = vadd.f32 %v22, %v82
  %v89 = vadd.f32 %v23, %v85
  %vm90 = vcmask 523264
  %91 = vst.msk [vmem:[%s3] sm:$0xff] %vm90, %v88
  %92 = vst.msk [vmem:[%s3 + $0x8] sm:$0xff] %vm90, %v89
  // Predicated region
  $region18: #{lightconv_model_fwd.43} parent=0 // pred_check
    %p93 = pneg %p15
  $region19: #{lightconv_model_fwd.43} parent=0 // pred_check_branch
    %95 = sbr.rel (%p93) target = $region21
  $region20: #{lightconv_model_fwd.43} parent=0 // pred_region
    %v96 = vld [vmem:[%s3] sm:$0xff]
    %v97 = vld [vmem:[%s3 + $0x8] sm:$0xff]
    %v98 = vld [vmem:[%s2] sm:$0x1]
    %v100 = vlaneseq
    %v101 = vshrl.u32 %v100, 7
    %v102 = vsub.s32 0, %v101
    %v103 = vrot.slane %v98, %v102
    %v105 = vadd.f32 %v96, %v103
    %v106 = vadd.f32 %v97, %v103
    %107 = vst.msk [vmem:[%s3] sm:$0xff] %vm90, %v105
    %108 = vst.msk [vmem:[%s3 + $0x8] sm:$0xff] %vm90, %v106
  $region21: #{lightconv_model_fwd.43} parent=0 // pred_fallthru
    _
  // Predicated region
  $region22: #{lightconv_model_fwd.43} parent=0 // pred_check
    _
  $region23: #{lightconv_model_fwd.43} parent=0 // pred_check_branch
    %110 = sbr.rel (0) target = $region25
  $region24: #{lightconv_model_fwd.43} parent=0 // pred_region
    _
  $region25: #{lightconv_model_fwd.43} parent=0 // pred_fallthru
    _
  // Predicated region
  $region26: #{lightconv_model_fwd.43} parent=0 // pred_check
    _
  $region27: #{lightconv_model_fwd.43} parent=0 // pred_check_branch
    %112 = sbr.rel (0) target = $region29
  $region28: #{lightconv_model_fwd.43} parent=0 // pred_region
    _
  $region29: #{lightconv_model_fwd.43} parent=0 // pred_fallthru
    _

// kernel: lightconv_model_fwd.35
$region0: #{lightconv_model_fwd.35}
  #allocation0 [shape = 'u32[]', space=smem, size = 0x4, offset = 0x4, fixed_abs, tag = 'smem constant byte address 0x4 - core index']
  #allocation1 [shape = 'u32[144,128]{1,0:T(1,128)}', space=vmem, size = 0x12000, scoped, tag = 'internal scratch']
  %s0 = inlined_call_operand.vmem [shape: f32[2,8,32], index: 0, kind: input, shape index: {}]
  %s1 = inlined_call_operand.vmem [shape: f32[7,32], index: 1, kind: input, shape index: {}]
  %s2 = inlined_call_operand.vmem [shape: f32[2,8,32], index: 2, kind: output, shape index: {}]
  %s3 = sld [smem:[#allocation0]]
  $region41: #{lightconv_model_fwd.35} parent=0
    _
  %s5 = ssub.s32 1, %s3
  %s6 = scalar_select 0, %s5, %s3
  loop: start=0, step=1, limit=4
  $region2: #{lightconv_model_fwd.35} parent=0 // loop_pre_header
    _
  $region3: #{lightconv_model_fwd.35} parent=0 // loop_header
    %s8 = sphi 0, %s12
    %p9 = scmp.ge.s32.totalorder %s8, 4
    %s15 = sphi 0, %s27
    %s16 = sphi 0, %s23
    %s17 = sphi 0, %s15
    %s18 = sphi 0, %s16
    %s19 = sphi 0, %s17
    %s20 = sphi 0, %s18
    %s32 = sphi 0, %s34
    %s35 = sphi 0, %s32
    %s36 = sphi 0, %s35
    %s52 = sphi 0, %s36
    %s58 = sphi 0, %s60
    %s61 = sphi 0, %s58
    %s62 = sphi 0, %s61
    %s78 = sphi 0, %s62
    %s86 = sphi 0, %s88
    %s89 = sphi 0, %s86
    %s90 = sphi 0, %s89
    %s106 = sphi 0, %s90
  $region4: #{lightconv_model_fwd.35} parent=0 // loop_header_branch
    %11 = sbr.rel (%p9) target = $region8
  $region5: #{lightconv_model_fwd.35} parent=0 // loop_body
    %s13 = ssub.s32 %s8, 1
    %s14 = ssub.s32 %s8, 2
    %s21 = sadd.s32 1, %s16
    %p22 = scmp.ge.s32.totalorder %s21, 1
    %s23 = scalar_select %p22, 0, %s21
    %s24 = sadd.s32 1, %s15
    %s25 = scalar_select %p22, %s24, %s15
    %p26 = scmp.ge.s32.totalorder %s25, 2
    %s27 = scalar_select %p26, 0, %s25
    %s28 = ssub.s32 %s15, %s27
    %s29 = ssub.s32 %s16, %s23
    %s30 = sor.u32 %s28, %s29
    %p31 = scmp.eq.s32.totalorder %s30, 0
    %s33 = sadd.s32 %s32, 1
    %s34 = scalar_select %p31, %s32, %s33
    %p37 = pneg %p31
    %p38 = scmp.eq.s32.totalorder %s8, 1
    %p39 = por %p37, %p38
    %p40 = scmp.ne.s32.totalorder %s32, %s35
    %p41 = scmp.eq.s32.totalorder %s8, 0
    %p42 = por %p40, %p41
    %p43 = scmp.ne.s32.totalorder %s32, %s35
    %p44 = scmp.eq.s32.totalorder %s13, 1
    %p45 = por %p43, %p44
    %p46 = scmp.ne.s32.totalorder %s35, %s36
    %p47 = scmp.eq.s32.totalorder %s13, 0
    %p48 = por %p46, %p47
    %p49 = scmp.ne.s32.totalorder %s35, %s36
    %p50 = scmp.eq.s32.totalorder %s14, 1
    %p51 = por %p49, %p50
    %p53 = scmp.ne.s32.totalorder %s36, %s52
    %p54 = scmp.eq.s32.totalorder %s14, 0
    %p55 = por %p53, %p54
    %s56 = ssub.s32 %s16, %s23
    %p57 = scmp.eq.s32.totalorder %s56, 0
    %s59 = sadd.s32 %s58, 1
    %s60 = scalar_select %p57, %s58, %s59
    %p63 = pneg %p57
    %p64 = scmp.eq.s32.totalorder %s8, 1
    %p65 = por %p63, %p64
    %p66 = scmp.ne.s32.totalorder %s58, %s61
    %p67 = scmp.eq.s32.totalorder %s8, 0
    %p68 = por %p66, %p67
    %p69 = scmp.ne.s32.totalorder %s58, %s61
    %p70 = scmp.eq.s32.totalorder %s13, 1
    %p71 = por %p69, %p70
    %p72 = scmp.ne.s32.totalorder %s61, %s62
    %p73 = scmp.eq.s32.totalorder %s13, 0
    %p74 = por %p72, %p73
    %p75 = scmp.ne.s32.totalorder %s61, %s62
    %p76 = scmp.eq.s32.totalorder %s14, 1
    %p77 = por %p75, %p76
    %p79 = scmp.ne.s32.totalorder %s62, %s78
    %p80 = scmp.eq.s32.totalorder %s14, 0
    %p81 = por %p79, %p80
    %s82 = ssub.s32 %s15, %s27
    %s83 = ssub.s32 %s16, %s23
    %s84 = sor.u32 %s82, %s83
    %p85 = scmp.eq.s32.totalorder %s84, 0
    %s87 = sadd.s32 %s86, 1
    %s88 = scalar_select %p85, %s86, %s87
    %p91 = pneg %p85
    %p92 = scmp.eq.s32.totalorder %s8, 1
    %p93 = por %p91, %p92
    %p94 = scmp.ne.s32.totalorder %s86, %s89
    %p95 = scmp.eq.s32.totalorder %s8, 0
    %p96 = por %p94, %p95
    %p97 = scmp.ne.s32.totalorder %s86, %s89
    %p98 = scmp.eq.s32.totalorder %s13, 1
    %p99 = por %p97, %p98
    %p100 = scmp.ne.s32.totalorder %s89, %s90
    %p101 = scmp.eq.s32.totalorder %s13, 0
    %p102 = por %p100, %p101
    %p103 = scmp.ne.s32.totalorder %s89, %s90
    %p104 = scmp.eq.s32.totalorder %s14, 1
    %p105 = por %p103, %p104
    %p107 = scmp.ne.s32.totalorder %s90, %s106
    %p108 = scmp.eq.s32.totalorder %s14, 0
    %p109 = por %p107, %p108
    %p110 = scmp.le.s32.totalorder 1, %s8
    %p111 = scmp.lt.s32.totalorder %s8, 3
    %p112 = pnand %p110, %p111
    %p113 = pneg %p112
    // Predicated region
    $region9: #{lightconv_model_fwd.35} parent=5 // pred_check
      _
    $region10: #{lightconv_model_fwd.35} parent=5 // pred_check_branch
      %115 = sbr.rel (%p112) target = $region12
    $region11: #{lightconv_model_fwd.35} parent=5 // pred_region
      %s116 = ssub.s32 %s8, 1
      // Predicated region
      $region13: #{lightconv_model_fwd.35} parent=11 // pred_check
        %p117 = pneg %p74
      $region14: #{lightconv_model_fwd.35} parent=11 // pred_check_branch
        %119 = sbr.rel (%p117) target = $region16
      $region15: #{lightconv_model_fwd.35} parent=11 // pred_region
        %p120 = scmp.lt.s32.totalorder %s18, 0
        %s121 = scalar_select %p120, %s18, 0
        %s122 = smul.addr %s121, 8
        %s123 = scalar_lea.vmem %s1, %s122
      $region16: #{lightconv_model_fwd.35} parent=11 // pred_fallthru
        _
    $region12: #{lightconv_model_fwd.35} parent=5 // pred_fallthru
      _
    %p124 = scmp.lt.s32.totalorder %s8, 2
    // Predicated region
    $region17: #{lightconv_model_fwd.35} parent=5 // pred_check
      %p125 = pneg %p124
    $region18: #{lightconv_model_fwd.35} parent=5 // pred_check_branch
      %127 = sbr.rel (%p125) target = $region20
    $region19: #{lightconv_model_fwd.35} parent=5 // pred_region
      // Predicated region
      $region21: #{lightconv_model_fwd.35} parent=19 // pred_check
        %p128 = pneg %p42
      $region22: #{lightconv_model_fwd.35} parent=19 // pred_check_branch
        %130 = sbr.rel (%p128) target = $region24
      $region23: #{lightconv_model_fwd.35} parent=19 // pred_region
        %p131 = scmp.lt.s32.totalorder %s15, 1
        %s132 = scalar_select %p131, %s15, 1
        %p133 = scmp.lt.s32.totalorder %s16, 0
        %s134 = scalar_select %p133, %s16, 0
        %s135 = sadd.s32 %s134, %s132
        %s136 = smul.addr %s135, 8
        %s137 = scalar_lea.vmem %s0, %s136
      $region24: #{lightconv_model_fwd.35} parent=19 // pred_fallthru
        _
    $region20: #{lightconv_model_fwd.35} parent=5 // pred_fallthru
      _
    %p138 = scmp.le.s32.totalorder 1, %s8
    %p139 = scmp.lt.s32.totalorder %s8, 3
    %p140 = pnand %p138, %p139
    %p141 = pneg %p140
    // Predicated region
    $region25: #{lightconv_model_fwd.35} parent=5 // pred_check
      _
    $region26: #{lightconv_model_fwd.35} parent=5 // pred_check_branch
      %143 = sbr.rel (%p140) target = $region28
    $region27: #{lightconv_model_fwd.35} parent=5 // pred_region
      %s144 = ssub.s32 %s8, 1
      %p145 = scmp.lt.s32.totalorder %s17, 1
      %s146 = scalar_select %p145, %s17, 1
      %p147 = scmp.lt.s32.totalorder %s18, 0
      %s148 = scalar_select %p147, %s18, 0
      %s149 = sadd.s32 %s148, %s146
      %s150 = smul.addr %s149, 8
      %s151 = scalar_lea.vmem %s0, %s150
      %p152 = pneg %p48
      %p153 = pneg %p45
      %p154 = scmp.lt.s32.totalorder %s18, 0
      %s155 = scalar_select %p154, %s18, 0
      %s156 = smul.addr %s155, 8
      %s157 = scalar_lea.vmem %s1, %s156
      %p158 = pneg %p74
      %p159 = pneg %p71
      %p160 = pneg %p102
      %p161 = pneg %p99
      %p162 = scmp.lt.s32.totalorder %s17, 1
      %s163 = scalar_select %p162, %s17, 1
      %p164 = scmp.lt.s32.totalorder %s18, 0
      %s165 = scalar_select %p164, %s18, 0
      %s166 = sadd.s32 %s165, %s163
      %s167 = smul.addr %s166, 8
      %s168 = scalar_lea.vmem %s2, %s167
      %p169 = scmp.lt.s32.totalorder %s17, 1
      %s170 = scalar_select %p169, %s17, 1
      %p171 = scmp.lt.s32.totalorder %s18, 0
      %s172 = scalar_select %p171, %s18, 0
      %s173 = sadd.s32 %s172, %s170
      %s174 = smul.addr %s173, 8
      %s175 = scalar_lea.vmem %s0, %s174
      %p176 = scmp.lt.s32.totalorder %s18, 0
      %s177 = scalar_select %p176, %s18, 0
      %s178 = smul.addr %s177, 8
      %s179 = scalar_lea.vmem %s1, %s178
      %p180 = scmp.lt.s32.totalorder %s17, 1
      %s181 = scalar_select %p180, %s17, 1
      %p182 = scmp.lt.s32.totalorder %s18, 0
      %s183 = scalar_select %p182, %s18, 0
      %s184 = sadd.s32 %s183, %s181
      %s185 = smul.addr %s184, 8
      %s186 = scalar_lea.vmem %s2, %s185
      %v187 = vld [vmem:[%s175] sm:$0xff]
      %v188 = vld [vmem:[%s179] sm:$0x7f]
      %v189 = vlaneseq
      %v190 = vshrl.u32 %v189, 7
      %v191 = vlaneseq
      %v192 = vshrl.u32 %v191, 7
      %v193 = vsub.s32 3, %v192
      %v194 = vrot.slane %v188, %v193
      %v195 = vmul.f32 %v187, %v194
      %v196 = vrot.slane %v187, 5
      %vm197 = vcmp.ge.s32.totalorder %v190, 3
      %v198 = vsel %vm197, %v196, 0.0
      %v199 = vlaneseq
      %v200 = vshrl.u32 %v199, 7
      %v201 = vsub.s32 0, %v200
      %v202 = vrot.slane %v188, %v201
      %v203 = vmul.f32 %v198, %v202
      %v204 = vadd.f32 %v195, %v203
      %v205 = vrot.slane %v187, 6
      %vm206 = vcmp.ge.s32.totalorder %v190, 2
      %v207 = vsel %vm206, %v205, 0.0
      %v208 = vlaneseq
      %v209 = vshrl.u32 %v208, 7
      %v210 = vsub.s32 1, %v209
      %v211 = vrot.slane %v188, %v210
      %v212 = vmul.f32 %v207, %v211
      %v213 = vadd.f32 %v204, %v212
      %v214 = vrot.slane %v187, 7
      %vm215 = vcmp.ge.s32.totalorder %v190, 1
      %v216 = vsel %vm215, %v214, 0.0
      %v217 = vlaneseq
      %v218 = vshrl.u32 %v217, 7
      %v219 = vsub.s32 2, %v218
      %v220 = vrot.slane %v188, %v219
      %v221 = vmul.f32 %v216, %v220
      %v222 = vadd.f32 %v213, %v221
      %v223 = vrot.slane %v187, 1
      %vm224 = vcmp.lt.s32.totalorder %v190, 7
      %v225 = vsel %vm224, %v223, 0.0
      %v226 = vlaneseq
      %v227 = vshrl.u32 %v226, 7
      %v228 = vsub.s32 4, %v227
      %v229 = vrot.slane %v188, %v228
      %v230 = vmul.f32 %v225, %v229
      %v231 = vadd.f32 %v222, %v230
      %v232 = vrot.slane %v187, 2
      %vm233 = vcmp.lt.s32.totalorder %v190, 6
      %v234 = vsel %vm233, %v232, 0.0
      %v235 = vlaneseq
      %v236 = vshrl.u32 %v235, 7
      %v237 = vsub.s32 5, %v236
      %v238 = vrot.slane %v188, %v237
      %v239 = vmul.f32 %v234, %v238
      %v240 = vadd.f32 %v231, %v239
      %v241 = vrot.slane %v187, 3
      %vm242 = vcmp.lt.s32.totalorder %v190, 5
      %v243 = vsel %vm242, %v241, 0.0
      %v244 = vlaneseq
      %v245 = vshrl.u32 %v244, 7
      %v246 = vsub.s32 6, %v245
      %v247 = vrot.slane %v188, %v246
      %v248 = vmul.f32 %v243, %v247
      %v249 = vadd.f32 %v240, %v248
      %vm250 = vcmask 261120
      %251 = vst.msk [vmem:[%s186] sm:$0xff] %vm250, %v249
      %p252 = scmp.lt.s32.totalorder %s17, 1
      %s253 = scalar_select %p252, %s17, 1
      %p254 = scmp.lt.s32.totalorder %s18, 0
      %s255 = scalar_select %p254, %s18, 0
      %s256 = sadd.s32 %s255, %s253
      %s257 = smul.addr %s256, 8
      %s258 = scalar_lea.vmem %s2, %s257
      // Predicated region
      $region29: #{lightconv_model_fwd.35} parent=27 // pred_check
        %p259 = pneg %p99
      $region30: #{lightconv_model_fwd.35} parent=27 // pred_check_branch
        %261 = sbr.rel (%p259) target = $region32
      $region31: #{lightconv_model_fwd.35} parent=27 // pred_region
        _
      $region32: #{lightconv_model_fwd.35} parent=27 // pred_fallthru
        _
    $region28: #{lightconv_model_fwd.35} parent=5 // pred_fallthru
      _
    %p262 = scmp.le.s32.totalorder 2, %s8
    // Predicated region
    $region33: #{lightconv_model_fwd.35} parent=5 // pred_check
      %p263 = pneg %p262
    $region34: #{lightconv_model_fwd.35} parent=5 // pred_check_branch
      %265 = sbr.rel (%p263) target = $region36
    $region35: #{lightconv_model_fwd.35} parent=5 // pred_region
      %s266 = ssub.s32 %s8, 2
      // Predicated region
      $region37: #{lightconv_model_fwd.35} parent=35 // pred_check
        %p267 = pneg %p105
      $region38: #{lightconv_model_fwd.35} parent=35 // pred_check_branch
        %269 = sbr.rel (%p267) target = $region40
      $region39: #{lightconv_model_fwd.35} parent=35 // pred_region
        %p270 = scmp.lt.s32.totalorder %s19, 1
        %s271 = scalar_select %p270, %s19, 1
        %p272 = scmp.lt.s32.totalorder %s20, 0
        %s273 = scalar_select %p272, %s20, 0
        %s274 = sadd.s32 %s273, %s271
        %s275 = smul.addr %s274, 8
        %s276 = scalar_lea.vmem %s2, %s275
      $region40: #{lightconv_model_fwd.35} parent=35 // pred_fallthru
        _
    $region36: #{lightconv_model_fwd.35} parent=5 // pred_fallthru
      _
  $region6: #{lightconv_model_fwd.35} parent=0 // loop_footer
    %s12 = sadd.s32 1, %s8
  $region7: #{lightconv_model_fwd.35} parent=0 // loop_footer_branch
    %7 = sbr.rel target = $region3
  $region8: #{lightconv_model_fwd.35} parent=0 // loop_exit
    _

// kernel: lightconv_model_fwd.40
$region0: #{lightconv_model_fwd.40}
  #allocation0 [shape = 'u32[]', space=smem, size = 0x4, offset = 0x4, fixed_abs, tag = 'smem constant byte address 0x4 - core index']
  #allocation1 [shape = 'u32[144,128]{1,0:T(1,128)}', space=vmem, size = 0x12000, scoped, tag = 'internal scratch']
  %s0 = inlined_call_operand.vmem [shape: f32[2,8,32], index: 0, kind: input, shape index: {}]
  %s1 = inlined_call_operand.vmem [shape: f32[3,32], index: 1, kind: input, shape index: {}]
  %s2 = inlined_call_operand.vmem [shape: f32[2,8,32], index: 2, kind: output, shape index: {}]
  %s3 = sld [smem:[#allocation0]]
  $region41: #{lightconv_model_fwd.40} parent=0
    _
  %s5 = ssub.s32 1, %s3
  %s6 = scalar_select 0, %s5, %s3
  loop: start=0, step=1, limit=4
  $region2: #{lightconv_model_fwd.40} parent=0 // loop_pre_header
    _
  $region3: #{lightconv_model_fwd.40} parent=0 // loop_header
    %s8 = sphi 0, %s12
    %p9 = scmp.ge.s32.totalorder %s8, 4
    %s15 = sphi 0, %s27
    %s16 = sphi 0, %s23
    %s17 = sphi 0, %s15
    %s18 = sphi 0, %s16
    %s19 = sphi 0, %s17
    %s20 = sphi 0, %s18
    %s32 = sphi 0, %s34
    %s35 = sphi 0, %s32
    %s36 = sphi 0, %s35
    %s52 = sphi 0, %s36
    %s58 = sphi 0, %s60
    %s61 = sphi 0, %s58
    %s62 = sphi 0, %s61
    %s78 = sphi 0, %s62
    %s86 = sphi 0, %s88
    %s89 = sphi 0, %s86
    %s90 = sphi 0, %s89
    %s106 = sphi 0, %s90
  $region4: #{lightconv_model_fwd.40} parent=0 // loop_header_branch
    %11 = sbr.rel (%p9) target = $region8
  $region5: #{lightconv_model_fwd.40} parent=0 // loop_body
    %s13 = ssub.s32 %s8, 1
    %s14 = ssub.s32 %s8, 2
    %s21 = sadd.s32 1, %s16
    %p22 = scmp.ge.s32.totalorder %s21, 1
    %s23 = scalar_select %p22, 0, %s21
    %s24 = sadd.s32 1, %s15
    %s25 = scalar_select %p22, %s24, %s15
    %p26 = scmp.ge.s32.totalorder %s25, 2
    %s27 = scalar_select %p26, 0, %s25
    %s28 = ssub.s32 %s15, %s27
    %s29 = ssub.s32 %s16, %s23
    %s30 = sor.u32 %s28, %s29
    %p31 = scmp.eq.s32.totalorder %s30, 0
    %s33 = sadd.s32 %s32, 1
    %s34 = scalar_select %p31, %s32, %s33
    %p37 = pneg %p31
    %p38 = scmp.eq.s32.totalorder %s8, 1
    %p39 = por %p37, %p38
    %p40 = scmp.ne.s32.totalorder %s32, %s35
    %p41 = scmp.eq.s32.totalorder %s8, 0
    %p42 = por %p40, %p41
    %p43 = scmp.ne.s32.totalorder %s32, %s35
    %p44 = scmp.eq.s32.totalorder %s13, 1
    %p45 = por %p43, %p44
    %p46 = scmp.ne.s32.totalorder %s35, %s36
    %p47 = scmp.eq.s32.totalorder %s13, 0
    %p48 = por %p46, %p47
    %p49 = scmp.ne.s32.totalorder %s35, %s36
    %p50 = scmp.eq.s32.totalorder %s14, 1
    %p51 = por %p49, %p50
    %p53 = scmp.ne.s32.totalorder %s36, %s52
    %p54 = scmp.eq.s32.totalorder %s14, 0
    %p55 = por %p53, %p54
    %s56 = ssub.s32 %s16, %s23
    %p57 = scmp.eq.s32.totalorder %s56, 0
    %s59 = sadd.s32 %s58, 1
    %s60 = scalar_select %p57, %s58, %s59
    %p63 = pneg %p57
    %p64 = scmp.eq.s32.totalorder %s8, 1
    %p65 = por %p63, %p64
    %p66 = scmp.ne.s32.totalorder %s58, %s61
    %p67 = scmp.eq.s32.totalorder %s8, 0
    %p68 = por %p66, %p67
    %p69 = scmp.ne.s32.totalorder %s58, %s61
    %p70 = scmp.eq.s32.totalorder %s13, 1
    %p71 = por %p69, %p70
    %p72 = scmp.ne.s32.totalorder %s61, %s62
    %p73 = scmp.eq.s32.totalorder %s13, 0
    %p74 = por %p72, %p73
    %p75 = scmp.ne.s32.totalorder %s61, %s62
    %p76 = scmp.eq.s32.totalorder %s14, 1
    %p77 = por %p75, %p76
    %p79 = scmp.ne.s32.totalorder %s62, %s78
    %p80 = scmp.eq.s32.totalorder %s14, 0
    %p81 = por %p79, %p80
    %s82 = ssub.s32 %s15, %s27
    %s83 = ssub.s32 %s16, %s23
    %s84 = sor.u32 %s82, %s83
    %p85 = scmp.eq.s32.totalorder %s84, 0
    %s87 = sadd.s32 %s86, 1
    %s88 = scalar_select %p85, %s86, %s87
    %p91 = pneg %p85
    %p92 = scmp.eq.s32.totalorder %s8, 1
    %p93 = por %p91, %p92
    %p94 = scmp.ne.s32.totalorder %s86, %s89
    %p95 = scmp.eq.s32.totalorder %s8, 0
    %p96 = por %p94, %p95
    %p97 = scmp.ne.s32.totalorder %s86, %s89
    %p98 = scmp.eq.s32.totalorder %s13, 1
    %p99 = por %p97, %p98
    %p100 = scmp.ne.s32.totalorder %s89, %s90
    %p101 = scmp.eq.s32.totalorder %s13, 0
    %p102 = por %p100, %p101
    %p103 = scmp.ne.s32.totalorder %s89, %s90
    %p104 = scmp.eq.s32.totalorder %s14, 1
    %p105 = por %p103, %p104
    %p107 = scmp.ne.s32.totalorder %s90, %s106
    %p108 = scmp.eq.s32.totalorder %s14, 0
    %p109 = por %p107, %p108
    %p110 = scmp.le.s32.totalorder 1, %s8
    %p111 = scmp.lt.s32.totalorder %s8, 3
    %p112 = pnand %p110, %p111
    %p113 = pneg %p112
    // Predicated region
    $region9: #{lightconv_model_fwd.40} parent=5 // pred_check
      _
    $region10: #{lightconv_model_fwd.40} parent=5 // pred_check_branch
      %115 = sbr.rel (%p112) target = $region12
    $region11: #{lightconv_model_fwd.40} parent=5 // pred_region
      %s116 = ssub.s32 %s8, 1
      // Predicated region
      $region13: #{lightconv_model_fwd.40} parent=11 // pred_check
        %p117 = pneg %p74
      $region14: #{lightconv_model_fwd.40} parent=11 // pred_check_branch
        %119 = sbr.rel (%p117) target = $region16
      $region15: #{lightconv_model_fwd.40} parent=11 // pred_region
        %p120 = scmp.lt.s32.totalorder %s18, 0
        %s121 = scalar_select %p120, %s18, 0
        %s122 = smul.addr %s121, 4
        %s123 = scalar_lea.vmem %s1, %s122
      $region16: #{lightconv_model_fwd.40} parent=11 // pred_fallthru
        _
    $region12: #{lightconv_model_fwd.40} parent=5 // pred_fallthru
      _
    %p124 = scmp.lt.s32.totalorder %s8, 2
    // Predicated region
    $region17: #{lightconv_model_fwd.40} parent=5 // pred_check
      %p125 = pneg %p124
    $region18: #{lightconv_model_fwd.40} parent=5 // pred_check_branch
      %127 = sbr.rel (%p125) target = $region20
    $region19: #{lightconv_model_fwd.40} parent=5 // pred_region
      // Predicated region
      $region21: #{lightconv_model_fwd.40} parent=19 // pred_check
        %p128 = pneg %p42
      $region22: #{lightconv_model_fwd.40} parent=19 // pred_check_branch
        %130 = sbr.rel (%p128) target = $region24
      $region23: #{lightconv_model_fwd.40} parent=19 // pred_region
        %p131 = scmp.lt.s32.totalorder %s15, 1
        %s132 = scalar_select %p131, %s15, 1
        %p133 = scmp.lt.s32.totalorder %s16, 0
        %s134 = scalar_select %p133, %s16, 0
        %s135 = sadd.s32 %s134, %s132
        %s136 = smul.addr %s135, 8
        %s137 = scalar_lea.vmem %s0, %s136
      $region24: #{lightconv_model_fwd.40} parent=19 // pred_fallthru
        _
    $region20: #{lightconv_model_fwd.40} parent=5 // pred_fallthru
      _
    %p138 = scmp.le.s32.totalorder 1, %s8
    %p139 = scmp.lt.s32.totalorder %s8, 3
    %p140 = pnand %p138, %p139
    %p141 = pneg %p140
    // Predicated region
    $region25: #{lightconv_model_fwd.40} parent=5 // pred_check
      _
    $region26: #{lightconv_model_fwd.40} parent=5 // pred_check_branch
      %143 = sbr.rel (%p140) target = $region28
    $region27: #{lightconv_model_fwd.40} parent=5 // pred_region
      %s144 = ssub.s32 %s8, 1
      %p145 = scmp.lt.s32.totalorder %s17, 1
      %s146 = scalar_select %p145, %s17, 1
      %p147 = scmp.lt.s32.totalorder %s18, 0
      %s148 = scalar_select %p147, %s18, 0
      %s149 = sadd.s32 %s148, %s146
      %s150 = smul.addr %s149, 8
      %s151 = scalar_lea.vmem %s0, %s150
      %p152 = pneg %p48
      %p153 = pneg %p45
      %p154 = scmp.lt.s32.totalorder %s18, 0
      %s155 = scalar_select %p154, %s18, 0
      %s156 = smul.addr %s155, 4
      %s157 = scalar_lea.vmem %s1, %s156
      %p158 = pneg %p74
      %p159 = pneg %p71
      %p160 = pneg %p102
      %p161 = pneg %p99
      %p162 = scmp.lt.s32.totalorder %s17, 1
      %s163 = scalar_select %p162, %s17, 1
      %p164 = scmp.lt.s32.totalorder %s18, 0
      %s165 = scalar_select %p164, %s18, 0
      %s166 = sadd.s32 %s165, %s163
      %s167 = smul.addr %s166, 8
      %s168 = scalar_lea.vmem %s2, %s167
      %p169 = scmp.lt.s32.totalorder %s17, 1
      %s170 = scalar_select %p169, %s17, 1
      %p171 = scmp.lt.s32.totalorder %s18, 0
      %s172 = scalar_select %p171, %s18, 0
      %s173 = sadd.s32 %s172, %s170
      %s174 = smul.addr %s173, 8
      %s175 = scalar_lea.vmem %s0, %s174
      %p176 = scmp.lt.s32.totalorder %s18, 0
      %s177 = scalar_select %p176, %s18, 0
      %s178 = smul.addr %s177, 4
      %s179 = scalar_lea.vmem %s1, %s178
      %p180 = scmp.lt.s32.totalorder %s17, 1
      %s181 = scalar_select %p180, %s17, 1
      %p182 = scmp.lt.s32.totalorder %s18, 0
      %s183 = scalar_select %p182, %s18, 0
      %s184 = sadd.s32 %s183, %s181
      %s185 = smul.addr %s184, 8
      %s186 = scalar_lea.vmem %s2, %s185
      %v187 = vld [vmem:[%s175] sm:$0xff]
      %v188 = vld [vmem:[%s179] sm:$0x7]
      %v189 = vlaneseq
      %v190 = vshrl.u32 %v189, 7
      %v191 = vlaneseq
      %v192 = vshrl.u32 %v191, 7
      %v193 = vsub.s32 2, %v192
      %v194 = vrot.slane %v188, %v193
      %v195 = vmul.f32 %v187, %v194
      %v196 = vrot.slane %v187, 6
      %vm197 = vcmp.ge.s32.totalorder %v190, 2
      %v198 = vsel %vm197, %v196, 0.0
      %v199 = vlaneseq
      %v200 = vshrl.u32 %v199, 7
      %v201 = vsub.s32 0, %v200
      %v202 = vrot.slane %v188, %v201
      %v203 = vmul.f32 %v198, %v202
      %v204 = vadd.f32 %v195, %v203
      %v205 = vrot.slane %v187, 7
      %vm206 = vcmp.ge.s32.totalorder %v190, 1
      %v207 = vsel %vm206, %v205, 0.0
      %v208 = vlaneseq
      %v209 = vshrl.u32 %v208, 7
      %v210 = vsub.s32 1, %v209
      %v211 = vrot.slane %v188, %v210
      %v212 = vmul.f32 %v207, %v211
      %v213 = vadd.f32 %v204, %v212
      %vm214 = vcmask 261120
      %215 = vst.msk [vmem:[%s186] sm:$0xff] %vm214, %v213
      %p216 = scmp.lt.s32.totalorder %s17, 1
      %s217 = scalar_select %p216, %s17, 1
      %p218 = scmp.lt.s32.totalorder %s18, 0
      %s219 = scalar_select %p218, %s18, 0
      %s220 = sadd.s32 %s219, %s217
      %s221 = smul.addr %s220, 8
      %s222 = scalar_lea.vmem %s2, %s221
      // Predicated region
      $region29: #{lightconv_model_fwd.40} parent=27 // pred_check
        %p223 = pneg %p99
      $region30: #{lightconv_model_fwd.40} parent=27 // pred_check_branch
        %225 = sbr.rel (%p223) target = $region32
      $region31: #{lightconv_model_fwd.40} parent=27 // pred_region
        _
      $region32: #{lightconv_model_fwd.40} parent=27 // pred_fallthru
        _
    $region28: #{lightconv_model_fwd.40} parent=5 // pred_fallthru
      _
    %p226 = scmp.le.s32.totalorder 2, %s8
    // Predicated region
    $region33: #{lightconv_model_fwd.40} parent=5 // pred_check
      %p227 = pneg %p226
    $region34: #{lightconv_model_fwd.40} parent=5 // pred_check_branch
      %229 = sbr.rel (%p227) target = $region36
    $region35: #{lightconv_model_fwd.40} parent=5 // pred_region
      %s230 = ssub.s32 %s8, 2
      // Predicated region
      $region37: #{lightconv_model_fwd.40} parent=35 // pred_check
        %p231 = pneg %p105
      $region38: #{lightconv_model_fwd.40} parent=35 // pred_check_branch
        %233 = sbr.rel (%p231) target = $region40
      $region39: #{lightconv_model_fwd.40} parent=35 // pred_region
        %p234 = scmp.lt.s32.totalorder %s19, 1
        %s235 = scalar_select %p234, %s19, 1
        %p236 = scmp.lt.s32.totalorder %s20, 0
        %s237 = scalar_select %p236, %s20, 0
        %s238 = sadd.s32 %s237, %s235
        %s239 = smul.addr %s238, 8
        %s240 = scalar_lea.vmem %s2, %s239
      $region40: #{lightconv_model_fwd.40} parent=35 // pred_fallthru
        _
    $region36: #{lightconv_model_fwd.40} parent=5 // pred_fallthru
      _
  $region6: #{lightconv_model_fwd.40} parent=0 // loop_footer
    %s12 = sadd.s32 1, %s8
  $region7: #{lightconv_model_fwd.40} parent=0 // loop_footer_branch
    %7 = sbr.rel target = $region3
  $region8: #{lightconv_model_fwd.40} parent=0 // loop_exit
    _

// kernel: lightconv_model_fwd.42
$region0: #{lightconv_model_fwd.42}
  #allocation0 [shape = 'u32[]', space=smem, size = 0x4, offset = 0x4, fixed_abs, tag = 'smem constant byte address 0x4 - core index']
  #allocation1 [shape = 'u32[144,128]{1,0:T(1,128)}', space=vmem, size = 0x12000, scoped, tag = 'internal scratch']
  %s0 = inlined_call_operand.vmem [shape: f32[16,32], index: 0, kind: input, shape index: {}]
  %s1 = inlined_call_operand.vmem [shape: bf16[32,32], index: 1, kind: input, shape index: {}]
  %s2 = inlined_call_operand.vmem [shape: f32[1,32], index: 2, kind: input, shape index: {}]
  %s3 = inlined_call_operand.vmem [shape: f32[16,32], index: 3, kind: output, shape index: {}]
  %s4 = sld [smem:[#allocation0]]
  $region30: #{lightconv_model_fwd.42} parent=0
    _
  %s6 = ssub.s32 1, %s4
  %s7 = scalar_select 0, %s6, %s4
  // Predicated region
  $region2: #{lightconv_model_fwd.42} parent=0 // pred_check
    _
  $region3: #{lightconv_model_fwd.42} parent=0 // pred_check_branch
    %9 = sbr.rel (0) target = $region5
  $region4: #{lightconv_model_fwd.42} parent=0 // pred_region
    _
  $region5: #{lightconv_model_fwd.42} parent=0 // pred_fallthru
    _
  // Predicated region
  $region6: #{lightconv_model_fwd.42} parent=0 // pred_check
    _
  $region7: #{lightconv_model_fwd.42} parent=0 // pred_check_branch
    %11 = sbr.rel (0) target = $region9
  $region8: #{lightconv_model_fwd.42} parent=0 // pred_region
    _
  $region9: #{lightconv_model_fwd.42} parent=0 // pred_fallthru
    _
  // Predicated region
  $region10: #{lightconv_model_fwd.42} parent=0 // pred_check
    _
  $region11: #{lightconv_model_fwd.42} parent=0 // pred_check_branch
    %13 = sbr.rel (0) target = $region13
  $region12: #{lightconv_model_fwd.42} parent=0 // pred_region
    _
  $region13: #{lightconv_model_fwd.42} parent=0 // pred_fallthru
    _
  %p15 = scmp.eq.s32.totalorder 0, 0
  // Predicated region
  $region14: #{lightconv_model_fwd.42} parent=0 // pred_check
    %p16 = pneg %p15
  $region15: #{lightconv_model_fwd.42} parent=0 // pred_check_branch
    %18 = sbr.rel (%p16) target = $region17
  $region16: #{lightconv_model_fwd.42} parent=0 // pred_region
    %vm19 = vcmask 261120
    %20 = vst.msk [vmem:[%s3] sm:$0xff] %vm19, 0.0
    %21 = vst.msk [vmem:[%s3 + $0x8] sm:$0xff] %vm19, 0.0
  $region17: #{lightconv_model_fwd.42} parent=0 // pred_fallthru
    _
  %v22 = vld [vmem:[%s3] sm:$0xff]
  %v23 = vld [vmem:[%s3 + $0x8] sm:$0xff]
  %v24 = vld [vmem:[%s0] sm:$0xff]
  %v25 = vld [vmem:[%s0 + $0x8] sm:$0xff]
  %v26 = vpack.c.bf16 %v25, %v24
  %v27 = vld [vmem:[%s1] sm:$0xf]
  %v28 = vld [vmem:[%s1 + $0x4] sm:$0xf]
  %v29 = vld [vmem:[%s1 + $0x8] sm:$0xf]
  %v30 = vld [vmem:[%s1 + $0xc] sm:$0xf]
  %v35 = vunpack.c.l.b16 %v27
  %v36 = vunpack.c.l.b16 %v28
  %v37 = vunpack.c.l.b16 %v29
  %v38 = vunpack.c.l.b16 %v30
  %v39 = vpack.c.b16 %v36, %v35
  %v40 = vpack.c.b16 %v38, %v37
  %vm43 = vcmask 261120
  %v45 = vsel %vm43, %v26, 0
  %47 = vmatprep.subr.bf16.mxu0 0
  %48 = vmatpush1.bf16.msra.mxu0 0
  %49 = vmatprep.subr.bf16.mxu0 0
  %50 = vmatpush1.bf16.msra.mxu0 0
  %51 = vmatprep.subr.bf16.mxu0 0
  %52 = vmatpush1.bf16.msra.mxu0 0
  %53 = vmatprep.subr.bf16.mxu0 0
  %54 = vmatpush1.bf16.msra.mxu0 0
  %55 = vmatprep.subr.bf16.mxu0 0
  %56 = vmatpush1.bf16.msra.mxu0 0
  %57 = vmatprep.subr.bf16.mxu0 0
  %58 = vmatpush1.bf16.msra.mxu0 0
  %59 = vmatprep.subr.bf16.mxu0 0
  %60 = vmatpush1.bf16.msra.mxu0 %v40
  %61 = vmatprep.subr.bf16.mxu0 0
  %62 = vmatpush1.bf16.msra.mxu0 %v39
  %63 = vmatprep.subr.bf16.mxu0 0
  %64 = vmatpush2.bf16.msra.mxu0 0
  %65 = vmatprep.subr.bf16.mxu0 0
  %66 = vmatpush2.bf16.msra.mxu0 0
  %67 = vmatprep.subr.bf16.mxu0 0
  %68 = vmatpush2.bf16.msra.mxu0 0
  %69 = vmatprep.subr.bf16.mxu0 0
  %70 = vmatpush2.bf16.msra.mxu0 0
  %71 = vmatprep.subr.bf16.mxu0 0
  %72 = vmatpush2.bf16.msra.mxu0 0
  %73 = vmatprep.subr.bf16.mxu0 0
  %74 = vmatpush2.bf16.msra.mxu0 0
  %75 = vmatprep.subr.bf16.mxu0 0
  %76 = vmatpush2.bf16.msra.mxu0 0
  %77 = vmatprep.subr.bf16.mxu0 0
  %78 = vmatpush2.bf16.msra.mxu0 0
  %79 = vmatprep.mubr.bf16.mxu0 0
  %80 = vmatmul.mubr.bf16.gmra.mxu0 %v45
  %v81 = vpop.f32.mrf.mxu0
  %v82 = vadd.f32 0.0, %v81
  %v83 = vpop.f32.mrf.mxu0
  %v84 = vpop.f32.mrf.mxu0
  %v85 = vadd.f32 0.0, %v84
  %v86 = vpop.f32.mrf.mxu0
  %87 = vdwg.mxu0
  %v88 = vadd.f32 %v22, %v82
  %v89 = vadd.f32 %v23, %v85
  %90 = vst.msk [vmem:[%s3] sm:$0xff] %vm43, %v88
  %91 = vst.msk [vmem:[%s3 + $0x8] sm:$0xff] %vm43, %v89
  // Predicated region
  $region18: #{lightconv_model_fwd.42} parent=0 // pred_check
    %p92 = pneg %p15
  $region19: #{lightconv_model_fwd.42} parent=0 // pred_check_branch
    %94 = sbr.rel (%p92) target = $region21
  $region20: #{lightconv_model_fwd.42} parent=0 // pred_region
    %v95 = vld [vmem:[%s3] sm:$0xff]
    %v96 = vld [vmem:[%s3 + $0x8] sm:$0xff]
    %v97 = vld [vmem:[%s2] sm:$0x1]
    %v99 = vlaneseq
    %v100 = vshrl.u32 %v99, 7
    %v101 = vsub.s32 0, %v100
    %v102 = vrot.slane %v97, %v101
    %v104 = vadd.f32 %v95, %v102
    %v105 = vadd.f32 %v96, %v102
    %106 = vst.msk [vmem:[%s3] sm:$0xff] %vm43, %v104
    %107 = vst.msk [vmem:[%s3 + $0x8] sm:$0xff] %vm43, %v105
  $region21: #{lightconv_model_fwd.42} parent=0 // pred_fallthru
    _
  // Predicated region
  $region22: #{lightconv_model_fwd.42} parent=0 // pred_check
    _
  $region23: #{lightconv_model_fwd.42} parent=0 // pred_check_branch
    %109 = sbr.rel (0) target = $region25
  $region24: #{lightconv_model_fwd.42} parent=0 // pred_region
    _
  $region25: #{lightconv_model_fwd.42} parent=0 // pred_fallthru
    _
  // Predicated region
  $region26: #{lightconv_model_fwd.42} parent=0 // pred_check
    _
  $region27: #{lightconv_model_fwd.42} parent=0 // pred_check_branch
    %111 = sbr.rel (0) target = $region29
  $region28: #{lightconv_model_fwd.42} parent=0 // pred_region
    _
  $region29: #{lightconv_model_fwd.42} parent=0 // pred_fallthru
    _

// kernel: lightconv_model_fwd.49
$region0: #{lightconv_model_fwd.49}
  #allocation0 [shape = 'u32[]', space=smem, size = 0x4, offset = 0x4, fixed_abs, tag = 'smem constant byte address 0x4 - core index']
  #allocation1 [shape = 'u32[144,128]{1,0:T(1,128)}', space=vmem, size = 0x12000, scoped, tag = 'internal scratch']
  %s0 = inlined_call_operand.vmem [shape: f32[2,8,32], index: 0, kind: input, shape index: {}]
  %s1 = inlined_call_operand.vmem [shape: f32[7,32], index: 1, kind: input, shape index: {}]
  %s2 = inlined_call_operand.vmem [shape: f32[2,8,32], index: 2, kind: output, shape index: {}]
  %s3 = sld [smem:[#allocation0]]
  $region41: #{lightconv_model_fwd.49} parent=0
    _
  %s5 = ssub.s32 1, %s3
  %s6 = scalar_select 0, %s5, %s3
  loop: start=0, step=1, limit=4
  $region2: #{lightconv_model_fwd.49} parent=0 // loop_pre_header
    _
  $region3: #{lightconv_model_fwd.49} parent=0 // loop_header
    %s8 = sphi 0, %s12
    %p9 = scmp.ge.s32.totalorder %s8, 4
    %s15 = sphi 0, %s27
    %s16 = sphi 0, %s23
    %s17 = sphi 0, %s15
    %s18 = sphi 0, %s16
    %s19 = sphi 0, %s17
    %s20 = sphi 0, %s18
    %s32 = sphi 0, %s34
    %s35 = sphi 0, %s32
    %s36 = sphi 0, %s35
    %s52 = sphi 0, %s36
    %s58 = sphi 0, %s60
    %s61 = sphi 0, %s58
    %s62 = sphi 0, %s61
    %s78 = sphi 0, %s62
    %s86 = sphi 0, %s88
    %s89 = sphi 0, %s86
    %s90 = sphi 0, %s89
    %s106 = sphi 0, %s90
  $region4: #{lightconv_model_fwd.49} parent=0 // loop_header_branch
    %11 = sbr.rel (%p9) target = $region8
  $region5: #{lightconv_model_fwd.49} parent=0 // loop_body
    %s13 = ssub.s32 %s8, 1
    %s14 = ssub.s32 %s8, 2
    %s21 = sadd.s32 1, %s16
    %p22 = scmp.ge.s32.totalorder %s21, 1
    %s23 = scalar_select %p22, 0, %s21
    %s24 = sadd.s32 1, %s15
    %s25 = scalar_select %p22, %s24, %s15
    %p26 = scmp.ge.s32.totalorder %s25, 2
    %s27 = scalar_select %p26, 0, %s25
    %s28 = ssub.s32 %s15, %s27
    %s29 = ssub.s32 %s16, %s23
    %s30 = sor.u32 %s28, %s29
    %p31 = scmp.eq.s32.totalorder %s30, 0
    %s33 = sadd.s32 %s32, 1
    %s34 = scalar_select %p31, %s32, %s33
    %p37 = pneg %p31
    %p38 = scmp.eq.s32.totalorder %s8, 1
    %p39 = por %p37, %p38
    %p40 = scmp.ne.s32.totalorder %s32, %s35
    %p41 = scmp.eq.s32.totalorder %s8, 0
    %p42 = por %p40, %p41
    %p43 = scmp.ne.s32.totalorder %s32, %s35
    %p44 = scmp.eq.s32.totalorder %s13, 1
    %p45 = por %p43, %p44
    %p46 = scmp.ne.s32.totalorder %s35, %s36
    %p47 = scmp.eq.s32.totalorder %s13, 0
    %p48 = por %p46, %p47
    %p49 = scmp.ne.s32.totalorder %s35, %s36
    %p50 = scmp.eq.s32.totalorder %s14, 1
    %p51 = por %p49, %p50
    %p53 = scmp.ne.s32.totalorder %s36, %s52
    %p54 = scmp.eq.s32.totalorder %s14, 0
    %p55 = por %p53, %p54
    %s56 = ssub.s32 %s16, %s23
    %p57 = scmp.eq.s32.totalorder %s56, 0
    %s59 = sadd.s32 %s58, 1
    %s60 = scalar_select %p57, %s58, %s59
    %p63 = pneg %p57
    %p64 = scmp.eq.s32.totalorder %s8, 1
    %p65 = por %p63, %p64
    %p66 = scmp.ne.s32.totalorder %s58, %s61
    %p67 = scmp.eq.s32.totalorder %s8, 0
    %p68 = por %p66, %p67
    %p69 = scmp.ne.s32.totalorder %s58, %s61
    %p70 = scmp.eq.s32.totalorder %s13, 1
    %p71 = por %p69, %p70
    %p72 = scmp.ne.s32.totalorder %s61, %s62
    %p73 = scmp.eq.s32.totalorder %s13, 0
    %p74 = por %p72, %p73
    %p75 = scmp.ne.s32.totalorder %s61, %s62
    %p76 = scmp.eq.s32.totalorder %s14, 1
    %p77 = por %p75, %p76
    %p79 = scmp.ne.s32.totalorder %s62, %s78
    %p80 = scmp.eq.s32.totalorder %s14, 0
    %p81 = por %p79, %p80
    %s82 = ssub.s32 %s15, %s27
    %s83 = ssub.s32 %s16, %s23
    %s84 = sor.u32 %s82, %s83
    %p85 = scmp.eq.s32.totalorder %s84, 0
    %s87 = sadd.s32 %s86, 1
    %s88 = scalar_select %p85, %s86, %s87
    %p91 = pneg %p85
    %p92 = scmp.eq.s32.totalorder %s8, 1
    %p93 = por %p91, %p92
    %p94 = scmp.ne.s32.totalorder %s86, %s89
    %p95 = scmp.eq.s32.totalorder %s8, 0
    %p96 = por %p94, %p95
    %p97 = scmp.ne.s32.totalorder %s86, %s89
    %p98 = scmp.eq.s32.totalorder %s13, 1
    %p99 = por %p97, %p98
    %p100 = scmp.ne.s32.totalorder %s89, %s90
    %p101 = scmp.eq.s32.totalorder %s13, 0
    %p102 = por %p100, %p101
    %p103 = scmp.ne.s32.totalorder %s89, %s90
    %p104 = scmp.eq.s32.totalorder %s14, 1
    %p105 = por %p103, %p104
    %p107 = scmp.ne.s32.totalorder %s90, %s106
    %p108 = scmp.eq.s32.totalorder %s14, 0
    %p109 = por %p107, %p108
    %p110 = scmp.le.s32.totalorder 1, %s8
    %p111 = scmp.lt.s32.totalorder %s8, 3
    %p112 = pnand %p110, %p111
    %p113 = pneg %p112
    // Predicated region
    $region9: #{lightconv_model_fwd.49} parent=5 // pred_check
      _
    $region10: #{lightconv_model_fwd.49} parent=5 // pred_check_branch
      %115 = sbr.rel (%p112) target = $region12
    $region11: #{lightconv_model_fwd.49} parent=5 // pred_region
      %s116 = ssub.s32 %s8, 1
      // Predicated region
      $region13: #{lightconv_model_fwd.49} parent=11 // pred_check
        %p117 = pneg %p74
      $region14: #{lightconv_model_fwd.49} parent=11 // pred_check_branch
        %119 = sbr.rel (%p117) target = $region16
      $region15: #{lightconv_model_fwd.49} parent=11 // pred_region
        %p120 = scmp.lt.s32.totalorder %s18, 0
        %s121 = scalar_select %p120, %s18, 0
        %s122 = smul.addr %s121, 8
        %s123 = scalar_lea.vmem %s1, %s122
      $region16: #{lightconv_model_fwd.49} parent=11 // pred_fallthru
        _
    $region12: #{lightconv_model_fwd.49} parent=5 // pred_fallthru
      _
    %p124 = scmp.lt.s32.totalorder %s8, 2
    // Predicated region
    $region17: #{lightconv_model_fwd.49} parent=5 // pred_check
      %p125 = pneg %p124
    $region18: #{lightconv_model_fwd.49} parent=5 // pred_check_branch
      %127 = sbr.rel (%p125) target = $region20
    $region19: #{lightconv_model_fwd.49} parent=5 // pred_region
      // Predicated region
      $region21: #{lightconv_model_fwd.49} parent=19 // pred_check
        %p128 = pneg %p42
      $region22: #{lightconv_model_fwd.49} parent=19 // pred_check_branch
        %130 = sbr.rel (%p128) target = $region24
      $region23: #{lightconv_model_fwd.49} parent=19 // pred_region
        %p131 = scmp.lt.s32.totalorder %s15, 1
        %s132 = scalar_select %p131, %s15, 1
        %p133 = scmp.lt.s32.totalorder %s16, 0
        %s134 = scalar_select %p133, %s16, 0
        %s135 = sadd.s32 %s134, %s132
        %s136 = smul.addr %s135, 8
        %s137 = scalar_lea.vmem %s0, %s136
      $region24: #{lightconv_model_fwd.49} parent=19 // pred_fallthru
        _
    $region20: #{lightconv_model_fwd.49} parent=5 // pred_fallthru
      _
    %p138 = scmp.le.s32.totalorder 1, %s8
    %p139 = scmp.lt.s32.totalorder %s8, 3
    %p140 = pnand %p138, %p139
    %p141 = pneg %p140
    // Predicated region
    $region25: #{lightconv_model_fwd.49} parent=5 // pred_check
      _
    $region26: #{lightconv_model_fwd.49} parent=5 // pred_check_branch
      %143 = sbr.rel (%p140) target = $region28
    $region27: #{lightconv_model_fwd.49} parent=5 // pred_region
      %s144 = ssub.s32 %s8, 1
      %p145 = scmp.lt.s32.totalorder %s17, 1
      %s146 = scalar_select %p145, %s17, 1
      %p147 = scmp.lt.s32.totalorder %s18, 0
      %s148 = scalar_select %p147, %s18, 0
      %s149 = sadd.s32 %s148, %s146
      %s150 = smul.addr %s149, 8
      %s151 = scalar_lea.vmem %s0, %s150
      %p152 = pneg %p48
      %p153 = pneg %p45
      %p154 = scmp.lt.s32.totalorder %s18, 0
      %s155 = scalar_select %p154, %s18, 0
      %s156 = smul.addr %s155, 8
      %s157 = scalar_lea.vmem %s1, %s156
      %p158 = pneg %p74
      %p159 = pneg %p71
      %p160 = pneg %p102
      %p161 = pneg %p99
      %p162 = scmp.lt.s32.totalorder %s17, 1
      %s163 = scalar_select %p162, %s17, 1
      %p164 = scmp.lt.s32.totalorder %s18, 0
      %s165 = scalar_select %p164, %s18, 0
      %s166 = sadd.s32 %s165, %s163
      %s167 = smul.addr %s166, 8
      %s168 = scalar_lea.vmem %s2, %s167
      %p169 = scmp.lt.s32.totalorder %s17, 1
      %s170 = scalar_select %p169, %s17, 1
      %p171 = scmp.lt.s32.totalorder %s18, 0
      %s172 = scalar_select %p171, %s18, 0
      %s173 = sadd.s32 %s172, %s170
      %s174 = smul.addr %s173, 8
      %s175 = scalar_lea.vmem %s0, %s174
      %p176 = scmp.lt.s32.totalorder %s18, 0
      %s177 = scalar_select %p176, %s18, 0
      %s178 = smul.addr %s177, 8
      %s179 = scalar_lea.vmem %s1, %s178
      %p180 = scmp.lt.s32.totalorder %s17, 1
      %s181 = scalar_select %p180, %s17, 1
      %p182 = scmp.lt.s32.totalorder %s18, 0
      %s183 = scalar_select %p182, %s18, 0
      %s184 = sadd.s32 %s183, %s181
      %s185 = smul.addr %s184, 8
      %s186 = scalar_lea.vmem %s2, %s185
      %v187 = vld [vmem:[%s175] sm:$0xff]
      %v188 = vld [vmem:[%s179] sm:$0x7f]
      %v189 = vlaneseq
      %v190 = vshrl.u32 %v189, 7
      %v191 = vlaneseq
      %v192 = vshrl.u32 %v191, 7
      %v193 = vsub.s32 6, %v192
      %v194 = vrot.slane %v188, %v193
      %v195 = vmul.f32 %v187, %v194
      %v196 = vrot.slane %v187, 2
      %vm197 = vcmp.ge.s32.totalorder %v190, 6
      %v198 = vsel %vm197, %v196, 0.0
      %v199 = vlaneseq
      %v200 = vshrl.u32 %v199, 7
      %v201 = vsub.s32 0, %v200
      %v202 = vrot.slane %v188, %v201
      %v203 = vmul.f32 %v198, %v202
      %v204 = vadd.f32 %v195, %v203
      %v205 = vrot.slane %v187, 3
      %vm206 = vcmp.ge.s32.totalorder %v190, 5
      %v207 = vsel %vm206, %v205, 0.0
      %v208 = vlaneseq
      %v209 = vshrl.u32 %v208, 7
      %v210 = vsub.s32 1, %v209
      %v211 = vrot.slane %v188, %v210
      %v212 = vmul.f32 %v207, %v211
      %v213 = vadd.f32 %v204, %v212
      %v214 = vrot.slane %v187, 4
      %vm215 = vcmp.ge.s32.totalorder %v190, 4
      %v216 = vsel %vm215, %v214, 0.0
      %v217 = vlaneseq
      %v218 = vshrl.u32 %v217, 7
      %v219 = vsub.s32 2, %v218
      %v220 = vrot.slane %v188, %v219
      %v221 = vmul.f32 %v216, %v220
      %v222 = vadd.f32 %v213, %v221
      %v223 = vrot.slane %v187, 5
      %vm224 = vcmp.ge.s32.totalorder %v190, 3
      %v225 = vsel %vm224, %v223, 0.0
      %v226 = vlaneseq
      %v227 = vshrl.u32 %v226, 7
      %v228 = vsub.s32 3, %v227
      %v229 = vrot.slane %v188, %v228
      %v230 = vmul.f32 %v225, %v229
      %v231 = vadd.f32 %v222, %v230
      %v232 = vrot.slane %v187, 6
      %vm233 = vcmp.ge.s32.totalorder %v190, 2
      %v234 = vsel %vm233, %v232, 0.0
      %v235 = vlaneseq
      %v236 = vshrl.u32 %v235, 7
      %v237 = vsub.s32 4, %v236
      %v238 = vrot.slane %v188, %v237
      %v239 = vmul.f32 %v234, %v238
      %v240 = vadd.f32 %v231, %v239
      %v241 = vrot.slane %v187, 7
      %vm242 = vcmp.ge.s32.totalorder %v190, 1
      %v243 = vsel %vm242, %v241, 0.0
      %v244 = vlaneseq
      %v245 = vshrl.u32 %v244, 7
      %v246 = vsub.s32 5, %v245
      %v247 = vrot.slane %v188, %v246
      %v248 = vmul.f32 %v243, %v247
      %v249 = vadd.f32 %v240, %v248
      %vm250 = vcmask 261120
      %251 = vst.msk [vmem:[%s186] sm:$0xff] %vm250, %v249
      %p252 = scmp.lt.s32.totalorder %s17, 1
      %s253 = scalar_select %p252, %s17, 1
      %p254 = scmp.lt.s32.totalorder %s18, 0
      %s255 = scalar_select %p254, %s18, 0
      %s256 = sadd.s32 %s255, %s253
      %s257 = smul.addr %s256, 8
      %s258 = scalar_lea.vmem %s2, %s257
      // Predicated region
      $region29: #{lightconv_model_fwd.49} parent=27 // pred_check
        %p259 = pneg %p99
      $region30: #{lightconv_model_fwd.49} parent=27 // pred_check_branch
        %261 = sbr.rel (%p259) target = $region32
      $region31: #{lightconv_model_fwd.49} parent=27 // pred_region
        _
      $region32: #{lightconv_model_fwd.49} parent=27 // pred_fallthru
        _
    $region28: #{lightconv_model_fwd.49} parent=5 // pred_fallthru
      _
    %p262 = scmp.le.s32.totalorder 2, %s8
    // Predicated region
    $region33: #{lightconv_model_fwd.49} parent=5 // pred_check
      %p263 = pneg %p262
    $region34: #{lightconv_model_fwd.49} parent=5 // pred_check_branch
      %265 = sbr.rel (%p263) target = $region36
    $region35: #{lightconv_model_fwd.49} parent=5 // pred_region
      %s266 = ssub.s32 %s8, 2
      // Predicated region
      $region37: #{lightconv_model_fwd.49} parent=35 // pred_check
        %p267 = pneg %p105
      $region38: #{lightconv_model_fwd.49} parent=35 // pred_check_branch
        %269 = sbr.rel (%p267) target = $region40
      $region39: #{lightconv_model_fwd.49} parent=35 // pred_region
        %p270 = scmp.lt.s32.totalorder %s19, 1
        %s271 = scalar_select %p270, %s19, 1
        %p272 = scmp.lt.s32.totalorder %s20, 0
        %s273 = scalar_select %p272, %s20, 0
        %s274 = sadd.s32 %s273, %s271
        %s275 = smul.addr %s274, 8
        %s276 = scalar_lea.vmem %s2, %s275
      $region40: #{lightconv_model_fwd.49} parent=35 // pred_fallthru
        _
    $region36: #{lightconv_model_fwd.49} parent=5 // pred_fallthru
      _
  $region6: #{lightconv_model_fwd.49} parent=0 // loop_footer
    %s12 = sadd.s32 1, %s8
  $region7: #{lightconv_model_fwd.49} parent=0 // loop_footer_branch
    %7 = sbr.rel target = $region3
  $region8: #{lightconv_model_fwd.49} parent=0 // loop_exit
    _

// kernel: lightconv_model_fwd.44
$region0: #{lightconv_model_fwd.44}
  #allocation0 [shape = 'u32[]', space=smem, size = 0x4, offset = 0x4, fixed_abs, tag = 'smem constant byte address 0x4 - core index']
  #allocation1 [shape = 'u32[144,128]{1,0:T(1,128)}', space=vmem, size = 0x12000, scoped, tag = 'internal scratch']
  #allocation2 [shape = 'f32[4,8,1]{2,1,0:T(8,128)}', space=vmem, size = 0x4000, scoped, tag = 'scratch operand']
  #allocation3 [shape = 'f32[4,8,1]{2,1,0:T(8,128)}', space=vmem, size = 0x4000, scoped, tag = 'scratch operand']
  #allocation4 [shape = 'f32[4,8,8]{2,1,0:T(8,128)}', space=vmem, size = 0x4000, scoped, tag = 'scratch operand']
  %s0 = inlined_call_operand.vmem [shape: f32[2,8,32], index: 0, kind: input, shape index: {}]
  %s1 = inlined_call_operand.vmem [shape: f32[2,8,32], index: 1, kind: input, shape index: {}]
  %s2 = inlined_call_operand.vmem [shape: f32[2,8,32], index: 2, kind: input, shape index: {}]
  %s3 = inlined_call_operand.vmem [shape: f32[2,8,32], index: 3, kind: output, shape index: {}]
  %s4 = sld [smem:[#allocation0]]
  $region53: #{lightconv_model_fwd.44} parent=0
    _
  %s6 = ssub.s32 1, %s4
  %s7 = scalar_select 0, %s6, %s4
  loop: start=0, step=1, limit=4
  $region2: #{lightconv_model_fwd.44} parent=0 // loop_pre_header
    _
  $region3: #{lightconv_model_fwd.44} parent=0 // loop_header
    %s9 = sphi 0, %s13
    %p10 = scmp.ge.s32.totalorder %s9, 4
    %s16 = sphi 0, %s35
    %s17 = sphi 0, %s31
    %s18 = sphi 0, %s27
    %s19 = sphi 0, %s16
    %s20 = sphi 0, %s17
    %s21 = sphi 0, %s18
    %s22 = sphi 0, %s19
    %s23 = sphi 0, %s20
    %s24 = sphi 0, %s21
    %s40 = sphi 0, %s42
    %s43 = sphi 0, %s40
    %s44 = sphi 0, %s43
    %s60 = sphi 0, %s44
    %s68 = sphi 0, %s70
    %s71 = sphi 0, %s68
    %s72 = sphi 0, %s71
    %s88 = sphi 0, %s72
    %s96 = sphi 0, %s98
    %s99 = sphi 0, %s96
    %s100 = sphi 0, %s99
    %s116 = sphi 0, %s100
    %s124 = sphi 0, %s126
    %s127 = sphi 0, %s124
    %s128 = sphi 0, %s127
    %s144 = sphi 0, %s128
  $region4: #{lightconv_model_fwd.44} parent=0 // loop_header_branch
    %12 = sbr.rel (%p10) target = $region8
  $region5: #{lightconv_model_fwd.44} parent=0 // loop_body
    %s14 = ssub.s32 %s9, 1
    %s15 = ssub.s32 %s9, 2
    %s25 = sadd.s32 1, %s18
    %p26 = scmp.ge.s32.totalorder %s25, 1
    %s27 = scalar_select %p26, 0, %s25
    %s28 = sadd.s32 1, %s17
    %s29 = scalar_select %p26, %s28, %s17
    %p30 = scmp.ge.s32.totalorder %s29, 1
    %s31 = scalar_select %p30, 0, %s29
    %s32 = sadd.s32 1, %s16
    %s33 = scalar_select %p30, %s32, %s16
    %p34 = scmp.ge.s32.totalorder %s33, 2
    %s35 = scalar_select %p34, 0, %s33
    %s36 = ssub.s32 %s16, %s35
    %s37 = ssub.s32 %s17, %s31
    %s38 = sor.u32 %s36, %s37
    %p39 = scmp.eq.s32.totalorder %s38, 0
    %s41 = sadd.s32 %s40, 1
    %s42 = scalar_select %p39, %s40, %s41
    %p45 = pneg %p39
    %p46 = scmp.eq.s32.totalorder %s9, 1
    %p47 = por %p45, %p46
    %p48 = scmp.ne.s32.totalorder %s40, %s43
    %p49 = scmp.eq.s32.totalorder %s9, 0
    %p50 = por %p48, %p49
    %p51 = scmp.ne.s32.totalorder %s40, %s43
    %p52 = scmp.eq.s32.totalorder %s14, 1
    %p53 = por %p51, %p52
    %p54 = scmp.ne.s32.totalorder %s43, %s44
    %p55 = scmp.eq.s32.totalorder %s14, 0
    %p56 = por %p54, %p55
    %p57 = scmp.ne.s32.totalorder %s43, %s44
    %p58 = scmp.eq.s32.totalorder %s15, 1
    %p59 = por %p57, %p58
    %p61 = scmp.ne.s32.totalorder %s44, %s60
    %p62 = scmp.eq.s32.totalorder %s15, 0
    %p63 = por %p61, %p62
    %s64 = ssub.s32 %s16, %s35
    %s65 = ssub.s32 %s18, %s27
    %s66 = sor.u32 %s64, %s65
    %p67 = scmp.eq.s32.totalorder %s66, 0
    %s69 = sadd.s32 %s68, 1
    %s70 = scalar_select %p67, %s68, %s69
    %p73 = pneg %p67
    %p74 = scmp.eq.s32.totalorder %s9, 1
    %p75 = por %p73, %p74
    %p76 = scmp.ne.s32.totalorder %s68, %s71
    %p77 = scmp.eq.s32.totalorder %s9, 0
    %p78 = por %p76, %p77
    %p79 = scmp.ne.s32.totalorder %s68, %s71
    %p80 = scmp.eq.s32.totalorder %s14, 1
    %p81 = por %p79, %p80
    %p82 = scmp.ne.s32.totalorder %s71, %s72
    %p83 = scmp.eq.s32.totalorder %s14, 0
    %p84 = por %p82, %p83
    %p85 = scmp.ne.s32.totalorder %s71, %s72
    %p86 = scmp.eq.s32.totalorder %s15, 1
    %p87 = por %p85, %p86
    %p89 = scmp.ne.s32.totalorder %s72, %s88
    %p90 = scmp.eq.s32.totalorder %s15, 0
    %p91 = por %p89, %p90
    %s92 = ssub.s32 %s16, %s35
    %s93 = ssub.s32 %s18, %s27
    %s94 = sor.u32 %s92, %s93
    %p95 = scmp.eq.s32.totalorder %s94, 0
    %s97 = sadd.s32 %s96, 1
    %s98 = scalar_select %p95, %s96, %s97
    %p101 = pneg %p95
    %p102 = scmp.eq.s32.totalorder %s9, 1
    %p103 = por %p101, %p102
    %p104 = scmp.ne.s32.totalorder %s96, %s99
    %p105 = scmp.eq.s32.totalorder %s9, 0
    %p106 = por %p104, %p105
    %p107 = scmp.ne.s32.totalorder %s96, %s99
    %p108 = scmp.eq.s32.totalorder %s14, 1
    %p109 = por %p107, %p108
    %p110 = scmp.ne.s32.totalorder %s99, %s100
    %p111 = scmp.eq.s32.totalorder %s14, 0
    %p112 = por %p110, %p111
    %p113 = scmp.ne.s32.totalorder %s99, %s100
    %p114 = scmp.eq.s32.totalorder %s15, 1
    %p115 = por %p113, %p114
    %p117 = scmp.ne.s32.totalorder %s100, %s116
    %p118 = scmp.eq.s32.totalorder %s15, 0
    %p119 = por %p117, %p118
    %s120 = ssub.s32 %s16, %s35
    %s121 = ssub.s32 %s17, %s31
    %s122 = sor.u32 %s120, %s121
    %p123 = scmp.eq.s32.totalorder %s122, 0
    %s125 = sadd.s32 %s124, 1
    %s126 = scalar_select %p123, %s124, %s125
    %p129 = pneg %p123
    %p130 = scmp.eq.s32.totalorder %s9, 1
    %p131 = por %p129, %p130
    %p132 = scmp.ne.s32.totalorder %s124, %s127
    %p133 = scmp.eq.s32.totalorder %s9, 0
    %p134 = por %p132, %p133
    %p135 = scmp.ne.s32.totalorder %s124, %s127
    %p136 = scmp.eq.s32.totalorder %s14, 1
    %p137 = por %p135, %p136
    %p138 = scmp.ne.s32.totalorder %s127, %s128
    %p139 = scmp.eq.s32.totalorder %s14, 0
    %p140 = por %p138, %p139
    %p141 = scmp.ne.s32.totalorder %s127, %s128
    %p142 = scmp.eq.s32.totalorder %s15, 1
    %p143 = por %p141, %p142
    %p145 = scmp.ne.s32.totalorder %s128, %s144
    %p146 = scmp.eq.s32.totalorder %s15, 0
    %p147 = por %p145, %p146
    %p148 = scmp.le.s32.totalorder 1, %s9
    %p149 = scmp.lt.s32.totalorder %s9, 3
    %p150 = pnand %p148, %p149
    %p151 = pneg %p150
    // Predicated region
    $region9: #{lightconv_model_fwd.44} parent=5 // pred_check
      _
    $region10: #{lightconv_model_fwd.44} parent=5 // pred_check_branch
      %153 = sbr.rel (%p150) target = $region12
    $region11: #{lightconv_model_fwd.44} parent=5 // pred_region
      %s154 = ssub.s32 %s9, 1
    $region12: #{lightconv_model_fwd.44} parent=5 // pred_fallthru
      _
    %p155 = scmp.lt.s32.totalorder %s9, 2
    // Predicated region
    $region13: #{lightconv_model_fwd.44} parent=5 // pred_check
      %p156 = pneg %p155
    $region14: #{lightconv_model_fwd.44} parent=5 // pred_check_branch
      %158 = sbr.rel (%p156) target = $region16
    $region15: #{lightconv_model_fwd.44} parent=5 // pred_region
      // Predicated region
      $region17: #{lightconv_model_fwd.44} parent=15 // pred_check
        %p159 = pneg %p50
      $region18: #{lightconv_model_fwd.44} parent=15 // pred_check_branch
        %161 = sbr.rel (%p159) target = $region20
      $region19: #{lightconv_model_fwd.44} parent=15 // pred_region
        %p162 = scmp.lt.s32.totalorder %s16, 1
        %s163 = scalar_select %p162, %s16, 1
        %p164 = scmp.lt.s32.totalorder %s17, 0
        %s165 = scalar_select %p164, %s17, 0
        %s166 = sadd.s32 %s165, %s163
        %s167 = smul.addr %s166, 8
        %s168 = scalar_lea.vmem %s0, %s167
      $region20: #{lightconv_model_fwd.44} parent=15 // pred_fallthru
        _
      // Predicated region
      $region21: #{lightconv_model_fwd.44} parent=15 // pred_check
        %p169 = pneg %p78
      $region22: #{lightconv_model_fwd.44} parent=15 // pred_check_branch
        %171 = sbr.rel (%p169) target = $region24
      $region23: #{lightconv_model_fwd.44} parent=15 // pred_region
        %p172 = scmp.lt.s32.totalorder %s16, 1
        %s173 = scalar_select %p172, %s16, 1
        %p174 = scmp.lt.s32.totalorder %s18, 0
        %s175 = scalar_select %p174, %s18, 0
        %s176 = sadd.s32 %s175, %s173
        %s177 = smul.addr %s176, 8
        %s178 = scalar_lea.vmem %s1, %s177
      $region24: #{lightconv_model_fwd.44} parent=15 // pred_fallthru
        _
      // Predicated region
      $region25: #{lightconv_model_fwd.44} parent=15 // pred_check
        %p179 = pneg %p106
      $region26: #{lightconv_model_fwd.44} parent=15 // pred_check_branch
        %181 = sbr.rel (%p179) target = $region28
      $region27: #{lightconv_model_fwd.44} parent=15 // pred_region
        %p182 = scmp.lt.s32.totalorder %s16, 1
        %s183 = scalar_select %p182, %s16, 1
        %p184 = scmp.lt.s32.totalorder %s18, 0
        %s185 = scalar_select %p184, %s18, 0
        %s186 = sadd.s32 %s185, %s183
        %s187 = smul.addr %s186, 8
        %s188 = scalar_lea.vmem %s2, %s187
      $region28: #{lightconv_model_fwd.44} parent=15 // pred_fallthru
        _
    $region16: #{lightconv_model_fwd.44} parent=5 // pred_fallthru
      _
    %p189 = scmp.le.s32.totalorder 1, %s9
    %p190 = scmp.lt.s32.totalorder %s9, 3
    %p191 = pnand %p189, %p190
    %p192 = pneg %p191
    // Predicated region
    $region29: #{lightconv_model_fwd.44} parent=5 // pred_check
      _
    $region30: #{lightconv_model_fwd.44} parent=5 // pred_check_branch
      %194 = sbr.rel (%p191) target = $region32
    $region31: #{lightconv_model_fwd.44} parent=5 // pred_region
      %s195 = ssub.s32 %s9, 1
      %p196 = scmp.lt.s32.totalorder %s19, 1
      %s197 = scalar_select %p196, %s19, 1
      %p198 = scmp.lt.s32.totalorder %s20, 0
      %s199 = scalar_select %p198, %s20, 0
      %s200 = sadd.s32 %s199, %s197
      %s201 = smul.addr %s200, 8
      %s202 = scalar_lea.vmem %s0, %s201
      %p203 = pneg %p56
      %p204 = pneg %p53
      %p205 = scmp.lt.s32.totalorder %s19, 1
      %s206 = scalar_select %p205, %s19, 1
      %p207 = scmp.lt.s32.totalorder %s21, 0
      %s208 = scalar_select %p207, %s21, 0
      %s209 = sadd.s32 %s208, %s206
      %s210 = smul.addr %s209, 8
      %s211 = scalar_lea.vmem %s1, %s210
      %p212 = pneg %p84
      %p213 = pneg %p81
      %p214 = scmp.lt.s32.totalorder %s19, 1
      %s215 = scalar_select %p214, %s19, 1
      %p216 = scmp.lt.s32.totalorder %s21, 0
      %s217 = scalar_select %p216, %s21, 0
      %s218 = sadd.s32 %s217, %s215
      %s219 = smul.addr %s218, 8
      %s220 = scalar_lea.vmem %s2, %s219
      %p221 = pneg %p112
      %p222 = pneg %p109
      %p223 = pneg %p140
      %p224 = pneg %p137
      %p225 = scmp.lt.s32.totalorder %s19, 1
      %s226 = scalar_select %p225, %s19, 1
      %p227 = scmp.lt.s32.totalorder %s20, 0
      %s228 = scalar_select %p227, %s20, 0
      %s229 = sadd.s32 %s228, %s226
      %s230 = smul.addr %s229, 8
      %s231 = scalar_lea.vmem %s3, %s230
      %p232 = scmp.lt.s32.totalorder %s19, 1
      %s233 = scalar_select %p232, %s19, 1
      %p234 = scmp.lt.s32.totalorder %s20, 0
      %s235 = scalar_select %p234, %s20, 0
      %s236 = sadd.s32 %s235, %s233
      %s237 = smul.addr %s236, 8
      %s238 = scalar_lea.vmem %s0, %s237
      %p239 = scmp.lt.s32.totalorder %s19, 1
      %s240 = scalar_select %p239, %s19, 1
      %p241 = scmp.lt.s32.totalorder %s21, 0
      %s242 = scalar_select %p241, %s21, 0
      %s243 = sadd.s32 %s242, %s240
      %s244 = smul.addr %s243, 8
      %s245 = scalar_lea.vmem %s1, %s244
      %p246 = scmp.lt.s32.totalorder %s19, 1
      %s247 = scalar_select %p246, %s19, 1
      %p248 = scmp.lt.s32.totalorder %s21, 0
      %s249 = scalar_select %p248, %s21, 0
      %s250 = sadd.s32 %s249, %s247
      %s251 = smul.addr %s250, 8
      %s252 = scalar_lea.vmem %s2, %s251
      %p253 = scmp.lt.s32.totalorder %s19, 1
      %s254 = scalar_select %p253, %s19, 1
      %p255 = scmp.lt.s32.totalorder %s20, 0
      %s256 = scalar_select %p255, %s20, 0
      %s257 = sadd.s32 %s256, %s254
      %s258 = smul.addr %s257, 8
      %s259 = scalar_lea.vmem %s3, %s258
      %p261 = scmp.eq.s32.totalorder %s21, 0
      // Predicated region
      $region33: #{lightconv_model_fwd.44} parent=31 // pred_check
        %p262 = pneg %p261
      $region34: #{lightconv_model_fwd.44} parent=31 // pred_check_branch
        %264 = sbr.rel (%p262) target = $region36
      $region35: #{lightconv_model_fwd.44} parent=31 // pred_region
        %vm265 = vcmask 7168
        %266 = vst.msk [vmem:[#allocation2] sm:$0xff] %vm265, -inf
        %267 = vst.msk [vmem:[#allocation2 + $0x8] sm:$0xff] %vm265, -inf
        %268 = vst.msk [vmem:[#allocation2 + $0x10] sm:$0xff] %vm265, -inf
        %269 = vst.msk [vmem:[#allocation2 + $0x18] sm:$0xff] %vm265, -inf
        %270 = vst.msk [vmem:[#allocation3] sm:$0xff] %vm265, 0.0
        %271 = vst.msk [vmem:[#allocation3 + $0x8] sm:$0xff] %vm265, 0.0
        %272 = vst.msk [vmem:[#allocation3 + $0x10] sm:$0xff] %vm265, 0.0
        %273 = vst.msk [vmem:[#allocation3 + $0x18] sm:$0xff] %vm265, 0.0
        %vm274 = vcmask 64512
        %275 = vst.msk [vmem:[#allocation4] sm:$0xff] %vm274, 0.0
        %276 = vst.msk [vmem:[#allocation4 + $0x8] sm:$0xff] %vm274, 0.0
        %277 = vst.msk [vmem:[#allocation4 + $0x10] sm:$0xff] %vm274, 0.0
        %278 = vst.msk [vmem:[#allocation4 + $0x18] sm:$0xff] %vm274, 0.0
      $region36: #{lightconv_model_fwd.44} parent=31 // pred_fallthru
        _
      %v279 = vld [vmem:[%s238] sm:$0xff]
      %v280 = vmul.f32 %v279, 0.35355338
      %v281 = vld [vmem:[%s245] sm:$0xff]
      %v282 = vld [vmem:[%s252] sm:$0xff]
      %v283 = vpack.c.bf16 %v280, %v280
      %v284 = vpack.c.bf16 %v281, %v281
      %vm285 = vcmask 64512
      %v287 = vsel %vm285, %v283, 0
      %v290 = vsel %vm285, %v284, 0
      %292 = vmatprep.subr.bf16.mxu0 0
      %293 = vmatpush1.bf16.xpose.msra.mxu0 0
      %294 = vmatprep.subr.bf16.mxu0 0
      %295 = vmatpush1.bf16.xpose.msra.mxu0 0
      %296 = vmatprep.subr.bf16.mxu0 0
      %297 = vmatpush1.bf16.xpose.msra.mxu0 0
      %298 = vmatprep.subr.bf16.mxu0 0
      %299 = vmatpush1.bf16.xpose.msra.mxu0 0
      %300 = vmatprep.subr.bf16.mxu0 0
      %301 = vmatpush1.bf16.xpose.msra.mxu0 0
      %302 = vmatprep.subr.bf16.mxu0 0
      %303 = vmatpush1.bf16.xpose.msra.mxu0 0
      %304 = vmatprep.subr.bf16.mxu0 0
      %305 = vmatpush1.bf16.xpose.msra.mxu0 0
      %306 = vmatprep.subr.bf16.mxu0 0
      %307 = vmatpush1.bf16.xpose.msra.mxu0 %v290
      %308 = vmatprep.subr.bf16.mxu0 0
      %309 = vmatpush2.bf16.xpose.msra.mxu0 0
      %310 = vmatprep.subr.bf16.mxu0 0
      %311 = vmatpush2.bf16.xpose.msra.mxu0 0
      %312 = vmatprep.subr.bf16.mxu0 0
      %313 = vmatpush2.bf16.xpose.msra.mxu0 0
      %314 = vmatprep.subr.bf16.mxu0 0
      %315 = vmatpush2.bf16.xpose.msra.mxu0 0
      %316 = vmatprep.subr.bf16.mxu0 0
      %317 = vmatpush2.bf16.xpose.msra.mxu0 0
      %318 = vmatprep.subr.bf16.mxu0 0
      %319 = vmatpush2.bf16.xpose.msra.mxu0 0
      %320 = vmatprep.subr.bf16.mxu0 0
      %321 = vmatpush2.bf16.xpose.msra.mxu0 0
      %322 = vmatprep.subr.bf16.mxu0 0
      %323 = vmatpush2.bf16.xpose.msra.mxu0 0
      %324 = vmatprep.mubr.bf16.mxu0 0
      %325 = vmatmul.mubr.bf16.gmra.mxu0 %v287
      %v326 = vpop.f32.mrf.mxu0
      %v327 = vadd.f32 0.0, %v326
      %v328 = vpop.f32.mrf.mxu0
      %v329 = vpop.f32.mrf.mxu0
      %v330 = vpop.f32.mrf.mxu0
      %331 = vdwg.mxu0
      %v332 = vld [vmem:[#allocation2] sm:$0xff]
      %v333 = vsel %vm285, %v327, -inf
      %334 = vmax.xlane.f32.xlu0 %v333
      %v335 = vpop.xlane.xlu0 %334
      %v336 = vmax.f32 %v332, %v335
      %v337 = vsub.f32 %v332, %v336
      %v338 = vmul.f32 %v337, 1.442695
      %v339 = vpow.pop %v338
      %341 = vset.pattern.permute.xlu0 0
      %342 = vperm.xlu0 %341, %v336
      %v343 = vpop.permute.xlu0 %342
      %v345 = vsub.f32 %v327, %v343
      %v346 = vmul.f32 %v345, 1.442695
      %v347 = vpow.pop %v346
      %v348 = vld [vmem:[#allocation3] sm:$0xff]
      %v349 = vmul.f32 %v339, %v348
      %v350 = vsel %vm285, %v347, 0.0
      %351 = vadd.xlane.f32.xlu0 %v350
      %v352 = vpop.xlane.xlu0 %351
      %v353 = vadd.f32 %v349, %v352
      %vm354 = vcmask 7168
      %355 = vst.msk [vmem:[#allocation3] sm:$0xff] %vm354, %v353
      %v356 = vpack.c.bf16 %v347, %v347
      %v357 = vpack.c.bf16 %v282, %v282
      %v359 = vsel %vm285, %v356, 0
      %vm361 = vcmask 1043456
      %v363 = vsel %vm361, %v357, 0
      %365 = vmatprep.subr.bf16.mxu0 0
      %366 = vmatpush1.bf16.msra.mxu0 0
      %367 = vmatprep.subr.bf16.mxu0 0
      %368 = vmatpush1.bf16.msra.mxu0 0
      %369 = vmatprep.subr.bf16.mxu0 0
      %370 = vmatpush1.bf16.msra.mxu0 0
      %371 = vmatprep.subr.bf16.mxu0 0
      %372 = vmatpush1.bf16.msra.mxu0 0
      %373 = vmatprep.subr.bf16.mxu0 0
      %374 = vmatpush1.bf16.msra.mxu0 0
      %375 = vmatprep.subr.bf16.mxu0 0
      %376 = vmatpush1.bf16.msra.mxu0 0
      %377 = vmatprep.subr.bf16.mxu0 0
      %378 = vmatpush1.bf16.msra.mxu0 0
      %379 = vmatprep.subr.bf16.mxu0 0
      %380 = vmatpush1.bf16.msra.mxu0 %v363
      %381 = vmatprep.subr.bf16.mxu0 0
      %382 = vmatpush2.bf16.msra.mxu0 0
      %383 = vmatprep.subr.bf16.mxu0 0
      %384 = vmatpush2.bf16.msra.mxu0 0
      %385 = vmatprep.subr.bf16.mxu0 0
      %386 = vmatpush2.bf16.msra.mxu0 0
      %387 = vmatprep.subr.bf16.mxu0 0
      %388 = vmatpush2.bf16.msra.mxu0 0
      %389 = vmatprep.subr.bf16.mxu0 0
      %390 = vmatpush2.bf16.msra.mxu0 0
      %391 = vmatprep.subr.bf16.mxu0 0
      %392 = vmatpush2.bf16.msra.mxu0 0
      %393 = vmatprep.subr.bf16.mxu0 0
      %394 = vmatpush2.bf16.msra.mxu0 0
      %395 = vmatprep.subr.bf16.mxu0 0
      %396 = vmatpush2.bf16.msra.mxu0 0
      %397 = vmatprep.mubr.bf16.mxu0 0
      %398 = vmatmul.mubr.bf16.gmra.mxu0 %v359
      %v399 = vpop.f32.mrf.mxu0
      %v400 = vadd.f32 0.0, %v399
      %v401 = vpop.f32.mrf.mxu0
      %v402 = vpop.f32.mrf.mxu0
      %v403 = vpop.f32.mrf.mxu0
      %404 = vdwg.mxu0
      %v405 = vld [vmem:[#allocation4] sm:$0xff]
      %407 = vset.pattern.permute.xlu0 0
      %408 = vperm.xlu0 %407, %v339
      %v409 = vpop.permute.xlu0 %408
      %v411 = vmul.f32 %v409, %v405
      %v412 = vadd.f32 %v411, %v400
      %413 = vst.msk [vmem:[#allocation4] sm:$0xff] %vm285, %v412
      %414 = vst.msk [vmem:[#allocation2] sm:$0xff] %vm354, %v336
      %416 = vrot.lane.b32.xlu0 %v283, 120
      %v417 = vpop.permute.xlu0 %416
      %419 = vrot.lane.b32.xlu0 %v284, 120
      %v420 = vpop.permute.xlu0 %419
      %v422 = vsel %vm285, %v417, 0
      %v425 = vsel %vm285, %v420, 0
      %427 = vmatprep.subr.bf16.mxu0 0
      %428 = vmatpush1.bf16.xpose.msra.mxu0 0
      %429 = vmatprep.subr.bf16.mxu0 0
      %430 = vmatpush1.bf16.xpose.msra.mxu0 0
      %431 = vmatprep.subr.bf16.mxu0 0
      %432 = vmatpush1.bf16.xpose.msra.mxu0 0
      %433 = vmatprep.subr.bf16.mxu0 0
      %434 = vmatpush1.bf16.xpose.msra.mxu0 0
      %435 = vmatprep.subr.bf16.mxu0 0
      %436 = vmatpush1.bf16.xpose.msra.mxu0 0
      %437 = vmatprep.subr.bf16.mxu0 0
      %438 = vmatpush1.bf16.xpose.msra.mxu0 0
      %439 = vmatprep.subr.bf16.mxu0 0
      %440 = vmatpush1.bf16.xpose.msra.mxu0 0
      %441 = vmatprep.subr.bf16.mxu0 0
      %442 = vmatpush1.bf16.xpose.msra.mxu0 %v425
      %443 = vmatprep.subr.bf16.mxu0 0
      %444 = vmatpush2.bf16.xpose.msra.mxu0 0
      %445 = vmatprep.subr.bf16.mxu0 0
      %446 = vmatpush2.bf16.xpose.msra.mxu0 0
      %447 = vmatprep.subr.bf16.mxu0 0
      %448 = vmatpush2.bf16.xpose.msra.mxu0 0
      %449 = vmatprep.subr.bf16.mxu0 0
      %450 = vmatpush2.bf16.xpose.msra.mxu0 0
      %451 = vmatprep.subr.bf16.mxu0 0
      %452 = vmatpush2.bf16.xpose.msra.mxu0 0
      %453 = vmatprep.subr.bf16.mxu0 0
      %454 = vmatpush2.bf16.xpose.msra.mxu0 0
      %455 = vmatprep.subr.bf16.mxu0 0
      %456 = vmatpush2.bf16.xpose.msra.mxu0 0
      %457 = vmatprep.subr.bf16.mxu0 0
      %458 = vmatpush2.bf16.xpose.msra.mxu0 0
      %459 = vmatprep.mubr.bf16.mxu0 0
      %460 = vmatmul.mubr.bf16.gmra.mxu0 %v422
      %v461 = vpop.f32.mrf.mxu0
      %v462 = vadd.f32 0.0, %v461
      %v463 = vpop.f32.mrf.mxu0
      %v464 = vpop.f32.mrf.mxu0
      %v465 = vpop.f32.mrf.mxu0
      %466 = vdwg.mxu0
      %s467 = scalar_lea.vmem [#allocation2], 8
      %v468 = vld [vmem:[%s467] sm:$0xff]
      %v469 = vsel %vm285, %v462, -inf
      %470 = vmax.xlane.f32.xlu0 %v469
      %v471 = vpop.xlane.xlu0 %470
      %v472 = vmax.f32 %v468, %v471
      %v473 = vsub.f32 %v468, %v472
      %v474 = vmul.f32 %v473, 1.442695
      %v475 = vpow.pop %v474
      %477 = vset.pattern.permute.xlu0 0
      %478 = vperm.xlu0 %477, %v472
      %v479 = vpop.permute.xlu0 %478
      %v481 = vsub.f32 %v462, %v479
      %v482 = vmul.f32 %v481, 1.442695
      %v483 = vpow.pop %v482
      %s484 = scalar_lea.vmem [#allocation3], 8
      %v485 = vld [vmem:[%s484] sm:$0xff]
      %v486 = vmul.f32 %v475, %v485
      %v487 = vsel %vm285, %v483, 0.0
      %488 = vadd.xlane.f32.xlu0 %v487
      %v489 = vpop.xlane.xlu0 %488
      %v490 = vadd.f32 %v486, %v489
      %491 = vst.msk [vmem:[%s484] sm:$0xff] %vm354, %v490
      %v492 = vpack.c.bf16 %v483, %v483
      %494 = vrot.lane.b32.xlu0 %v357, 120
      %v495 = vpop.permute.xlu0 %494
      %v497 = vsel %vm285, %v492, 0
      %v500 = vsel %vm361, %v495, 0
      %502 = vmatprep.subr.bf16.mxu0 0
      %503 = vmatpush1.bf16.msra.mxu0 0
      %504 = vmatprep.subr.bf16.mxu0 0
      %505 = vmatpush1.bf16.msra.mxu0 0
      %506 = vmatprep.subr.bf16.mxu0 0
      %507 = vmatpush1.bf16.msra.mxu0 0
      %508 = vmatprep.subr.bf16.mxu0 0
      %509 = vmatpush1.bf16.msra.mxu0 0
      %510 = vmatprep.subr.bf16.mxu0 0
      %511 = vmatpush1.bf16.msra.mxu0 0
      %512 = vmatprep.subr.bf16.mxu0 0
      %513 = vmatpush1.bf16.msra.mxu0 0
      %514 = vmatprep.subr.bf16.mxu0 0
      %515 = vmatpush1.bf16.msra.mxu0 0
      %516 = vmatprep.subr.bf16.mxu0 0
      %517 = vmatpush1.bf16.msra.mxu0 %v500
      %518 = vmatprep.subr.bf16.mxu0 0
      %519 = vmatpush2.bf16.msra.mxu0 0
      %520 = vmatprep.subr.bf16.mxu0 0
      %521 = vmatpush2.bf16.msra.mxu0 0
      %522 = vmatprep.subr.bf16.mxu0 0
      %523 = vmatpush2.bf16.msra.mxu0 0
      %524 = vmatprep.subr.bf16.mxu0 0
      %525 = vmatpush2.bf16.msra.mxu0 0
      %526 = vmatprep.subr.bf16.mxu0 0
      %527 = vmatpush2.bf16.msra.mxu0 0
      %528 = vmatprep.subr.bf16.mxu0 0
      %529 = vmatpush2.bf16.msra.mxu0 0
      %530 = vmatprep.subr.bf16.mxu0 0
      %531 = vmatpush2.bf16.msra.mxu0 0
      %532 = vmatprep.subr.bf16.mxu0 0
      %533 = vmatpush2.bf16.msra.mxu0 0
      %534 = vmatprep.mubr.bf16.mxu0 0
      %535 = vmatmul.mubr.bf16.gmra.mxu0 %v497
      %v536 = vpop.f32.mrf.mxu0
      %v537 = vadd.f32 0.0, %v536
      %v538 = vpop.f32.mrf.mxu0
      %v539 = vpop.f32.mrf.mxu0
      %v540 = vpop.f32.mrf.mxu0
      %541 = vdwg.mxu0
      %s542 = scalar_lea.vmem [#allocation4], 8
      %v543 = vld [vmem:[%s542] sm:$0xff]
      %545 = vset.pattern.permute.xlu0 0
      %546 = vperm.xlu0 %545, %v475
      %v547 = vpop.permute.xlu0 %546
      %v549 = vmul.f32 %v547, %v543
      %v550 = vadd.f32 %v549, %v537
      %551 = vst.msk [vmem:[%s542] sm:$0xff] %vm285, %v550
      %552 = vst.msk [vmem:[%s467] sm:$0xff] %vm354, %v472
      %553 = vrot.lane.b32.xlu0 %v283, 112
      %v554 = vpop.permute.xlu0 %553
      %555 = vrot.lane.b32.xlu0 %v284, 112
      %v556 = vpop.permute.xlu0 %555
      %v558 = vsel %vm285, %v554, 0
      %v561 = vsel %vm285, %v556, 0
      %563 = vmatprep.subr.bf16.mxu0 0
      %564 = vmatpush1.bf16.xpose.msra.mxu0 0
      %565 = vmatprep.subr.bf16.mxu0 0
      %566 = vmatpush1.bf16.xpose.msra.mxu0 0
      %567 = vmatprep.subr.bf16.mxu0 0
      %568 = vmatpush1.bf16.xpose.msra.mxu0 0
      %569 = vmatprep.subr.bf16.mxu0 0
      %570 = vmatpush1.bf16.xpose.msra.mxu0 0
      %571 = vmatprep.subr.bf16.mxu0 0
      %572 = vmatpush1.bf16.xpose.msra.mxu0 0
      %573 = vmatprep.subr.bf16.mxu0 0
      %574 = vmatpush1.bf16.xpose.msra.mxu0 0
      %575 = vmatprep.subr.bf16.mxu0 0
      %576 = vmatpush1.bf16.xpose.msra.mxu0 0
      %577 = vmatprep.subr.bf16.mxu0 0
      %578 = vmatpush1.bf16.xpose.msra.mxu0 %v561
      %579 = vmatprep.subr.bf16.mxu0 0
      %580 = vmatpush2.bf16.xpose.msra.mxu0 0
      %581 = vmatprep.subr.bf16.mxu0 0
      %582 = vmatpush2.bf16.xpose.msra.mxu0 0
      %583 = vmatprep.subr.bf16.mxu0 0
      %584 = vmatpush2.bf16.xpose.msra.mxu0 0
      %585 = vmatprep.subr.bf16.mxu0 0
      %586 = vmatpush2.bf16.xpose.msra.mxu0 0
      %587 = vmatprep.subr.bf16.mxu0 0
      %588 = vmatpush2.bf16.xpose.msra.mxu0 0
      %589 = vmatprep.subr.bf16.mxu0 0
      %590 = vmatpush2.bf16.xpose.msra.mxu0 0
      %591 = vmatprep.subr.bf16.mxu0 0
      %592 = vmatpush2.bf16.xpose.msra.mxu0 0
      %593 = vmatprep.subr.bf16.mxu0 0
      %594 = vmatpush2.bf16.xpose.msra.mxu0 0
      %595 = vmatprep.mubr.bf16.mxu0 0
      %596 = vmatmul.mubr.bf16.gmra.mxu0 %v558
      %v597 = vpop.f32.mrf.mxu0
      %v598 = vadd.f32 0.0, %v597
      %v599 = vpop.f32.mrf.mxu0
      %v600 = vpop.f32.mrf.mxu0
      %v601 = vpop.f32.mrf.mxu0
      %602 = vdwg.mxu0
      %s603 = scalar_lea.vmem [#allocation2], 16
      %v604 = vld [vmem:[%s603] sm:$0xff]
      %v605 = vsel %vm285, %v598, -inf
      %606 = vmax.xlane.f32.xlu0 %v605
      %v607 = vpop.xlane.xlu0 %606
      %v608 = vmax.f32 %v604, %v607
      %v609 = vsub.f32 %v604, %v608
      %v610 = vmul.f32 %v609, 1.442695
      %v611 = vpow.pop %v610
      %613 = vset.pattern.permute.xlu0 0
      %614 = vperm.xlu0 %613, %v608
      %v615 = vpop.permute.xlu0 %614
      %v617 = vsub.f32 %v598, %v615
      %v618 = vmul.f32 %v617, 1.442695
      %v619 = vpow.pop %v618
      %s620 = scalar_lea.vmem [#allocation3], 16
      %v621 = vld [vmem:[%s620] sm:$0xff]
      %v622 = vmul.f32 %v611, %v621
      %v623 = vsel %vm285, %v619, 0.0
      %624 = vadd.xlane.f32.xlu0 %v623
      %v625 = vpop.xlane.xlu0 %624
      %v626 = vadd.f32 %v622, %v625
      %627 = vst.msk [vmem:[%s620] sm:$0xff] %vm354, %v626
      %v628 = vpack.c.bf16 %v619, %v619
      %629 = vrot.lane.b32.xlu0 %v357, 112
      %v630 = vpop.permute.xlu0 %629
      %v632 = vsel %vm285, %v628, 0
      %v635 = vsel %vm361, %v630, 0
      %637 = vmatprep.subr.bf16.mxu0 0
      %638 = vmatpush1.bf16.msra.mxu0 0
      %639 = vmatprep.subr.bf16.mxu0 0
      %640 = vmatpush1.bf16.msra.mxu0 0
      %641 = vmatprep.subr.bf16.mxu0 0
      %642 = vmatpush1.bf16.msra.mxu0 0
      %643 = vmatprep.subr.bf16.mxu0 0
      %644 = vmatpush1.bf16.msra.mxu0 0
      %645 = vmatprep.subr.bf16.mxu0 0
      %646 = vmatpush1.bf16.msra.mxu0 0
      %647 = vmatprep.subr.bf16.mxu0 0
      %648 = vmatpush1.bf16.msra.mxu0 0
      %649 = vmatprep.subr.bf16.mxu0 0
      %650 = vmatpush1.bf16.msra.mxu0 0
      %651 = vmatprep.subr.bf16.mxu0 0
      %652 = vmatpush1.bf16.msra.mxu0 %v635
      %653 = vmatprep.subr.bf16.mxu0 0
      %654 = vmatpush2.bf16.msra.mxu0 0
      %655 = vmatprep.subr.bf16.mxu0 0
      %656 = vmatpush2.bf16.msra.mxu0 0
      %657 = vmatprep.subr.bf16.mxu0 0
      %658 = vmatpush2.bf16.msra.mxu0 0
      %659 = vmatprep.subr.bf16.mxu0 0
      %660 = vmatpush2.bf16.msra.mxu0 0
      %661 = vmatprep.subr.bf16.mxu0 0
      %662 = vmatpush2.bf16.msra.mxu0 0
      %663 = vmatprep.subr.bf16.mxu0 0
      %664 = vmatpush2.bf16.msra.mxu0 0
      %665 = vmatprep.subr.bf16.mxu0 0
      %666 = vmatpush2.bf16.msra.mxu0 0
      %667 = vmatprep.subr.bf16.mxu0 0
      %668 = vmatpush2.bf16.msra.mxu0 0
      %669 = vmatprep.mubr.bf16.mxu0 0
      %670 = vmatmul.mubr.bf16.gmra.mxu0 %v632
      %v671 = vpop.f32.mrf.mxu0
      %v672 = vadd.f32 0.0, %v671
      %v673 = vpop.f32.mrf.mxu0
      %v674 = vpop.f32.mrf.mxu0
      %v675 = vpop.f32.mrf.mxu0
      %676 = vdwg.mxu0
      %s677 = scalar_lea.vmem [#allocation4], 16
      %v678 = vld [vmem:[%s677] sm:$0xff]
      %680 = vset.pattern.permute.xlu0 0
      %681 = vperm.xlu0 %680, %v611
      %v682 = vpop.permute.xlu0 %681
      %v684 = vmul.f32 %v682, %v678
      %v685 = vadd.f32 %v684, %v672
      %686 = vst.msk [vmem:[%s677] sm:$0xff] %vm285, %v685
      %687 = vst.msk [vmem:[%s603] sm:$0xff] %vm354, %v608
      %688 = vrot.lane.b32.xlu0 %v283, 104
      %v689 = vpop.permute.xlu0 %688
      %690 = vrot.lane.b32.xlu0 %v284, 104
      %v691 = vpop.permute.xlu0 %690
      %v693 = vsel %vm285, %v689, 0
      %v696 = vsel %vm285, %v691, 0
      %698 = vmatprep.subr.bf16.mxu0 0
      %699 = vmatpush1.bf16.xpose.msra.mxu0 0
      %700 = vmatprep.subr.bf16.mxu0 0
      %701 = vmatpush1.bf16.xpose.msra.mxu0 0
      %702 = vmatprep.subr.bf16.mxu0 0
      %703 = vmatpush1.bf16.xpose.msra.mxu0 0
      %704 = vmatprep.subr.bf16.mxu0 0
      %705 = vmatpush1.bf16.xpose.msra.mxu0 0
      %706 = vmatprep.subr.bf16.mxu0 0
      %707 = vmatpush1.bf16.xpose.msra.mxu0 0
      %708 = vmatprep.subr.bf16.mxu0 0
      %709 = vmatpush1.bf16.xpose.msra.mxu0 0
      %710 = vmatprep.subr.bf16.mxu0 0
      %711 = vmatpush1.bf16.xpose.msra.mxu0 0
      %712 = vmatprep.subr.bf16.mxu0 0
      %713 = vmatpush1.bf16.xpose.msra.mxu0 %v696
      %714 = vmatprep.subr.bf16.mxu0 0
      %715 = vmatpush2.bf16.xpose.msra.mxu0 0
      %716 = vmatprep.subr.bf16.mxu0 0
      %717 = vmatpush2.bf16.xpose.msra.mxu0 0
      %718 = vmatprep.subr.bf16.mxu0 0
      %719 = vmatpush2.bf16.xpose.msra.mxu0 0
      %720 = vmatprep.subr.bf16.mxu0 0
      %721 = vmatpush2.bf16.xpose.msra.mxu0 0
      %722 = vmatprep.subr.bf16.mxu0 0
      %723 = vmatpush2.bf16.xpose.msra.mxu0 0
      %724 = vmatprep.subr.bf16.mxu0 0
      %725 = vmatpush2.bf16.xpose.msra.mxu0 0
      %726 = vmatprep.subr.bf16.mxu0 0
      %727 = vmatpush2.bf16.xpose.msra.mxu0 0
      %728 = vmatprep.subr.bf16.mxu0 0
      %729 = vmatpush2.bf16.xpose.msra.mxu0 0
      %730 = vmatprep.mubr.bf16.mxu0 0
      %731 = vmatmul.mubr.bf16.gmra.mxu0 %v693
      %v732 = vpop.f32.mrf.mxu0
      %v733 = vadd.f32 0.0, %v732
      %v734 = vpop.f32.mrf.mxu0
      %v735 = vpop.f32.mrf.mxu0
      %v736 = vpop.f32.mrf.mxu0
      %737 = vdwg.mxu0
      %s738 = scalar_lea.vmem [#allocation2], 24
      %v739 = vld [vmem:[%s738] sm:$0xff]
      %v740 = vsel %vm285, %v733, -inf
      %741 = vmax.xlane.f32.xlu0 %v740
      %v742 = vpop.xlane.xlu0 %741
      %v743 = vmax.f32 %v739, %v742
      %v744 = vsub.f32 %v739, %v743
      %v745 = vmul.f32 %v744, 1.442695
      %v746 = vpow.pop %v745
      %748 = vset.pattern.permute.xlu0 0
      %749 = vperm.xlu0 %748, %v743
      %v750 = vpop.permute.xlu0 %749
      %v752 = vsub.f32 %v733, %v750
      %v753 = vmul.f32 %v752, 1.442695
      %v754 = vpow.pop %v753
      %s755 = scalar_lea.vmem [#allocation3], 24
      %v756 = vld [vmem:[%s755] sm:$0xff]
      %v757 = vmul.f32 %v746, %v756
      %v758 = vsel %vm285, %v754, 0.0
      %759 = vadd.xlane.f32.xlu0 %v758
      %v760 = vpop.xlane.xlu0 %759
      %v761 = vadd.f32 %v757, %v760
      %762 = vst.msk [vmem:[%s755] sm:$0xff] %vm354, %v761
      %v763 = vpack.c.bf16 %v754, %v754
      %764 = vrot.lane.b32.xlu0 %v357, 104
      %v765 = vpop.permute.xlu0 %764
      %v767 = vsel %vm285, %v763, 0
      %v770 = vsel %vm361, %v765, 0
      %772 = vmatprep.subr.bf16.mxu0 0
      %773 = vmatpush1.bf16.msra.mxu0 0
      %774 = vmatprep.subr.bf16.mxu0 0
      %775 = vmatpush1.bf16.msra.mxu0 0
      %776 = vmatprep.subr.bf16.mxu0 0
      %777 = vmatpush1.bf16.msra.mxu0 0
      %778 = vmatprep.subr.bf16.mxu0 0
      %779 = vmatpush1.bf16.msra.mxu0 0
      %780 = vmatprep.subr.bf16.mxu0 0
      %781 = vmatpush1.bf16.msra.mxu0 0
      %782 = vmatprep.subr.bf16.mxu0 0
      %783 = vmatpush1.bf16.msra.mxu0 0
      %784 = vmatprep.subr.bf16.mxu0 0
      %785 = vmatpush1.bf16.msra.mxu0 0
      %786 = vmatprep.subr.bf16.mxu0 0
      %787 = vmatpush1.bf16.msra.mxu0 %v770
      %788 = vmatprep.subr.bf16.mxu0 0
      %789 = vmatpush2.bf16.msra.mxu0 0
      %790 = vmatprep.subr.bf16.mxu0 0
      %791 = vmatpush2.bf16.msra.mxu0 0
      %792 = vmatprep.subr.bf16.mxu0 0
      %793 = vmatpush2.bf16.msra.mxu0 0
      %794 = vmatprep.subr.bf16.mxu0 0
      %795 = vmatpush2.bf16.msra.mxu0 0
      %796 = vmatprep.subr.bf16.mxu0 0
      %797 = vmatpush2.bf16.msra.mxu0 0
      %798 = vmatprep.subr.bf16.mxu0 0
      %799 = vmatpush2.bf16.msra.mxu0 0
      %800 = vmatprep.subr.bf16.mxu0 0
      %801 = vmatpush2.bf16.msra.mxu0 0
      %802 = vmatprep.subr.bf16.mxu0 0
      %803 = vmatpush2.bf16.msra.mxu0 0
      %804 = vmatprep.mubr.bf16.mxu0 0
      %805 = vmatmul.mubr.bf16.gmra.mxu0 %v767
      %v806 = vpop.f32.mrf.mxu0
      %v807 = vadd.f32 0.0, %v806
      %v808 = vpop.f32.mrf.mxu0
      %v809 = vpop.f32.mrf.mxu0
      %v810 = vpop.f32.mrf.mxu0
      %811 = vdwg.mxu0
      %s812 = scalar_lea.vmem [#allocation4], 24
      %v813 = vld [vmem:[%s812] sm:$0xff]
      %815 = vset.pattern.permute.xlu0 0
      %816 = vperm.xlu0 %815, %v746
      %v817 = vpop.permute.xlu0 %816
      %v819 = vmul.f32 %v817, %v813
      %v820 = vadd.f32 %v819, %v807
      %821 = vst.msk [vmem:[%s812] sm:$0xff] %vm285, %v820
      %822 = vst.msk [vmem:[%s738] sm:$0xff] %vm354, %v743
      // Predicated region
      $region37: #{lightconv_model_fwd.44} parent=31 // pred_check
        %p823 = pneg %p261
      $region38: #{lightconv_model_fwd.44} parent=31 // pred_check_branch
        %825 = sbr.rel (%p823) target = $region40
      $region39: #{lightconv_model_fwd.44} parent=31 // pred_region
        %v826 = vld [vmem:[#allocation4] sm:$0xff]
        %v827 = vld [vmem:[#allocation3] sm:$0xff]
        %v828 = vrcp.pop %v827
        %830 = vset.pattern.permute.xlu0 0
        %831 = vperm.xlu0 %830, %v828
        %v832 = vpop.permute.xlu0 %831
        %v834 = vmul.f32 %v826, %v832
        %v835 = vld [vmem:[%s542] sm:$0xff]
        %v836 = vld [vmem:[%s484] sm:$0xff]
        %v837 = vrcp.pop %v836
        %839 = vset.pattern.permute.xlu0 0
        %840 = vperm.xlu0 %839, %v837
        %v841 = vpop.permute.xlu0 %840
        %v843 = vmul.f32 %v835, %v841
        %v844 = vld [vmem:[%s677] sm:$0xff]
        %v845 = vld [vmem:[%s620] sm:$0xff]
        %v846 = vrcp.pop %v845
        %848 = vset.pattern.permute.xlu0 0
        %849 = vperm.xlu0 %848, %v846
        %v850 = vpop.permute.xlu0 %849
        %v852 = vmul.f32 %v844, %v850
        %v853 = vld [vmem:[%s812] sm:$0xff]
        %v854 = vld [vmem:[%s755] sm:$0xff]
        %v855 = vrcp.pop %v854
        %857 = vset.pattern.permute.xlu0 0
        %858 = vperm.xlu0 %857, %v855
        %v859 = vpop.permute.xlu0 %858
        %v861 = vmul.f32 %v853, %v859
        %863 = vrot.lane.b32.xlu0 %v843, 8
        %v864 = vpop.permute.xlu0 %863
        %867 = vrot.lane.b32.xlu0 %v852, 16
        %v868 = vpop.permute.xlu0 %867
        %871 = vrot.lane.b32.xlu0 %v861, 24
        %v872 = vpop.permute.xlu0 %871
        %v874 = vsel %vm285, %v834, %v864
        %vm875 = vcmask 130048
        %v876 = vsel %vm875, %v874, %v868
        %vm877 = vcmask 195584
        %v878 = vsel %vm877, %v876, %v872
        %vm879 = vcmask 261120
        %880 = vst.msk [vmem:[%s259] sm:$0xff] %vm879, %v878
      $region40: #{lightconv_model_fwd.44} parent=31 // pred_fallthru
        _
      %p881 = scmp.lt.s32.totalorder %s19, 1
      %s882 = scalar_select %p881, %s19, 1
      %p883 = scmp.lt.s32.totalorder %s20, 0
      %s884 = scalar_select %p883, %s20, 0
      %s885 = sadd.s32 %s884, %s882
      %s886 = smul.addr %s885, 8
      %s887 = scalar_lea.vmem %s3, %s886
      // Predicated region
      $region41: #{lightconv_model_fwd.44} parent=31 // pred_check
        %p888 = pneg %p137
      $region42: #{lightconv_model_fwd.44} parent=31 // pred_check_branch
        %890 = sbr.rel (%p888) target = $region44
      $region43: #{lightconv_model_fwd.44} parent=31 // pred_region
        _
      $region44: #{lightconv_model_fwd.44} parent=31 // pred_fallthru
        _
    $region32: #{lightconv_model_fwd.44} parent=5 // pred_fallthru
      _
    %p891 = scmp.le.s32.totalorder 2, %s9
    // Predicated region
    $region45: #{lightconv_model_fwd.44} parent=5 // pred_check
      %p892 = pneg %p891
    $region46: #{lightconv_model_fwd.44} parent=5 // pred_check_branch
      %894 = sbr.rel (%p892) target = $region48
    $region47: #{lightconv_model_fwd.44} parent=5 // pred_region
      %s895 = ssub.s32 %s9, 2
      // Predicated region
      $region49: #{lightconv_model_fwd.44} parent=47 // pred_check
        %p896 = pneg %p143
      $region50: #{lightconv_model_fwd.44} parent=47 // pred_check_branch
        %898 = sbr.rel (%p896) target = $region52
      $region51: #{lightconv_model_fwd.44} parent=47 // pred_region
        %p899 = scmp.lt.s32.totalorder %s22, 1
        %s900 = scalar_select %p899, %s22, 1
        %p901 = scmp.lt.s32.totalorder %s23, 0
        %s902 = scalar_select %p901, %s23, 0
        %s903 = sadd.s32 %s902, %s900
        %s904 = smul.addr %s903, 8
        %s905 = scalar_lea.vmem %s3, %s904
      $region52: #{lightconv_model_fwd.44} parent=47 // pred_fallthru
        _
    $region48: #{lightconv_model_fwd.44} parent=5 // pred_fallthru
      _
  $region6: #{lightconv_model_fwd.44} parent=0 // loop_footer
    %s13 = sadd.s32 1, %s9
  $region7: #{lightconv_model_fwd.44} parent=0 // loop_footer_branch
    %8 = sbr.rel target = $region3
  $region8: #{lightconv_model_fwd.44} parent=0 // loop_exit
    _

// kernel: lightconv_model_fwd.57
$region0: #{lightconv_model_fwd.57}
  #allocation0 [shape = 'u32[]', space=smem, size = 0x4, offset = 0x4, fixed_abs, tag = 'smem constant byte address 0x4 - core index']
  #allocation1 [shape = 'u32[144,128]{1,0:T(1,128)}', space=vmem, size = 0x12000, scoped, tag = 'internal scratch']
  %s0 = inlined_call_operand.vmem [shape: f32[16,32], index: 0, kind: input, shape index: {}]
  %s1 = inlined_call_operand.vmem [shape: bf16[32,32], index: 1, kind: input, shape index: {}]
  %s2 = inlined_call_operand.vmem [shape: f32[1,32], index: 2, kind: input, shape index: {}]
  %s3 = inlined_call_operand.hbm [shape: f32[16,32], index: 3, kind: output, shape index: {}]
  %s4 = sld [smem:[#allocation0]]
  $region30: #{lightconv_model_fwd.57} parent=0
    _
  %s6 = ssub.s32 1, %s4
  %s7 = scalar_select 0, %s6, %s4
  $region1: #{lightconv_model_fwd.57} parent=0
    #allocation2 [shape = 'u8[8192]{0}', space=vmem, size = 0x2000, scoped, tag = 'output window, operand 0, single buffered']
    #allocation3 [shape = 's32[1]{0}', space=sflag, size = 0x4, scoped, tag = 'scoped memory for lightconv_model_fwd.57']
    %8 = vsyncpa [#allocation3], 0
    // Predicated region
    $region2: #{lightconv_model_fwd.57} parent=1 // pred_check
      _
    $region3: #{lightconv_model_fwd.57} parent=1 // pred_check_branch
      %10 = sbr.rel (0) target = $region5
    $region4: #{lightconv_model_fwd.57} parent=1 // pred_region
      _
    $region5: #{lightconv_model_fwd.57} parent=1 // pred_fallthru
      _
    // Predicated region
    $region6: #{lightconv_model_fwd.57} parent=1 // pred_check
      _
    $region7: #{lightconv_model_fwd.57} parent=1 // pred_check_branch
      %12 = sbr.rel (0) target = $region9
    $region8: #{lightconv_model_fwd.57} parent=1 // pred_region
      _
    $region9: #{lightconv_model_fwd.57} parent=1 // pred_fallthru
      _
    // Predicated region
    $region10: #{lightconv_model_fwd.57} parent=1 // pred_check
      _
    $region11: #{lightconv_model_fwd.57} parent=1 // pred_check_branch
      %14 = sbr.rel (0) target = $region13
    $region12: #{lightconv_model_fwd.57} parent=1 // pred_region
      _
    $region13: #{lightconv_model_fwd.57} parent=1 // pred_fallthru
      _
    %p16 = scmp.eq.s32.totalorder 0, 0
    // Predicated region
    $region14: #{lightconv_model_fwd.57} parent=1 // pred_check
      %p17 = pneg %p16
    $region15: #{lightconv_model_fwd.57} parent=1 // pred_check_branch
      %19 = sbr.rel (%p17) target = $region17
    $region16: #{lightconv_model_fwd.57} parent=1 // pred_region
      %vm20 = vcmask 261120
      %21 = vst.msk [vmem:[#allocation2] sm:$0xff] %vm20, 0.0
      %22 = vst.msk [vmem:[#allocation2 + $0x8] sm:$0xff] %vm20, 0.0
    $region17: #{lightconv_model_fwd.57} parent=1 // pred_fallthru
      _
    %v23 = vld [vmem:[#allocation2] sm:$0xff]
    %v24 = vld [vmem:[#allocation2 + $0x8] sm:$0xff]
    %v25 = vld [vmem:[%s0] sm:$0xff]
    %v26 = vld [vmem:[%s0 + $0x8] sm:$0xff]
    %v27 = vpack.c.bf16 %v26, %v25
    %v28 = vld [vmem:[%s1] sm:$0xf]
    %v29 = vld [vmem:[%s1 + $0x4] sm:$0xf]
    %v30 = vld [vmem:[%s1 + $0x8] sm:$0xf]
    %v31 = vld [vmem:[%s1 + $0xc] sm:$0xf]
    %v36 = vunpack.c.l.b16 %v28
    %v37 = vunpack.c.l.b16 %v29
    %v38 = vunpack.c.l.b16 %v30
    %v39 = vunpack.c.l.b16 %v31
    %v40 = vpack.c.b16 %v37, %v36
    %v41 = vpack.c.b16 %v39, %v38
    %vm44 = vcmask 261120
    %v46 = vsel %vm44, %v27, 0
    %48 = vmatprep.subr.bf16.mxu0 0
    %49 = vmatpush1.bf16.msra.mxu0 0
    %50 = vmatprep.subr.bf16.mxu0 0
    %51 = vmatpush1.bf16.msra.mxu0 0
    %52 = vmatprep.subr.bf16.mxu0 0
    %53 = vmatpush1.bf16.msra.mxu0 0
    %54 = vmatprep.subr.bf16.mxu0 0
    %55 = vmatpush1.bf16.msra.mxu0 0
    %56 = vmatprep.subr.bf16.mxu0 0
    %57 = vmatpush1.bf16.msra.mxu0 0
    %58 = vmatprep.subr.bf16.mxu0 0
    %59 = vmatpush1.bf16.msra.mxu0 0
    %60 = vmatprep.subr.bf16.mxu0 0
    %61 = vmatpush1.bf16.msra.mxu0 %v41
    %62 = vmatprep.subr.bf16.mxu0 0
    %63 = vmatpush1.bf16.msra.mxu0 %v40
    %64 = vmatprep.subr.bf16.mxu0 0
    %65 = vmatpush2.bf16.msra.mxu0 0
    %66 = vmatprep.subr.bf16.mxu0 0
    %67 = vmatpush2.bf16.msra.mxu0 0
    %68 = vmatprep.subr.bf16.mxu0 0
    %69 = vmatpush2.bf16.msra.mxu0 0
    %70 = vmatprep.subr.bf16.mxu0 0
    %71 = vmatpush2.bf16.msra.mxu0 0
    %72 = vmatprep.subr.bf16.mxu0 0
    %73 = vmatpush2.bf16.msra.mxu0 0
    %74 = vmatprep.subr.bf16.mxu0 0
    %75 = vmatpush2.bf16.msra.mxu0 0
    %76 = vmatprep.subr.bf16.mxu0 0
    %77 = vmatpush2.bf16.msra.mxu0 0
    %78 = vmatprep.subr.bf16.mxu0 0
    %79 = vmatpush2.bf16.msra.mxu0 0
    %80 = vmatprep.mubr.bf16.mxu0 0
    %81 = vmatmul.mubr.bf16.gmra.mxu0 %v46
    %v82 = vpop.f32.mrf.mxu0
    %v83 = vadd.f32 0.0, %v82
    %v84 = vpop.f32.mrf.mxu0
    %v85 = vpop.f32.mrf.mxu0
    %v86 = vadd.f32 0.0, %v85
    %v87 = vpop.f32.mrf.mxu0
    %88 = vdwg.mxu0
    %v89 = vadd.f32 %v23, %v83
    %v90 = vadd.f32 %v24, %v86
    %91 = vst.msk [vmem:[#allocation2] sm:$0xff] %vm44, %v89
    %92 = vst.msk [vmem:[#allocation2 + $0x8] sm:$0xff] %vm44, %v90
    // Predicated region
    $region18: #{lightconv_model_fwd.57} parent=1 // pred_check
      %p93 = pneg %p16
    $region19: #{lightconv_model_fwd.57} parent=1 // pred_check_branch
      %95 = sbr.rel (%p93) target = $region21
    $region20: #{lightconv_model_fwd.57} parent=1 // pred_region
      %v96 = vld [vmem:[#allocation2] sm:$0xff]
      %v97 = vld [vmem:[#allocation2 + $0x8] sm:$0xff]
      %v98 = vld [vmem:[%s2] sm:$0x1]
      %v100 = vlaneseq
      %v101 = vshrl.u32 %v100, 7
      %v102 = vsub.s32 0, %v101
      %v103 = vrot.slane %v98, %v102
      %v105 = vadd.f32 %v96, %v103
      %v106 = vadd.f32 %v97, %v103
      %107 = vst.msk [vmem:[#allocation2] sm:$0xff] %vm44, %v105
      %108 = vst.msk [vmem:[#allocation2 + $0x8] sm:$0xff] %vm44, %v106
    $region21: #{lightconv_model_fwd.57} parent=1 // pred_fallthru
      _
    // Predicated region
    $region22: #{lightconv_model_fwd.57} parent=1 // pred_check
      _
    $region23: #{lightconv_model_fwd.57} parent=1 // pred_check_branch
      %110 = sbr.rel (0) target = $region25
    $region24: #{lightconv_model_fwd.57} parent=1 // pred_region
      %s112 = ssub.s32 256, 256
      %113 = vsyncadd [#allocation3], %s112
      %s114 = sshll.u32 [#allocation2], 4
      %s115 = int_to_ptr.vmem [resolvable:$true] %s114
      %120 = dma.vmem_to_hbm [thread:$0]  %s115, 256, %s3, [#allocation3], 128, 128, 8
    $region25: #{lightconv_model_fwd.57} parent=1 // pred_fallthru
      _
    // Predicated region
    $region26: #{lightconv_model_fwd.57} parent=1 // pred_check
      _
    $region27: #{lightconv_model_fwd.57} parent=1 // pred_check_branch
      %122 = sbr.rel (0) target = $region29
    $region28: #{lightconv_model_fwd.57} parent=1 // pred_region
      %123 = dma.done [#allocation3], 256
    $region29: #{lightconv_model_fwd.57} parent=1 // pred_fallthru
      _
    %124 = vsyncpa [#allocation3], 1

</llo_original>
